<compile_context>
chip_gen: v5e
topology: v5e:2x2
jax: 0.10.0
libtpu: 0.0.40
codegen_flags: <defaults>
</compile_context>

<pallas_src>
import jax
import jax.numpy as jnp
import numpy as np
from jax import lax
from jax.experimental import pallas as pl
from jax.experimental.pallas import tpu as pltpu

# ---------------- problem sizes (small, consistent with the module) ----------------
T = 4          # decode steps folded into one kernel launch
B = 8          # batch
S = 16         # att_size (number of attention regions)
D = 32         # rnn_size == input_encoding_size == att_hid_size


# ---------------- fused single-invocation kernel ----------------
def adaatt_core_seq_kernel(
    # inputs (all resident in VMEM for the whole kernel)
    xt_ref,          # (T, B, D)   token embeddings for all steps
    fc_ref,          # (B, D)
    att_ref,         # (B, S*D)    conv_feat, lane-dense
    patt_ref,        # (B, S*D)    conv_feat_embed, lane-dense
    h0_ref,          # (B, D)
    c0_ref,          # (B, D)
    gate_wx_ref,     # (D, 5D)     xt rows,    cols [4D LSTM gates | D r-path]
    gate_wh_ref,     # (D, 5D)     prev_h rows, same column layout
    gate_wv_ref,     # (D, 5D)     fc rows,     same column layout (used once)
    gate_b_ref,      # (1, 5D)     summed biases
    fr_lin_w_ref, fr_lin_b_ref,    # (D, D), (1, D)
    ho_lin_w_ref, ho_lin_b_ref,    # (D, D), (1, D)
    fr_emb_w_ref, fr_emb_b_ref,    # (D, D), (1, D)
    ho_emb_w_ref, ho_emb_b_ref,    # (D, D), (1, D)
    alpha_w_ref,     # (1, D)      alpha_net weight (bias cancels in softmax)
    alpha_blk_ref,   # (S*D, S)    [s*D+d, s] = alpha_w[d]   (D-axis reduce on MXU)
    tile_mat_ref,    # (D, S*D)    [d, s*D+d'] = delta(d,d') (tile ho_embed across S)
    rep_mat_ref,     # (S, S*D)    [s, s'*D+d] = delta(s,s') (repeat PI across D)
    seg_sum_ref,     # (S*D, D)    [s*D+d, d'] = delta(d,d') (segment sum over S)
    att2h_w_ref, att2h_b_ref,      # (D, D), (1, D)
    # outputs
    atten_ref,       # (T, B, D)   per-step attention output (written per step)
    h_out_ref,       # (B, D)      final hidden state
    c_out_ref,       # (B, D)      final cell state
):
    Tn, Bb, Dd = xt_ref.shape
    f32 = jnp.float32

    # ---- loop-invariant work, hoisted out of the T loop ----
    # fc_feats' gate contribution (v2h / r_v2h) + all gate biases are constant
    # over t: one (B,D)@(D,5D) matmul for the whole sequence.
    fc_const = (jnp.dot(fc_ref[...], gate_wv_ref[...],
                        preferred_element_type=f32) + gate_b_ref[...])        # (B, 5D)
    att2d = att_ref[...]                                                       # (B, S*D)
    patt2d = patt_ref[...]                                                     # (B, S*D)
    # hoisted broadcasts (JAX does not CSE broadcast_in_dim across iterations)
    aw_bc = jnp.broadcast_to(alpha_w_ref[...], (Bb, Dd))
    fr_lin_b = jnp.broadcast_to(fr_lin_b_ref[...], (Bb, Dd))
    ho_lin_b = jnp.broadcast_to(ho_lin_b_ref[...], (Bb, Dd))
    fr_emb_b = jnp.broadcast_to(fr_emb_b_ref[...], (Bb, Dd))
    ho_emb_b = jnp.broadcast_to(ho_emb_b_ref[...], (Bb, Dd))
    att2h_b = jnp.broadcast_to(att2h_b_ref[...], (Bb, Dd))

    def step(t, carry):
        prev_h, prev_c = carry

        # ---------------- AdaAtt_lstm (single layer, no maxout) ----------------
        xt = xt_ref[t]                                                         # (B, D)
        sums = (fc_const
                + jnp.dot(xt, gate_wx_ref[...], preferred_element_type=f32)
                + jnp.dot(prev_h, gate_wh_ref[...], preferred_element_type=f32))  # (B, 5D)

        sig = jax.nn.sigmoid(sums[:, :3 * Dd])
        in_gate = sig[:, 0 * Dd:1 * Dd]
        forget_gate = sig[:, 1 * Dd:2 * Dd]
        out_gate = sig[:, 2 * Dd:3 * Dd]
        in_transform = jnp.tanh(sums[:, 3 * Dd:4 * Dd])
        n5 = sums[:, 4 * Dd:5 * Dd]

        next_c = forget_gate * prev_c + in_gate * in_transform
        tanh_c = jnp.tanh(next_c)
        next_h = out_gate * tanh_c                                             # top_h
        fake_region = jax.nn.sigmoid(n5) * tanh_c                              # p_out

        # ---------------- AdaAtt_attention ----------------
        fr = jnp.maximum(jnp.dot(fake_region, fr_lin_w_ref[...],
                                 preferred_element_type=f32) + fr_lin_b, 0.0)  # ReLU
        ho = jnp.tanh(jnp.dot(next_h, ho_lin_w_ref[...],
                              preferred_element_type=f32) + ho_lin_b)
        fr_embed = jnp.dot(fr, fr_emb_w_ref[...], preferred_element_type=f32) + fr_emb_b
        ho_embed = jnp.dot(ho, ho_emb_w_ref[...], preferred_element_type=f32) + ho_emb_b

        # conv-region scores, lane-dense (B, S*D); the heavy tanh runs on 4 vregs
        ho_rep = jnp.dot(ho_embed, tile_mat_ref[...],
                         preferred_element_type=f32)                           # (B, S*D)
        hA2d = jnp.tanh(patt2d + ho_rep)                                       # (B, S*D)
        logit_conv = jnp.dot(hA2d, alpha_blk_ref[...],
                             preferred_element_type=f32)                       # (B, S)
        # fake-region score (index 0 of the softmax)
        hA_fr = jnp.tanh(fr_embed + ho_embed)                                  # (B, D)
        logit_fr = jnp.sum(hA_fr * aw_bc, axis=-1, keepdims=True)              # (B, 1)
        # alpha_net bias added to every logit cancels in the softmax -> dropped.

        m = jnp.maximum(jnp.max(logit_conv, axis=-1, keepdims=True), logit_fr)
        e_fr = jnp.exp(logit_fr - m)                                           # (B, 1)
        e_conv = jnp.exp(logit_conv - m)                                       # (B, S)
        inv = 1.0 / (e_fr + jnp.sum(e_conv, axis=-1, keepdims=True))           # exact divide

        # visAtt = PI @ img_all  as two small MXU matmuls (D-repeat + segment sum)
        e_rep = jnp.dot(e_conv, rep_mat_ref[...],
                        preferred_element_type=f32)                            # (B, S*D)
        vis_conv = jnp.dot(e_rep * att2d, seg_sum_ref[...],
                           preferred_element_type=f32)                         # (B, D)
        vis = inv * (e_fr * fr + vis_conv)                                     # (B, D)

        out = jnp.tanh(jnp.dot(vis + ho, att2h_w_ref[...],
                               preferred_element_type=f32) + att2h_b)
        atten_ref[t] = out
        return next_h, next_c

    h_fin, c_fin = lax.fori_loop(0, Tn, step, (h0_ref[...], c0_ref[...]), unroll=True)
    h_out_ref[...] = h_fin
    c_out_ref[...] = c_fin


# ---------------- one-time parameter packing (outside the decode loop) ----------------
def prepare_params(p, att_size):
    d = p["att2h_w"].shape[0]
    s = att_size
    f32 = jnp.float32

    # column layout: [4D LSTM gates | D r-path]
    gate_wx = jnp.concatenate([p["w2h_w"], p["r_w2h_w"]], axis=1)      # (D, 5D)
    gate_wh = jnp.concatenate([p["h2h_w"], p["r_h2h_w"]], axis=1)      # (D, 5D)
    gate_wv = jnp.concatenate([p["v2h_w"], p["r_v2h_w"]], axis=1)      # (D, 5D)
    gate_b = jnp.concatenate([
        p["w2h_b"] + p["v2h_b"] + p["h2h_b"],
        p["r_w2h_b"] + p["r_v2h_b"] + p["r_h2h_b"],
    ])[None, :]                                                        # (1, 5D)

    aw = p["alpha_w"][:, 0]                                            # (D,)
    eye_d = jnp.eye(d, dtype=f32)
    eye_s = jnp.eye(s, dtype=f32)
    # (S*D, S):  [s*D+d, s'] = delta(s,s') * aw[d]    -> logit_conv = hA2d @ alpha_blk
    alpha_blk = (eye_s[:, None, :] * aw[None, :, None]).reshape(s * d, s)
    # (D, S*D):  [d, s*D+d'] = delta(d,d')            -> tile ho_embed across S
    tile_mat = jnp.tile(eye_d, (1, s))
    # (S, S*D):  [s, s'*D+d] = delta(s,s')            -> repeat e_conv across D
    rep_mat = jnp.repeat(eye_s, d, axis=1)
    # (S*D, D):  [s*D+d, d'] = delta(d,d')            -> segment-sum over S
    seg_sum = jnp.tile(eye_d, (s, 1))

    return dict(
        gate_wx=gate_wx, gate_wh=gate_wh, gate_wv=gate_wv, gate_b=gate_b,
        fr_lin_w=p["fr_lin_w"], fr_lin_b=p["fr_lin_b"][None, :],
        ho_lin_w=p["ho_lin_w"], ho_lin_b=p["ho_lin_b"][None, :],
        fr_emb_w=p["fr_emb_w"], fr_emb_b=p["fr_emb_b"][None, :],
        ho_emb_w=p["ho_emb_w"], ho_emb_b=p["ho_emb_b"][None, :],
        alpha_w=p["alpha_w"].T,                   # (1, D); alpha_b dropped (cancels)
        alpha_blk=alpha_blk, tile_mat=tile_mat, rep_mat=rep_mat, seg_sum=seg_sum,
        att2h_w=p["att2h_w"], att2h_b=p["att2h_b"][None, :],
    )


def _full_spec(shape):
    zeros = (0,) * len(shape)
    return pl.BlockSpec(shape, lambda i: zeros)


# ---------------- wrapper: whole decode loop, one pallas_call, grid=(1,) ----------------
@jax.jit
def adaatt_core_seq(xt_seq, fc_feats, att_feats, p_att_feats, h0, c0, w):
    Ts, Bb, Dd = xt_seq.shape
    Ss = att_feats.shape[1]
    SD = Ss * Dd

    # lane-dense attention operands (contiguous reshape, free)
    att2d = att_feats.reshape(Bb, SD)
    patt2d = p_att_feats.reshape(Bb, SD)

    operands = [
        xt_seq, fc_feats, att2d, patt2d, h0, c0,
        w["gate_wx"], w["gate_wh"], w["gate_wv"], w["gate_b"],
        w["fr_lin_w"], w["fr_lin_b"], w["ho_lin_w"], w["ho_lin_b"],
        w["fr_emb_w"], w["fr_emb_b"], w["ho_emb_w"], w["ho_emb_b"],
        w["alpha_w"], w["alpha_blk"], w["tile_mat"], w["rep_mat"], w["seg_sum"],
        w["att2h_w"], w["att2h_b"],
    ]
    in_specs = [_full_spec(x.shape) for x in operands]
    out_specs = (
        _full_spec((Ts, Bb, Dd)),                       # atten_seq
        _full_spec((Bb, Dd)),                           # final h
        _full_spec((Bb, Dd)),                           # final c
    )
    out_shape = (
        jax.ShapeDtypeStruct((Ts, Bb, Dd), jnp.float32),
        jax.ShapeDtypeStruct((Bb, Dd), jnp.float32),
        jax.ShapeDtypeStruct((Bb, Dd), jnp.float32),
    )

    # advisory cost estimate (static shapes -> Python ints at trace time)
    per_step_mm = 2 * Bb * (2 * Dd * 5 * Dd + 4 * Dd * Dd + Dd * SD
                            + SD * Ss + Ss * SD + SD * Dd + Dd * Dd)
    flops = int(Ts * (per_step_mm + Bb * (2 * SD + 12 * Dd + 4 * Ss))
                + 2 * Bb * Dd * 5 * Dd)
    transcendentals = int(Ts * Bb * (SD + 6 * Dd + Ss + 1))
    nbytes = int(4 * sum(int(np.prod(x.shape)) for x in operands)
                 + 4 * (Ts * Bb * Dd + 2 * Bb * Dd))

    atten_seq, h_fin, c_fin = pl.pallas_call(
        adaatt_core_seq_kernel,
        grid=(1,),
        in_specs=in_specs,
        out_specs=out_specs,
        out_shape=out_shape,
        compiler_params=pltpu.CompilerParams(
            dimension_semantics=("arbitrary",),
            vmem_limit_bytes=4 * 1024 * 1024,   # resident footprint ~1 MB incl. padding
        ),
        cost_estimate=pl.CostEstimate(flops=flops, transcendentals=transcendentals,
                                      bytes_accessed=nbytes),
    )(*operands)
    return atten_seq, h_fin, c_fin


def adaatt_core(xt, fc_feats, att_feats, p_att_feats, state, w):
    """Original single-step AdaAttCore.forward interface (T == 1 path)."""
    atten_seq, h, c = adaatt_core_seq(xt[None], fc_feats, att_feats, p_att_feats,
                                      state[0][0], state[1][0], w)
    return atten_seq[0], (h[None], c[None])


# ---------------- pure-JAX reference (mirrors the PyTorch forward) ----------------
def adaatt_core_step_ref(xt, fc_feats, att_feats, p_att_feats, state, p):
    prev_h, prev_c = state[0][0], state[1][0]
    d = xt.shape[1]
    all_sums = (xt @ p["w2h_w"] + p["w2h_b"] + fc_feats @ p["v2h_w"] + p["v2h_b"]
                + prev_h @ p["h2h_w"] + p["h2h_b"])
    sig = jax.nn.sigmoid(all_sums[:, :3 * d])
    in_g, fo_g, out_g = sig[:, :d], sig[:, d:2 * d], sig[:, 2 * d:3 * d]
    in_t = jnp.tanh(all_sums[:, 3 * d:4 * d])
    next_c = fo_g * prev_c + in_g * in_t
    tanh_c = jnp.tanh(next_c)
    next_h = out_g * tanh_c
    n5 = (xt @ p["r_w2h_w"] + p["r_w2h_b"] + fc_feats @ p["r_v2h_w"] + p["r_v2h_b"]
          + prev_h @ p["r_h2h_w"] + p["r_h2h_b"])
    fake_region = jax.nn.sigmoid(n5) * tanh_c

    fr = jax.nn.relu(fake_region @ p["fr_lin_w"] + p["fr_lin_b"])
    fr_e = fr @ p["fr_emb_w"] + p["fr_emb_b"]
    ho = jnp.tanh(next_h @ p["ho_lin_w"] + p["ho_lin_b"])
    ho_e = ho @ p["ho_emb_w"] + p["ho_emb_b"]

    img_all = jnp.concatenate([fr[:, None, :], att_feats], axis=1)
    img_all_e = jnp.concatenate([fr_e[:, None, :], p_att_feats], axis=1)
    hA = jnp.tanh(img_all_e + ho_e[:, None, :])
    bb, sp1 = hA.shape[0], hA.shape[1]
    logits = (hA.reshape(-1, d) @ p["alpha_w"] + p["alpha_b"]).reshape(bb, sp1)
    PI = jax.nn.softmax(logits, axis=1)
    vis = jnp.einsum("bn,bnd->bd", PI, img_all)
    h = jnp.tanh((vis + ho) @ p["att2h_w"] + p["att2h_b"])
    return h, (next_h[None], next_c[None])


def adaatt_core_seq_ref(xt_seq, fc_feats, att_feats, p_att_feats, h0, c0, p):
    state = (h0[None], c0[None])
    outs = []
    for t in range(xt_seq.shape[0]):
        o, state = adaatt_core_step_ref(xt_seq[t], fc_feats, att_feats,
                                        p_att_feats, state, p)
        outs.append(o)
    return jnp.stack(outs), state


# ---------------- deterministic parameter init ----------------
def init_params(key):
    specs = [
        ("w2h", D, 4 * D), ("v2h", D, 4 * D), ("h2h", D, 4 * D),
        ("r_w2h", D, D), ("r_v2h", D, D), ("r_h2h", D, D),
        ("fr_lin", D, D), ("fr_emb", D, D),
        ("ho_lin", D, D), ("ho_emb", D, D),
        ("alpha", D, 1), ("att2h", D, D),
    ]
    keys = jax.random.split(key, len(specs))
    params = {}
    for k, (name, fin, fout) in zip(keys, specs):
        kw, kb = jax.random.split(k)
        bound = 1.0 / np.sqrt(fin)
        params[name + "_w"] = jax.random.uniform(kw, (fin, fout), jnp.float32, -bound, bound)
        params[name + "_b"] = jax.random.uniform(kb, (fout,), jnp.float32, -bound, bound)
    return params


if __name__ == "__main__":
    key = jax.random.PRNGKey(0)
    k_p, k_xt, k_fc, k_att, k_patt, k_h, k_c = jax.random.split(key, 7)

    params = init_params(k_p)
    packed = prepare_params(params, S)        # weight fusion / structured mats, done once

    xt_seq = jax.random.normal(k_xt, (T, B, D), jnp.float32)
    fc_feats = jax.random.normal(k_fc, (B, D), jnp.float32)
    att_feats = jax.random.normal(k_att, (B, S, D), jnp.float32)
    p_att_feats = jax.random.normal(k_patt, (B, S, D), jnp.float32)
    h0 = jax.random.normal(k_h, (B, D), jnp.float32) * 0.1
    c0 = jax.random.normal(k_c, (B, D), jnp.float32) * 0.1

    # ---- whole decode loop in one kernel launch ----
    atten_seq, h_fin, c_fin = adaatt_core_seq(xt_seq, fc_feats, att_feats,
                                              p_att_feats, h0, c0, packed)
    jax.block_until_ready((atten_seq, h_fin, c_fin))

    ref_seq, (ref_h, ref_c) = adaatt_core_seq_ref(xt_seq, fc_feats, att_feats,
                                                  p_att_feats, h0, c0, params)
    np.testing.assert_allclose(np.asarray(atten_seq), np.asarray(ref_seq),
                               atol=5e-4, rtol=5e-4)
    np.testing.assert_allclose(np.asarray(h_fin), np.asarray(ref_h[0]), atol=2e-5, rtol=2e-5)
    np.testing.assert_allclose(np.asarray(c_fin), np.asarray(ref_c[0]), atol=2e-5, rtol=2e-5)

    # ---- single-step path (original AdaAttCore.forward interface) ----
    state0 = (h0[None], c0[None])
    atten1, state1 = adaatt_core(xt_seq[0], fc_feats, att_feats, p_att_feats, state0, packed)
    jax.block_until_ready((atten1, state1))
    ref1, ref_state1 = adaatt_core_step_ref(xt_seq[0], fc_feats, att_feats,
                                            p_att_feats, state0, params)
    np.testing.assert_allclose(np.asarray(atten1), np.asarray(ref1), atol=5e-4, rtol=5e-4)
    np.testing.assert_allclose(np.asarray(state1[0]), np.asarray(ref_state1[0]),
                               atol=2e-5, rtol=2e-5)
    np.testing.assert_allclose(np.asarray(state1[1]), np.asarray(ref_state1[1]),
                               atol=2e-5, rtol=2e-5)

    print("KERNEL_OK")
</pallas_src>

<mosaic_0001>
module attributes {stable_mosaic.version = 11 : i64} {
  func.func @adaatt_core_seq_kernel(%arg0: i32, %arg1: memref<4x8x32xf32, #tpu.memory_space<vmem>>, %arg2: memref<8x32xf32, #tpu.memory_space<vmem>>, %arg3: memref<8x512xf32, #tpu.memory_space<vmem>>, %arg4: memref<8x512xf32, #tpu.memory_space<vmem>>, %arg5: memref<8x32xf32, #tpu.memory_space<vmem>>, %arg6: memref<8x32xf32, #tpu.memory_space<vmem>>, %arg7: memref<32x160xf32, #tpu.memory_space<vmem>>, %arg8: memref<32x160xf32, #tpu.memory_space<vmem>>, %arg9: memref<32x160xf32, #tpu.memory_space<vmem>>, %arg10: memref<1x160xf32, #tpu.memory_space<vmem>>, %arg11: memref<32x32xf32, #tpu.memory_space<vmem>>, %arg12: memref<1x32xf32, #tpu.memory_space<vmem>>, %arg13: memref<32x32xf32, #tpu.memory_space<vmem>>, %arg14: memref<1x32xf32, #tpu.memory_space<vmem>>, %arg15: memref<32x32xf32, #tpu.memory_space<vmem>>, %arg16: memref<1x32xf32, #tpu.memory_space<vmem>>, %arg17: memref<32x32xf32, #tpu.memory_space<vmem>>, %arg18: memref<1x32xf32, #tpu.memory_space<vmem>>, %arg19: memref<1x32xf32, #tpu.memory_space<vmem>>, %arg20: memref<512x16xf32, #tpu.memory_space<vmem>>, %arg21: memref<32x512xf32, #tpu.memory_space<vmem>>, %arg22: memref<16x512xf32, #tpu.memory_space<vmem>>, %arg23: memref<512x32xf32, #tpu.memory_space<vmem>>, %arg24: memref<32x32xf32, #tpu.memory_space<vmem>>, %arg25: memref<1x32xf32, #tpu.memory_space<vmem>>, %arg26: memref<4x8x32xf32, #tpu.memory_space<vmem>>, %arg27: memref<8x32xf32, #tpu.memory_space<vmem>>, %arg28: memref<8x32xf32, #tpu.memory_space<vmem>>) attributes {dimension_semantics = [#tpu.dimension_semantics<arbitrary>], iteration_bounds = array<i64: 1>, scalar_prefetch = 0 : i64, scratch_operands = 0 : i64, tpu.core_type = #tpu.core_type<tc>, window_params = [{pipeline_mode = #tpu.pipeline_mode<synchronous>, transform_indices = @transform_0, window_bounds = array<i64: 4, 8, 32>}, {pipeline_mode = #tpu.pipeline_mode<synchronous>, transform_indices = @transform_1, window_bounds = array<i64: 8, 32>}, {pipeline_mode = #tpu.pipeline_mode<synchronous>, transform_indices = @transform_2, window_bounds = array<i64: 8, 512>}, {pipeline_mode = #tpu.pipeline_mode<synchronous>, transform_indices = @transform_3, window_bounds = array<i64: 8, 512>}, {pipeline_mode = #tpu.pipeline_mode<synchronous>, transform_indices = @transform_4, window_bounds = array<i64: 8, 32>}, {pipeline_mode = #tpu.pipeline_mode<synchronous>, transform_indices = @transform_5, window_bounds = array<i64: 8, 32>}, {pipeline_mode = #tpu.pipeline_mode<synchronous>, transform_indices = @transform_6, window_bounds = array<i64: 32, 160>}, {pipeline_mode = #tpu.pipeline_mode<synchronous>, transform_indices = @transform_7, window_bounds = array<i64: 32, 160>}, {pipeline_mode = #tpu.pipeline_mode<synchronous>, transform_indices = @transform_8, window_bounds = array<i64: 32, 160>}, {pipeline_mode = #tpu.pipeline_mode<synchronous>, transform_indices = @transform_9, window_bounds = array<i64: 1, 160>}, {pipeline_mode = #tpu.pipeline_mode<synchronous>, transform_indices = @transform_10, window_bounds = array<i64: 32, 32>}, {pipeline_mode = #tpu.pipeline_mode<synchronous>, transform_indices = @transform_11, window_bounds = array<i64: 1, 32>}, {pipeline_mode = #tpu.pipeline_mode<synchronous>, transform_indices = @transform_12, window_bounds = array<i64: 32, 32>}, {pipeline_mode = #tpu.pipeline_mode<synchronous>, transform_indices = @transform_13, window_bounds = array<i64: 1, 32>}, {pipeline_mode = #tpu.pipeline_mode<synchronous>, transform_indices = @transform_14, window_bounds = array<i64: 32, 32>}, {pipeline_mode = #tpu.pipeline_mode<synchronous>, transform_indices = @transform_15, window_bounds = array<i64: 1, 32>}, {pipeline_mode = #tpu.pipeline_mode<synchronous>, transform_indices = @transform_16, window_bounds = array<i64: 32, 32>}, {pipeline_mode = #tpu.pipeline_mode<synchronous>, transform_indices = @transform_17, window_bounds = array<i64: 1, 32>}, {pipeline_mode = #tpu.pipeline_mode<synchronous>, transform_indices = @transform_18, window_bounds = array<i64: 1, 32>}, {pipeline_mode = #tpu.pipeline_mode<synchronous>, transform_indices = @transform_19, window_bounds = array<i64: 512, 16>}, {pipeline_mode = #tpu.pipeline_mode<synchronous>, transform_indices = @transform_20, window_bounds = array<i64: 32, 512>}, {pipeline_mode = #tpu.pipeline_mode<synchronous>, transform_indices = @transform_21, window_bounds = array<i64: 16, 512>}, {pipeline_mode = #tpu.pipeline_mode<synchronous>, transform_indices = @transform_22, window_bounds = array<i64: 512, 32>}, {pipeline_mode = #tpu.pipeline_mode<synchronous>, transform_indices = @transform_23, window_bounds = array<i64: 32, 32>}, {pipeline_mode = #tpu.pipeline_mode<synchronous>, transform_indices = @transform_24, window_bounds = array<i64: 1, 32>}, {pipeline_mode = #tpu.pipeline_mode<synchronous>, transform_indices = @transform_25, window_bounds = array<i64: 4, 8, 32>}, {pipeline_mode = #tpu.pipeline_mode<synchronous>, transform_indices = @transform_26, window_bounds = array<i64: 8, 32>}, {pipeline_mode = #tpu.pipeline_mode<synchronous>, transform_indices = @transform_27, window_bounds = array<i64: 8, 32>}]} {
    %c0 = arith.constant 0 : index
    %c0_0 = arith.constant 0 : index
    %0 = vector.load %arg2[%c0, %c0_0] : memref<8x32xf32, #tpu.memory_space<vmem>>, vector<8x32xf32>
    %c0_1 = arith.constant 0 : index
    %c0_2 = arith.constant 0 : index
    %1 = vector.load %arg9[%c0_1, %c0_2] : memref<32x160xf32, #tpu.memory_space<vmem>>, vector<32x160xf32>
    %cst = arith.constant dense<0.000000e+00> : vector<8x160xf32>
    %2 = tpu.matmul %0, %1, %cst {dimension_numbers = #tpu.dot_dimension_numbers<[1], [0], [0], [1], [0, 0, 1, 1], [], []>} : vector<8x32xf32>, vector<32x160xf32>, vector<8x160xf32> -> vector<8x160xf32>
    %c0_3 = arith.constant 0 : index
    %c0_4 = arith.constant 0 : index
    %3 = vector.load %arg10[%c0_3, %c0_4] : memref<1x160xf32, #tpu.memory_space<vmem>>, vector<1x160xf32>
    %4 = vector.broadcast %3 : vector<1x160xf32> to vector<8x160xf32>
    %5 = arith.addf %2, %4 : vector<8x160xf32>
    %c0_5 = arith.constant 0 : index
    %c0_6 = arith.constant 0 : index
    %6 = vector.load %arg3[%c0_5, %c0_6] : memref<8x512xf32, #tpu.memory_space<vmem>>, vector<8x512xf32>
    %c0_7 = arith.constant 0 : index
    %c0_8 = arith.constant 0 : index
    %7 = vector.load %arg4[%c0_7, %c0_8] : memref<8x512xf32, #tpu.memory_space<vmem>>, vector<8x512xf32>
    %c0_9 = arith.constant 0 : index
    %c0_10 = arith.constant 0 : index
    %8 = vector.load %arg19[%c0_9, %c0_10] : memref<1x32xf32, #tpu.memory_space<vmem>>, vector<1x32xf32>
    %9 = vector.shape_cast %8 : vector<1x32xf32> to vector<1x32xf32>
    %10 = vector.broadcast %9 : vector<1x32xf32> to vector<8x32xf32>
    %c0_11 = arith.constant 0 : index
    %c0_12 = arith.constant 0 : index
    %11 = vector.load %arg12[%c0_11, %c0_12] : memref<1x32xf32, #tpu.memory_space<vmem>>, vector<1x32xf32>
    %12 = vector.shape_cast %11 : vector<1x32xf32> to vector<1x32xf32>
    %13 = vector.broadcast %12 : vector<1x32xf32> to vector<8x32xf32>
    %c0_13 = arith.constant 0 : index
    %c0_14 = arith.constant 0 : index
    %14 = vector.load %arg14[%c0_13, %c0_14] : memref<1x32xf32, #tpu.memory_space<vmem>>, vector<1x32xf32>
    %15 = vector.shape_cast %14 : vector<1x32xf32> to vector<1x32xf32>
    %16 = vector.broadcast %15 : vector<1x32xf32> to vector<8x32xf32>
    %c0_15 = arith.constant 0 : index
    %c0_16 = arith.constant 0 : index
    %17 = vector.load %arg16[%c0_15, %c0_16] : memref<1x32xf32, #tpu.memory_space<vmem>>, vector<1x32xf32>
    %18 = vector.shape_cast %17 : vector<1x32xf32> to vector<1x32xf32>
    %19 = vector.broadcast %18 : vector<1x32xf32> to vector<8x32xf32>
    %c0_17 = arith.constant 0 : index
    %c0_18 = arith.constant 0 : index
    %20 = vector.load %arg18[%c0_17, %c0_18] : memref<1x32xf32, #tpu.memory_space<vmem>>, vector<1x32xf32>
    %21 = vector.shape_cast %20 : vector<1x32xf32> to vector<1x32xf32>
    %22 = vector.broadcast %21 : vector<1x32xf32> to vector<8x32xf32>
    %c0_19 = arith.constant 0 : index
    %c0_20 = arith.constant 0 : index
    %23 = vector.load %arg25[%c0_19, %c0_20] : memref<1x32xf32, #tpu.memory_space<vmem>>, vector<1x32xf32>
    %24 = vector.shape_cast %23 : vector<1x32xf32> to vector<1x32xf32>
    %25 = vector.broadcast %24 : vector<1x32xf32> to vector<8x32xf32>
    %c0_21 = arith.constant 0 : index
    %c0_22 = arith.constant 0 : index
    %26 = vector.load %arg5[%c0_21, %c0_22] : memref<8x32xf32, #tpu.memory_space<vmem>>, vector<8x32xf32>
    %c0_23 = arith.constant 0 : index
    %c0_24 = arith.constant 0 : index
    %27 = vector.load %arg6[%c0_23, %c0_24] : memref<8x32xf32, #tpu.memory_space<vmem>>, vector<8x32xf32>
    %c0_i32 = arith.constant 0 : i32
    %28 = arith.index_cast %c0_i32 : i32 to index
    %c0_25 = arith.constant 0 : index
    %c0_26 = arith.constant 0 : index
    %29 = vector.load %arg1[%28, %c0_25, %c0_26] : memref<4x8x32xf32, #tpu.memory_space<vmem>>, vector<1x8x32xf32>
    %30 = vector.shape_cast %29 : vector<1x8x32xf32> to vector<8x32xf32>
    %c0_27 = arith.constant 0 : index
    %c0_28 = arith.constant 0 : index
    %31 = vector.load %arg7[%c0_27, %c0_28] : memref<32x160xf32, #tpu.memory_space<vmem>>, vector<32x160xf32>
    %cst_29 = arith.constant dense<0.000000e+00> : vector<8x160xf32>
    %32 = tpu.matmul %30, %31, %cst_29 {dimension_numbers = #tpu.dot_dimension_numbers<[1], [0], [0], [1], [0, 0, 1, 1], [], []>} : vector<8x32xf32>, vector<32x160xf32>, vector<8x160xf32> -> vector<8x160xf32>
    %33 = arith.addf %5, %32 : vector<8x160xf32>
    %c0_30 = arith.constant 0 : index
    %c0_31 = arith.constant 0 : index
    %34 = vector.load %arg8[%c0_30, %c0_31] : memref<32x160xf32, #tpu.memory_space<vmem>>, vector<32x160xf32>
    %cst_32 = arith.constant dense<0.000000e+00> : vector<8x160xf32>
    %35 = tpu.matmul %26, %34, %cst_32 {dimension_numbers = #tpu.dot_dimension_numbers<[1], [0], [0], [1], [0, 0, 1, 1], [], []>} : vector<8x32xf32>, vector<32x160xf32>, vector<8x160xf32> -> vector<8x160xf32>
    %36 = arith.addf %33, %35 : vector<8x160xf32>
    %37 = vector.extract_strided_slice %36 {offsets = [0, 0], sizes = [8, 96], strides = [1, 1]} : vector<8x160xf32> to vector<8x96xf32>
    %38 = arith.negf %37 : vector<8x96xf32>
    %39 = math.exp %38 : vector<8x96xf32>
    %cst_33 = arith.constant 1.000000e+00 : f32
    %40 = vector.broadcast %cst_33 : f32 to vector<8x96xf32>
    %41 = arith.addf %40, %39 : vector<8x96xf32>
    %42 = arith.divf %40, %41 : vector<8x96xf32>
    %43 = vector.extract_strided_slice %42 {offsets = [0, 0], sizes = [8, 32], strides = [1, 1]} : vector<8x96xf32> to vector<8x32xf32>
    %44 = vector.extract_strided_slice %42 {offsets = [0, 32], sizes = [8, 32], strides = [1, 1]} : vector<8x96xf32> to vector<8x32xf32>
    %45 = vector.extract_strided_slice %42 {offsets = [0, 64], sizes = [8, 32], strides = [1, 1]} : vector<8x96xf32> to vector<8x32xf32>
    %46 = vector.extract_strided_slice %36 {offsets = [0, 96], sizes = [8, 32], strides = [1, 1]} : vector<8x160xf32> to vector<8x32xf32>
    %47 = math.tanh %46 : vector<8x32xf32>
    %48 = vector.extract_strided_slice %36 {offsets = [0, 128], sizes = [8, 32], strides = [1, 1]} : vector<8x160xf32> to vector<8x32xf32>
    %49 = arith.mulf %44, %27 : vector<8x32xf32>
    %50 = arith.mulf %43, %47 : vector<8x32xf32>
    %51 = arith.addf %49, %50 : vector<8x32xf32>
    %52 = math.tanh %51 : vector<8x32xf32>
    %53 = arith.mulf %45, %52 : vector<8x32xf32>
    %54 = arith.negf %48 : vector<8x32xf32>
    %55 = math.exp %54 : vector<8x32xf32>
    %cst_34 = arith.constant 1.000000e+00 : f32
    %56 = vector.broadcast %cst_34 : f32 to vector<8x32xf32>
    %57 = arith.addf %56, %55 : vector<8x32xf32>
    %58 = arith.divf %56, %57 : vector<8x32xf32>
    %59 = arith.mulf %58, %52 : vector<8x32xf32>
    %c0_35 = arith.constant 0 : index
    %c0_36 = arith.constant 0 : index
    %60 = vector.load %arg11[%c0_35, %c0_36] : memref<32x32xf32, #tpu.memory_space<vmem>>, vector<32x32xf32>
    %cst_37 = arith.constant dense<0.000000e+00> : vector<8x32xf32>
    %61 = tpu.matmul %59, %60, %cst_37 {dimension_numbers = #tpu.dot_dimension_numbers<[1], [0], [0], [1], [0, 0, 1, 1], [], []>} : vector<8x32xf32>, vector<32x32xf32>, vector<8x32xf32> -> vector<8x32xf32>
    %62 = arith.addf %61, %13 : vector<8x32xf32>
    %cst_38 = arith.constant 0.000000e+00 : f32
    %63 = vector.broadcast %cst_38 : f32 to vector<8x32xf32>
    %64 = arith.maximumf %62, %63 : vector<8x32xf32>
    %c0_39 = arith.constant 0 : index
    %c0_40 = arith.constant 0 : index
    %65 = vector.load %arg13[%c0_39, %c0_40] : memref<32x32xf32, #tpu.memory_space<vmem>>, vector<32x32xf32>
    %cst_41 = arith.constant dense<0.000000e+00> : vector<8x32xf32>
    %66 = tpu.matmul %53, %65, %cst_41 {dimension_numbers = #tpu.dot_dimension_numbers<[1], [0], [0], [1], [0, 0, 1, 1], [], []>} : vector<8x32xf32>, vector<32x32xf32>, vector<8x32xf32> -> vector<8x32xf32>
    %67 = arith.addf %66, %16 : vector<8x32xf32>
    %68 = math.tanh %67 : vector<8x32xf32>
    %c0_42 = arith.constant 0 : index
    %c0_43 = arith.constant 0 : index
    %69 = vector.load %arg15[%c0_42, %c0_43] : memref<32x32xf32, #tpu.memory_space<vmem>>, vector<32x32xf32>
    %cst_44 = arith.constant dense<0.000000e+00> : vector<8x32xf32>
    %70 = tpu.matmul %64, %69, %cst_44 {dimension_numbers = #tpu.dot_dimension_numbers<[1], [0], [0], [1], [0, 0, 1, 1], [], []>} : vector<8x32xf32>, vector<32x32xf32>, vector<8x32xf32> -> vector<8x32xf32>
    %71 = arith.addf %70, %19 : vector<8x32xf32>
    %c0_45 = arith.constant 0 : index
    %c0_46 = arith.constant 0 : index
    %72 = vector.load %arg17[%c0_45, %c0_46] : memref<32x32xf32, #tpu.memory_space<vmem>>, vector<32x32xf32>
    %cst_47 = arith.constant dense<0.000000e+00> : vector<8x32xf32>
    %73 = tpu.matmul %68, %72, %cst_47 {dimension_numbers = #tpu.dot_dimension_numbers<[1], [0], [0], [1], [0, 0, 1, 1], [], []>} : vector<8x32xf32>, vector<32x32xf32>, vector<8x32xf32> -> vector<8x32xf32>
    %74 = arith.addf %73, %22 : vector<8x32xf32>
    %c0_48 = arith.constant 0 : index
    %c0_49 = arith.constant 0 : index
    %75 = vector.load %arg21[%c0_48, %c0_49] : memref<32x512xf32, #tpu.memory_space<vmem>>, vector<32x512xf32>
    %cst_50 = arith.constant dense<0.000000e+00> : vector<8x512xf32>
    %76 = tpu.matmul %74, %75, %cst_50 {dimension_numbers = #tpu.dot_dimension_numbers<[1], [0], [0], [1], [0, 0, 1, 1], [], []>} : vector<8x32xf32>, vector<32x512xf32>, vector<8x512xf32> -> vector<8x512xf32>
    %77 = arith.addf %7, %76 : vector<8x512xf32>
    %78 = math.tanh %77 : vector<8x512xf32>
    %c0_51 = arith.constant 0 : index
    %c0_52 = arith.constant 0 : index
    %79 = vector.load %arg20[%c0_51, %c0_52] : memref<512x16xf32, #tpu.memory_space<vmem>>, vector<512x16xf32>
    %cst_53 = arith.constant dense<0.000000e+00> : vector<8x16xf32>
    %80 = tpu.matmul %78, %79, %cst_53 {dimension_numbers = #tpu.dot_dimension_numbers<[1], [0], [0], [1], [0, 0, 1, 1], [], []>} : vector<8x512xf32>, vector<512x16xf32>, vector<8x16xf32> -> vector<8x16xf32>
    %81 = arith.addf %71, %74 : vector<8x32xf32>
    %82 = math.tanh %81 : vector<8x32xf32>
    %83 = arith.mulf %82, %10 : vector<8x32xf32>
    %cst_54 = arith.constant dense<0.000000e+00> : vector<8xf32>
    %84 = vector.multi_reduction <add>, %83, %cst_54 [1] : vector<8x32xf32> to vector<8xf32>
    %85 = vector.shape_cast %84 : vector<8xf32> to vector<8x1xf32>
    %cst_55 = arith.constant dense<0xFF800000> : vector<8xf32>
    %86 = vector.multi_reduction <maximumf>, %80, %cst_55 [1] : vector<8x16xf32> to vector<8xf32>
    %87 = vector.shape_cast %86 : vector<8xf32> to vector<8x1xf32>
    %88 = arith.maximumf %87, %85 : vector<8x1xf32>
    %89 = arith.subf %85, %88 : vector<8x1xf32>
    %90 = math.exp %89 : vector<8x1xf32>
    %91 = vector.broadcast %88 : vector<8x1xf32> to vector<8x16xf32>
    %92 = arith.subf %80, %91 : vector<8x16xf32>
    %93 = math.exp %92 : vector<8x16xf32>
    %cst_56 = arith.constant dense<0.000000e+00> : vector<8xf32>
    %94 = vector.multi_reduction <add>, %93, %cst_56 [1] : vector<8x16xf32> to vector<8xf32>
    %95 = vector.shape_cast %94 : vector<8xf32> to vector<8x1xf32>
    %96 = arith.addf %90, %95 : vector<8x1xf32>
    %cst_57 = arith.constant 1.000000e+00 : f32
    %97 = vector.broadcast %cst_57 : f32 to vector<8x1xf32>
    %98 = arith.divf %97, %96 : vector<8x1xf32>
    %c0_58 = arith.constant 0 : index
    %c0_59 = arith.constant 0 : index
    %99 = vector.load %arg22[%c0_58, %c0_59] : memref<16x512xf32, #tpu.memory_space<vmem>>, vector<16x512xf32>
    %cst_60 = arith.constant dense<0.000000e+00> : vector<8x512xf32>
    %100 = tpu.matmul %93, %99, %cst_60 {dimension_numbers = #tpu.dot_dimension_numbers<[1], [0], [0], [1], [0, 0, 1, 1], [], []>} : vector<8x16xf32>, vector<16x512xf32>, vector<8x512xf32> -> vector<8x512xf32>
    %101 = arith.mulf %100, %6 : vector<8x512xf32>
    %c0_61 = arith.constant 0 : index
    %c0_62 = arith.constant 0 : index
    %102 = vector.load %arg23[%c0_61, %c0_62] : memref<512x32xf32, #tpu.memory_space<vmem>>, vector<512x32xf32>
    %cst_63 = arith.constant dense<0.000000e+00> : vector<8x32xf32>
    %103 = tpu.matmul %101, %102, %cst_63 {dimension_numbers = #tpu.dot_dimension_numbers<[1], [0], [0], [1], [0, 0, 1, 1], [], []>} : vector<8x512xf32>, vector<512x32xf32>, vector<8x32xf32> -> vector<8x32xf32>
    %104 = vector.broadcast %90 : vector<8x1xf32> to vector<8x32xf32>
    %105 = arith.mulf %104, %64 : vector<8x32xf32>
    %106 = arith.addf %105, %103 : vector<8x32xf32>
    %107 = vector.broadcast %98 : vector<8x1xf32> to vector<8x32xf32>
    %108 = arith.mulf %107, %106 : vector<8x32xf32>
    %109 = arith.addf %108, %68 : vector<8x32xf32>
    %c0_64 = arith.constant 0 : index
    %c0_65 = arith.constant 0 : index
    %110 = vector.load %arg24[%c0_64, %c0_65] : memref<32x32xf32, #tpu.memory_space<vmem>>, vector<32x32xf32>
    %cst_66 = arith.constant dense<0.000000e+00> : vector<8x32xf32>
    %111 = tpu.matmul %109, %110, %cst_66 {dimension_numbers = #tpu.dot_dimension_numbers<[1], [0], [0], [1], [0, 0, 1, 1], [], []>} : vector<8x32xf32>, vector<32x32xf32>, vector<8x32xf32> -> vector<8x32xf32>
    %112 = arith.addf %111, %25 : vector<8x32xf32>
    %113 = math.tanh %112 : vector<8x32xf32>
    %114 = arith.index_cast %c0_i32 : i32 to index
    %c0_67 = arith.constant 0 : index
    %c0_68 = arith.constant 0 : index
    %115 = vector.load %arg26[%114, %c0_67, %c0_68] : memref<4x8x32xf32, #tpu.memory_space<vmem>>, vector<1x8x32xf32>
    %116 = vector.shape_cast %115 : vector<1x8x32xf32> to vector<8x32xf32>
    %117 = vector.shape_cast %113 : vector<8x32xf32> to vector<1x8x32xf32>
    tpu.vector_store %arg26[%114, %c0_67, %c0_68], %117 {strides = array<i32>} : memref<4x8x32xf32, #tpu.memory_space<vmem>>, vector<1x8x32xf32>,
    %c1_i32 = arith.constant 1 : i32
    %118 = arith.index_cast %c1_i32 : i32 to index
    %c0_69 = arith.constant 0 : index
    %c0_70 = arith.constant 0 : index
    %119 = vector.load %arg1[%118, %c0_69, %c0_70] : memref<4x8x32xf32, #tpu.memory_space<vmem>>, vector<1x8x32xf32>
    %120 = vector.shape_cast %119 : vector<1x8x32xf32> to vector<8x32xf32>
    %c0_71 = arith.constant 0 : index
    %c0_72 = arith.constant 0 : index
    %121 = vector.load %arg7[%c0_71, %c0_72] : memref<32x160xf32, #tpu.memory_space<vmem>>, vector<32x160xf32>
    %cst_73 = arith.constant dense<0.000000e+00> : vector<8x160xf32>
    %122 = tpu.matmul %120, %121, %cst_73 {dimension_numbers = #tpu.dot_dimension_numbers<[1], [0], [0], [1], [0, 0, 1, 1], [], []>} : vector<8x32xf32>, vector<32x160xf32>, vector<8x160xf32> -> vector<8x160xf32>
    %123 = arith.addf %5, %122 : vector<8x160xf32>
    %c0_74 = arith.constant 0 : index
    %c0_75 = arith.constant 0 : index
    %124 = vector.load %arg8[%c0_74, %c0_75] : memref<32x160xf32, #tpu.memory_space<vmem>>, vector<32x160xf32>
    %cst_76 = arith.constant dense<0.000000e+00> : vector<8x160xf32>
    %125 = tpu.matmul %53, %124, %cst_76 {dimension_numbers = #tpu.dot_dimension_numbers<[1], [0], [0], [1], [0, 0, 1, 1], [], []>} : vector<8x32xf32>, vector<32x160xf32>, vector<8x160xf32> -> vector<8x160xf32>
    %126 = arith.addf %123, %125 : vector<8x160xf32>
    %127 = vector.extract_strided_slice %126 {offsets = [0, 0], sizes = [8, 96], strides = [1, 1]} : vector<8x160xf32> to vector<8x96xf32>
    %128 = arith.negf %127 : vector<8x96xf32>
    %129 = math.exp %128 : vector<8x96xf32>
    %cst_77 = arith.constant 1.000000e+00 : f32
    %130 = vector.broadcast %cst_77 : f32 to vector<8x96xf32>
    %131 = arith.addf %130, %129 : vector<8x96xf32>
    %132 = arith.divf %130, %131 : vector<8x96xf32>
    %133 = vector.extract_strided_slice %132 {offsets = [0, 0], sizes = [8, 32], strides = [1, 1]} : vector<8x96xf32> to vector<8x32xf32>
    %134 = vector.extract_strided_slice %132 {offsets = [0, 32], sizes = [8, 32], strides = [1, 1]} : vector<8x96xf32> to vector<8x32xf32>
    %135 = vector.extract_strided_slice %132 {offsets = [0, 64], sizes = [8, 32], strides = [1, 1]} : vector<8x96xf32> to vector<8x32xf32>
    %136 = vector.extract_strided_slice %126 {offsets = [0, 96], sizes = [8, 32], strides = [1, 1]} : vector<8x160xf32> to vector<8x32xf32>
    %137 = math.tanh %136 : vector<8x32xf32>
    %138 = vector.extract_strided_slice %126 {offsets = [0, 128], sizes = [8, 32], strides = [1, 1]} : vector<8x160xf32> to vector<8x32xf32>
    %139 = arith.mulf %134, %51 : vector<8x32xf32>
    %140 = arith.mulf %133, %137 : vector<8x32xf32>
    %141 = arith.addf %139, %140 : vector<8x32xf32>
    %142 = math.tanh %141 : vector<8x32xf32>
    %143 = arith.mulf %135, %142 : vector<8x32xf32>
    %144 = arith.negf %138 : vector<8x32xf32>
    %145 = math.exp %144 : vector<8x32xf32>
    %cst_78 = arith.constant 1.000000e+00 : f32
    %146 = vector.broadcast %cst_78 : f32 to vector<8x32xf32>
    %147 = arith.addf %146, %145 : vector<8x32xf32>
    %148 = arith.divf %146, %147 : vector<8x32xf32>
    %149 = arith.mulf %148, %142 : vector<8x32xf32>
    %c0_79 = arith.constant 0 : index
    %c0_80 = arith.constant 0 : index
    %150 = vector.load %arg11[%c0_79, %c0_80] : memref<32x32xf32, #tpu.memory_space<vmem>>, vector<32x32xf32>
    %cst_81 = arith.constant dense<0.000000e+00> : vector<8x32xf32>
    %151 = tpu.matmul %149, %150, %cst_81 {dimension_numbers = #tpu.dot_dimension_numbers<[1], [0], [0], [1], [0, 0, 1, 1], [], []>} : vector<8x32xf32>, vector<32x32xf32>, vector<8x32xf32> -> vector<8x32xf32>
    %152 = arith.addf %151, %13 : vector<8x32xf32>
    %cst_82 = arith.constant 0.000000e+00 : f32
    %153 = vector.broadcast %cst_82 : f32 to vector<8x32xf32>
    %154 = arith.maximumf %152, %153 : vector<8x32xf32>
    %c0_83 = arith.constant 0 : index
    %c0_84 = arith.constant 0 : index
    %155 = vector.load %arg13[%c0_83, %c0_84] : memref<32x32xf32, #tpu.memory_space<vmem>>, vector<32x32xf32>
    %cst_85 = arith.constant dense<0.000000e+00> : vector<8x32xf32>
    %156 = tpu.matmul %143, %155, %cst_85 {dimension_numbers = #tpu.dot_dimension_numbers<[1], [0], [0], [1], [0, 0, 1, 1], [], []>} : vector<8x32xf32>, vector<32x32xf32>, vector<8x32xf32> -> vector<8x32xf32>
    %157 = arith.addf %156, %16 : vector<8x32xf32>
    %158 = math.tanh %157 : vector<8x32xf32>
    %c0_86 = arith.constant 0 : index
    %c0_87 = arith.constant 0 : index
    %159 = vector.load %arg15[%c0_86, %c0_87] : memref<32x32xf32, #tpu.memory_space<vmem>>, vector<32x32xf32>
    %cst_88 = arith.constant dense<0.000000e+00> : vector<8x32xf32>
    %160 = tpu.matmul %154, %159, %cst_88 {dimension_numbers = #tpu.dot_dimension_numbers<[1], [0], [0], [1], [0, 0, 1, 1], [], []>} : vector<8x32xf32>, vector<32x32xf32>, vector<8x32xf32> -> vector<8x32xf32>
    %161 = arith.addf %160, %19 : vector<8x32xf32>
    %c0_89 = arith.constant 0 : index
    %c0_90 = arith.constant 0 : index
    %162 = vector.load %arg17[%c0_89, %c0_90] : memref<32x32xf32, #tpu.memory_space<vmem>>, vector<32x32xf32>
    %cst_91 = arith.constant dense<0.000000e+00> : vector<8x32xf32>
    %163 = tpu.matmul %158, %162, %cst_91 {dimension_numbers = #tpu.dot_dimension_numbers<[1], [0], [0], [1], [0, 0, 1, 1], [], []>} : vector<8x32xf32>, vector<32x32xf32>, vector<8x32xf32> -> vector<8x32xf32>
    %164 = arith.addf %163, %22 : vector<8x32xf32>
    %c0_92 = arith.constant 0 : index
    %c0_93 = arith.constant 0 : index
    %165 = vector.load %arg21[%c0_92, %c0_93] : memref<32x512xf32, #tpu.memory_space<vmem>>, vector<32x512xf32>
    %cst_94 = arith.constant dense<0.000000e+00> : vector<8x512xf32>
    %166 = tpu.matmul %164, %165, %cst_94 {dimension_numbers = #tpu.dot_dimension_numbers<[1], [0], [0], [1], [0, 0, 1, 1], [], []>} : vector<8x32xf32>, vector<32x512xf32>, vector<8x512xf32> -> vector<8x512xf32>
    %167 = arith.addf %7, %166 : vector<8x512xf32>
    %168 = math.tanh %167 : vector<8x512xf32>
    %c0_95 = arith.constant 0 : index
    %c0_96 = arith.constant 0 : index
    %169 = vector.load %arg20[%c0_95, %c0_96] : memref<512x16xf32, #tpu.memory_space<vmem>>, vector<512x16xf32>
    %cst_97 = arith.constant dense<0.000000e+00> : vector<8x16xf32>
    %170 = tpu.matmul %168, %169, %cst_97 {dimension_numbers = #tpu.dot_dimension_numbers<[1], [0], [0], [1], [0, 0, 1, 1], [], []>} : vector<8x512xf32>, vector<512x16xf32>, vector<8x16xf32> -> vector<8x16xf32>
    %171 = arith.addf %161, %164 : vector<8x32xf32>
    %172 = math.tanh %171 : vector<8x32xf32>
    %173 = arith.mulf %172, %10 : vector<8x32xf32>
    %cst_98 = arith.constant dense<0.000000e+00> : vector<8xf32>
    %174 = vector.multi_reduction <add>, %173, %cst_98 [1] : vector<8x32xf32> to vector<8xf32>
    %175 = vector.shape_cast %174 : vector<8xf32> to vector<8x1xf32>
    %cst_99 = arith.constant dense<0xFF800000> : vector<8xf32>
    %176 = vector.multi_reduction <maximumf>, %170, %cst_99 [1] : vector<8x16xf32> to vector<8xf32>
    %177 = vector.shape_cast %176 : vector<8xf32> to vector<8x1xf32>
    %178 = arith.maximumf %177, %175 : vector<8x1xf32>
    %179 = arith.subf %175, %178 : vector<8x1xf32>
    %180 = math.exp %179 : vector<8x1xf32>
    %181 = vector.broadcast %178 : vector<8x1xf32> to vector<8x16xf32>
    %182 = arith.subf %170, %181 : vector<8x16xf32>
    %183 = math.exp %182 : vector<8x16xf32>
    %cst_100 = arith.constant dense<0.000000e+00> : vector<8xf32>
    %184 = vector.multi_reduction <add>, %183, %cst_100 [1] : vector<8x16xf32> to vector<8xf32>
    %185 = vector.shape_cast %184 : vector<8xf32> to vector<8x1xf32>
    %186 = arith.addf %180, %185 : vector<8x1xf32>
    %cst_101 = arith.constant 1.000000e+00 : f32
    %187 = vector.broadcast %cst_101 : f32 to vector<8x1xf32>
    %188 = arith.divf %187, %186 : vector<8x1xf32>
    %c0_102 = arith.constant 0 : index
    %c0_103 = arith.constant 0 : index
    %189 = vector.load %arg22[%c0_102, %c0_103] : memref<16x512xf32, #tpu.memory_space<vmem>>, vector<16x512xf32>
    %cst_104 = arith.constant dense<0.000000e+00> : vector<8x512xf32>
    %190 = tpu.matmul %183, %189, %cst_104 {dimension_numbers = #tpu.dot_dimension_numbers<[1], [0], [0], [1], [0, 0, 1, 1], [], []>} : vector<8x16xf32>, vector<16x512xf32>, vector<8x512xf32> -> vector<8x512xf32>
    %191 = arith.mulf %190, %6 : vector<8x512xf32>
    %c0_105 = arith.constant 0 : index
    %c0_106 = arith.constant 0 : index
    %192 = vector.load %arg23[%c0_105, %c0_106] : memref<512x32xf32, #tpu.memory_space<vmem>>, vector<512x32xf32>
    %cst_107 = arith.constant dense<0.000000e+00> : vector<8x32xf32>
    %193 = tpu.matmul %191, %192, %cst_107 {dimension_numbers = #tpu.dot_dimension_numbers<[1], [0], [0], [1], [0, 0, 1, 1], [], []>} : vector<8x512xf32>, vector<512x32xf32>, vector<8x32xf32> -> vector<8x32xf32>
    %194 = vector.broadcast %180 : vector<8x1xf32> to vector<8x32xf32>
    %195 = arith.mulf %194, %154 : vector<8x32xf32>
    %196 = arith.addf %195, %193 : vector<8x32xf32>
    %197 = vector.broadcast %188 : vector<8x1xf32> to vector<8x32xf32>
    %198 = arith.mulf %197, %196 : vector<8x32xf32>
    %199 = arith.addf %198, %158 : vector<8x32xf32>
    %c0_108 = arith.constant 0 : index
    %c0_109 = arith.constant 0 : index
    %200 = vector.load %arg24[%c0_108, %c0_109] : memref<32x32xf32, #tpu.memory_space<vmem>>, vector<32x32xf32>
    %cst_110 = arith.constant dense<0.000000e+00> : vector<8x32xf32>
    %201 = tpu.matmul %199, %200, %cst_110 {dimension_numbers = #tpu.dot_dimension_numbers<[1], [0], [0], [1], [0, 0, 1, 1], [], []>} : vector<8x32xf32>, vector<32x32xf32>, vector<8x32xf32> -> vector<8x32xf32>
    %202 = arith.addf %201, %25 : vector<8x32xf32>
    %203 = math.tanh %202 : vector<8x32xf32>
    %204 = arith.index_cast %c1_i32 : i32 to index
    %c0_111 = arith.constant 0 : index
    %c0_112 = arith.constant 0 : index
    %205 = vector.load %arg26[%204, %c0_111, %c0_112] : memref<4x8x32xf32, #tpu.memory_space<vmem>>, vector<1x8x32xf32>
    %206 = vector.shape_cast %205 : vector<1x8x32xf32> to vector<8x32xf32>
    %207 = vector.shape_cast %203 : vector<8x32xf32> to vector<1x8x32xf32>
    tpu.vector_store %arg26[%204, %c0_111, %c0_112], %207 {strides = array<i32>} : memref<4x8x32xf32, #tpu.memory_space<vmem>>, vector<1x8x32xf32>,
    %c2_i32 = arith.constant 2 : i32
    %208 = arith.index_cast %c2_i32 : i32 to index
    %c0_113 = arith.constant 0 : index
    %c0_114 = arith.constant 0 : index
    %209 = vector.load %arg1[%208, %c0_113, %c0_114] : memref<4x8x32xf32, #tpu.memory_space<vmem>>, vector<1x8x32xf32>
    %210 = vector.shape_cast %209 : vector<1x8x32xf32> to vector<8x32xf32>
    %c0_115 = arith.constant 0 : index
    %c0_116 = arith.constant 0 : index
    %211 = vector.load %arg7[%c0_115, %c0_116] : memref<32x160xf32, #tpu.memory_space<vmem>>, vector<32x160xf32>
    %cst_117 = arith.constant dense<0.000000e+00> : vector<8x160xf32>
    %212 = tpu.matmul %210, %211, %cst_117 {dimension_numbers = #tpu.dot_dimension_numbers<[1], [0], [0], [1], [0, 0, 1, 1], [], []>} : vector<8x32xf32>, vector<32x160xf32>, vector<8x160xf32> -> vector<8x160xf32>
    %213 = arith.addf %5, %212 : vector<8x160xf32>
    %c0_118 = arith.constant 0 : index
    %c0_119 = arith.constant 0 : index
    %214 = vector.load %arg8[%c0_118, %c0_119] : memref<32x160xf32, #tpu.memory_space<vmem>>, vector<32x160xf32>
    %cst_120 = arith.constant dense<0.000000e+00> : vector<8x160xf32>
    %215 = tpu.matmul %143, %214, %cst_120 {dimension_numbers = #tpu.dot_dimension_numbers<[1], [0], [0], [1], [0, 0, 1, 1], [], []>} : vector<8x32xf32>, vector<32x160xf32>, vector<8x160xf32> -> vector<8x160xf32>
    %216 = arith.addf %213, %215 : vector<8x160xf32>
    %217 = vector.extract_strided_slice %216 {offsets = [0, 0], sizes = [8, 96], strides = [1, 1]} : vector<8x160xf32> to vector<8x96xf32>
    %218 = arith.negf %217 : vector<8x96xf32>
    %219 = math.exp %218 : vector<8x96xf32>
    %cst_121 = arith.constant 1.000000e+00 : f32
    %220 = vector.broadcast %cst_121 : f32 to vector<8x96xf32>
    %221 = arith.addf %220, %219 : vector<8x96xf32>
    %222 = arith.divf %220, %221 : vector<8x96xf32>
    %223 = vector.extract_strided_slice %222 {offsets = [0, 0], sizes = [8, 32], strides = [1, 1]} : vector<8x96xf32> to vector<8x32xf32>
    %224 = vector.extract_strided_slice %222 {offsets = [0, 32], sizes = [8, 32], strides = [1, 1]} : vector<8x96xf32> to vector<8x32xf32>
    %225 = vector.extract_strided_slice %222 {offsets = [0, 64], sizes = [8, 32], strides = [1, 1]} : vector<8x96xf32> to vector<8x32xf32>
    %226 = vector.extract_strided_slice %216 {offsets = [0, 96], sizes = [8, 32], strides = [1, 1]} : vector<8x160xf32> to vector<8x32xf32>
    %227 = math.tanh %226 : vector<8x32xf32>
    %228 = vector.extract_strided_slice %216 {offsets = [0, 128], sizes = [8, 32], strides = [1, 1]} : vector<8x160xf32> to vector<8x32xf32>
    %229 = arith.mulf %224, %141 : vector<8x32xf32>
    %230 = arith.mulf %223, %227 : vector<8x32xf32>
    %231 = arith.addf %229, %230 : vector<8x32xf32>
    %232 = math.tanh %231 : vector<8x32xf32>
    %233 = arith.mulf %225, %232 : vector<8x32xf32>
    %234 = arith.negf %228 : vector<8x32xf32>
    %235 = math.exp %234 : vector<8x32xf32>
    %cst_122 = arith.constant 1.000000e+00 : f32
    %236 = vector.broadcast %cst_122 : f32 to vector<8x32xf32>
    %237 = arith.addf %236, %235 : vector<8x32xf32>
    %238 = arith.divf %236, %237 : vector<8x32xf32>
    %239 = arith.mulf %238, %232 : vector<8x32xf32>
    %c0_123 = arith.constant 0 : index
    %c0_124 = arith.constant 0 : index
    %240 = vector.load %arg11[%c0_123, %c0_124] : memref<32x32xf32, #tpu.memory_space<vmem>>, vector<32x32xf32>
    %cst_125 = arith.constant dense<0.000000e+00> : vector<8x32xf32>
    %241 = tpu.matmul %239, %240, %cst_125 {dimension_numbers = #tpu.dot_dimension_numbers<[1], [0], [0], [1], [0, 0, 1, 1], [], []>} : vector<8x32xf32>, vector<32x32xf32>, vector<8x32xf32> -> vector<8x32xf32>
    %242 = arith.addf %241, %13 : vector<8x32xf32>
    %cst_126 = arith.constant 0.000000e+00 : f32
    %243 = vector.broadcast %cst_126 : f32 to vector<8x32xf32>
    %244 = arith.maximumf %242, %243 : vector<8x32xf32>
    %c0_127 = arith.constant 0 : index
    %c0_128 = arith.constant 0 : index
    %245 = vector.load %arg13[%c0_127, %c0_128] : memref<32x32xf32, #tpu.memory_space<vmem>>, vector<32x32xf32>
    %cst_129 = arith.constant dense<0.000000e+00> : vector<8x32xf32>
    %246 = tpu.matmul %233, %245, %cst_129 {dimension_numbers = #tpu.dot_dimension_numbers<[1], [0], [0], [1], [0, 0, 1, 1], [], []>} : vector<8x32xf32>, vector<32x32xf32>, vector<8x32xf32> -> vector<8x32xf32>
    %247 = arith.addf %246, %16 : vector<8x32xf32>
    %248 = math.tanh %247 : vector<8x32xf32>
    %c0_130 = arith.constant 0 : index
    %c0_131 = arith.constant 0 : index
    %249 = vector.load %arg15[%c0_130, %c0_131] : memref<32x32xf32, #tpu.memory_space<vmem>>, vector<32x32xf32>
    %cst_132 = arith.constant dense<0.000000e+00> : vector<8x32xf32>
    %250 = tpu.matmul %244, %249, %cst_132 {dimension_numbers = #tpu.dot_dimension_numbers<[1], [0], [0], [1], [0, 0, 1, 1], [], []>} : vector<8x32xf32>, vector<32x32xf32>, vector<8x32xf32> -> vector<8x32xf32>
    %251 = arith.addf %250, %19 : vector<8x32xf32>
    %c0_133 = arith.constant 0 : index
    %c0_134 = arith.constant 0 : index
    %252 = vector.load %arg17[%c0_133, %c0_134] : memref<32x32xf32, #tpu.memory_space<vmem>>, vector<32x32xf32>
    %cst_135 = arith.constant dense<0.000000e+00> : vector<8x32xf32>
    %253 = tpu.matmul %248, %252, %cst_135 {dimension_numbers = #tpu.dot_dimension_numbers<[1], [0], [0], [1], [0, 0, 1, 1], [], []>} : vector<8x32xf32>, vector<32x32xf32>, vector<8x32xf32> -> vector<8x32xf32>
    %254 = arith.addf %253, %22 : vector<8x32xf32>
    %c0_136 = arith.constant 0 : index
    %c0_137 = arith.constant 0 : index
    %255 = vector.load %arg21[%c0_136, %c0_137] : memref<32x512xf32, #tpu.memory_space<vmem>>, vector<32x512xf32>
    %cst_138 = arith.constant dense<0.000000e+00> : vector<8x512xf32>
    %256 = tpu.matmul %254, %255, %cst_138 {dimension_numbers = #tpu.dot_dimension_numbers<[1], [0], [0], [1], [0, 0, 1, 1], [], []>} : vector<8x32xf32>, vector<32x512xf32>, vector<8x512xf32> -> vector<8x512xf32>
    %257 = arith.addf %7, %256 : vector<8x512xf32>
    %258 = math.tanh %257 : vector<8x512xf32>
    %c0_139 = arith.constant 0 : index
    %c0_140 = arith.constant 0 : index
    %259 = vector.load %arg20[%c0_139, %c0_140] : memref<512x16xf32, #tpu.memory_space<vmem>>, vector<512x16xf32>
    %cst_141 = arith.constant dense<0.000000e+00> : vector<8x16xf32>
    %260 = tpu.matmul %258, %259, %cst_141 {dimension_numbers = #tpu.dot_dimension_numbers<[1], [0], [0], [1], [0, 0, 1, 1], [], []>} : vector<8x512xf32>, vector<512x16xf32>, vector<8x16xf32> -> vector<8x16xf32>
    %261 = arith.addf %251, %254 : vector<8x32xf32>
    %262 = math.tanh %261 : vector<8x32xf32>
    %263 = arith.mulf %262, %10 : vector<8x32xf32>
    %cst_142 = arith.constant dense<0.000000e+00> : vector<8xf32>
    %264 = vector.multi_reduction <add>, %263, %cst_142 [1] : vector<8x32xf32> to vector<8xf32>
    %265 = vector.shape_cast %264 : vector<8xf32> to vector<8x1xf32>
    %cst_143 = arith.constant dense<0xFF800000> : vector<8xf32>
    %266 = vector.multi_reduction <maximumf>, %260, %cst_143 [1] : vector<8x16xf32> to vector<8xf32>
    %267 = vector.shape_cast %266 : vector<8xf32> to vector<8x1xf32>
    %268 = arith.maximumf %267, %265 : vector<8x1xf32>
    %269 = arith.subf %265, %268 : vector<8x1xf32>
    %270 = math.exp %269 : vector<8x1xf32>
    %271 = vector.broadcast %268 : vector<8x1xf32> to vector<8x16xf32>
    %272 = arith.subf %260, %271 : vector<8x16xf32>
    %273 = math.exp %272 : vector<8x16xf32>
    %cst_144 = arith.constant dense<0.000000e+00> : vector<8xf32>
    %274 = vector.multi_reduction <add>, %273, %cst_144 [1] : vector<8x16xf32> to vector<8xf32>
    %275 = vector.shape_cast %274 : vector<8xf32> to vector<8x1xf32>
    %276 = arith.addf %270, %275 : vector<8x1xf32>
    %cst_145 = arith.constant 1.000000e+00 : f32
    %277 = vector.broadcast %cst_145 : f32 to vector<8x1xf32>
    %278 = arith.divf %277, %276 : vector<8x1xf32>
    %c0_146 = arith.constant 0 : index
    %c0_147 = arith.constant 0 : index
    %279 = vector.load %arg22[%c0_146, %c0_147] : memref<16x512xf32, #tpu.memory_space<vmem>>, vector<16x512xf32>
    %cst_148 = arith.constant dense<0.000000e+00> : vector<8x512xf32>
    %280 = tpu.matmul %273, %279, %cst_148 {dimension_numbers = #tpu.dot_dimension_numbers<[1], [0], [0], [1], [0, 0, 1, 1], [], []>} : vector<8x16xf32>, vector<16x512xf32>, vector<8x512xf32> -> vector<8x512xf32>
    %281 = arith.mulf %280, %6 : vector<8x512xf32>
    %c0_149 = arith.constant 0 : index
    %c0_150 = arith.constant 0 : index
    %282 = vector.load %arg23[%c0_149, %c0_150] : memref<512x32xf32, #tpu.memory_space<vmem>>, vector<512x32xf32>
    %cst_151 = arith.constant dense<0.000000e+00> : vector<8x32xf32>
    %283 = tpu.matmul %281, %282, %cst_151 {dimension_numbers = #tpu.dot_dimension_numbers<[1], [0], [0], [1], [0, 0, 1, 1], [], []>} : vector<8x512xf32>, vector<512x32xf32>, vector<8x32xf32> -> vector<8x32xf32>
    %284 = vector.broadcast %270 : vector<8x1xf32> to vector<8x32xf32>
    %285 = arith.mulf %284, %244 : vector<8x32xf32>
    %286 = arith.addf %285, %283 : vector<8x32xf32>
    %287 = vector.broadcast %278 : vector<8x1xf32> to vector<8x32xf32>
    %288 = arith.mulf %287, %286 : vector<8x32xf32>
    %289 = arith.addf %288, %248 : vector<8x32xf32>
    %c0_152 = arith.constant 0 : index
    %c0_153 = arith.constant 0 : index
    %290 = vector.load %arg24[%c0_152, %c0_153] : memref<32x32xf32, #tpu.memory_space<vmem>>, vector<32x32xf32>
    %cst_154 = arith.constant dense<0.000000e+00> : vector<8x32xf32>
    %291 = tpu.matmul %289, %290, %cst_154 {dimension_numbers = #tpu.dot_dimension_numbers<[1], [0], [0], [1], [0, 0, 1, 1], [], []>} : vector<8x32xf32>, vector<32x32xf32>, vector<8x32xf32> -> vector<8x32xf32>
    %292 = arith.addf %291, %25 : vector<8x32xf32>
    %293 = math.tanh %292 : vector<8x32xf32>
    %294 = arith.index_cast %c2_i32 : i32 to index
    %c0_155 = arith.constant 0 : index
    %c0_156 = arith.constant 0 : index
    %295 = vector.load %arg26[%294, %c0_155, %c0_156] : memref<4x8x32xf32, #tpu.memory_space<vmem>>, vector<1x8x32xf32>
    %296 = vector.shape_cast %295 : vector<1x8x32xf32> to vector<8x32xf32>
    %297 = vector.shape_cast %293 : vector<8x32xf32> to vector<1x8x32xf32>
    tpu.vector_store %arg26[%294, %c0_155, %c0_156], %297 {strides = array<i32>} : memref<4x8x32xf32, #tpu.memory_space<vmem>>, vector<1x8x32xf32>,
    %c3_i32 = arith.constant 3 : i32
    %298 = arith.index_cast %c3_i32 : i32 to index
    %c0_157 = arith.constant 0 : index
    %c0_158 = arith.constant 0 : index
    %299 = vector.load %arg1[%298, %c0_157, %c0_158] : memref<4x8x32xf32, #tpu.memory_space<vmem>>, vector<1x8x32xf32>
    %300 = vector.shape_cast %299 : vector<1x8x32xf32> to vector<8x32xf32>
    %c0_159 = arith.constant 0 : index
    %c0_160 = arith.constant 0 : index
    %301 = vector.load %arg7[%c0_159, %c0_160] : memref<32x160xf32, #tpu.memory_space<vmem>>, vector<32x160xf32>
    %cst_161 = arith.constant dense<0.000000e+00> : vector<8x160xf32>
    %302 = tpu.matmul %300, %301, %cst_161 {dimension_numbers = #tpu.dot_dimension_numbers<[1], [0], [0], [1], [0, 0, 1, 1], [], []>} : vector<8x32xf32>, vector<32x160xf32>, vector<8x160xf32> -> vector<8x160xf32>
    %303 = arith.addf %5, %302 : vector<8x160xf32>
    %c0_162 = arith.constant 0 : index
    %c0_163 = arith.constant 0 : index
    %304 = vector.load %arg8[%c0_162, %c0_163] : memref<32x160xf32, #tpu.memory_space<vmem>>, vector<32x160xf32>
    %cst_164 = arith.constant dense<0.000000e+00> : vector<8x160xf32>
    %305 = tpu.matmul %233, %304, %cst_164 {dimension_numbers = #tpu.dot_dimension_numbers<[1], [0], [0], [1], [0, 0, 1, 1], [], []>} : vector<8x32xf32>, vector<32x160xf32>, vector<8x160xf32> -> vector<8x160xf32>
    %306 = arith.addf %303, %305 : vector<8x160xf32>
    %307 = vector.extract_strided_slice %306 {offsets = [0, 0], sizes = [8, 96], strides = [1, 1]} : vector<8x160xf32> to vector<8x96xf32>
    %308 = arith.negf %307 : vector<8x96xf32>
    %309 = math.exp %308 : vector<8x96xf32>
    %cst_165 = arith.constant 1.000000e+00 : f32
    %310 = vector.broadcast %cst_165 : f32 to vector<8x96xf32>
    %311 = arith.addf %310, %309 : vector<8x96xf32>
    %312 = arith.divf %310, %311 : vector<8x96xf32>
    %313 = vector.extract_strided_slice %312 {offsets = [0, 0], sizes = [8, 32], strides = [1, 1]} : vector<8x96xf32> to vector<8x32xf32>
    %314 = vector.extract_strided_slice %312 {offsets = [0, 32], sizes = [8, 32], strides = [1, 1]} : vector<8x96xf32> to vector<8x32xf32>
    %315 = vector.extract_strided_slice %312 {offsets = [0, 64], sizes = [8, 32], strides = [1, 1]} : vector<8x96xf32> to vector<8x32xf32>
    %316 = vector.extract_strided_slice %306 {offsets = [0, 96], sizes = [8, 32], strides = [1, 1]} : vector<8x160xf32> to vector<8x32xf32>
    %317 = math.tanh %316 : vector<8x32xf32>
    %318 = vector.extract_strided_slice %306 {offsets = [0, 128], sizes = [8, 32], strides = [1, 1]} : vector<8x160xf32> to vector<8x32xf32>
    %319 = arith.mulf %314, %231 : vector<8x32xf32>
    %320 = arith.mulf %313, %317 : vector<8x32xf32>
    %321 = arith.addf %319, %320 : vector<8x32xf32>
    %322 = math.tanh %321 : vector<8x32xf32>
    %323 = arith.mulf %315, %322 : vector<8x32xf32>
    %324 = arith.negf %318 : vector<8x32xf32>
    %325 = math.exp %324 : vector<8x32xf32>
    %cst_166 = arith.constant 1.000000e+00 : f32
    %326 = vector.broadcast %cst_166 : f32 to vector<8x32xf32>
    %327 = arith.addf %326, %325 : vector<8x32xf32>
    %328 = arith.divf %326, %327 : vector<8x32xf32>
    %329 = arith.mulf %328, %322 : vector<8x32xf32>
    %c0_167 = arith.constant 0 : index
    %c0_168 = arith.constant 0 : index
    %330 = vector.load %arg11[%c0_167, %c0_168] : memref<32x32xf32, #tpu.memory_space<vmem>>, vector<32x32xf32>
    %cst_169 = arith.constant dense<0.000000e+00> : vector<8x32xf32>
    %331 = tpu.matmul %329, %330, %cst_169 {dimension_numbers = #tpu.dot_dimension_numbers<[1], [0], [0], [1], [0, 0, 1, 1], [], []>} : vector<8x32xf32>, vector<32x32xf32>, vector<8x32xf32> -> vector<8x32xf32>
    %332 = arith.addf %331, %13 : vector<8x32xf32>
    %cst_170 = arith.constant 0.000000e+00 : f32
    %333 = vector.broadcast %cst_170 : f32 to vector<8x32xf32>
    %334 = arith.maximumf %332, %333 : vector<8x32xf32>
    %c0_171 = arith.constant 0 : index
    %c0_172 = arith.constant 0 : index
    %335 = vector.load %arg13[%c0_171, %c0_172] : memref<32x32xf32, #tpu.memory_space<vmem>>, vector<32x32xf32>
    %cst_173 = arith.constant dense<0.000000e+00> : vector<8x32xf32>
    %336 = tpu.matmul %323, %335, %cst_173 {dimension_numbers = #tpu.dot_dimension_numbers<[1], [0], [0], [1], [0, 0, 1, 1], [], []>} : vector<8x32xf32>, vector<32x32xf32>, vector<8x32xf32> -> vector<8x32xf32>
    %337 = arith.addf %336, %16 : vector<8x32xf32>
    %338 = math.tanh %337 : vector<8x32xf32>
    %c0_174 = arith.constant 0 : index
    %c0_175 = arith.constant 0 : index
    %339 = vector.load %arg15[%c0_174, %c0_175] : memref<32x32xf32, #tpu.memory_space<vmem>>, vector<32x32xf32>
    %cst_176 = arith.constant dense<0.000000e+00> : vector<8x32xf32>
    %340 = tpu.matmul %334, %339, %cst_176 {dimension_numbers = #tpu.dot_dimension_numbers<[1], [0], [0], [1], [0, 0, 1, 1], [], []>} : vector<8x32xf32>, vector<32x32xf32>, vector<8x32xf32> -> vector<8x32xf32>
    %341 = arith.addf %340, %19 : vector<8x32xf32>
    %c0_177 = arith.constant 0 : index
    %c0_178 = arith.constant 0 : index
    %342 = vector.load %arg17[%c0_177, %c0_178] : memref<32x32xf32, #tpu.memory_space<vmem>>, vector<32x32xf32>
    %cst_179 = arith.constant dense<0.000000e+00> : vector<8x32xf32>
    %343 = tpu.matmul %338, %342, %cst_179 {dimension_numbers = #tpu.dot_dimension_numbers<[1], [0], [0], [1], [0, 0, 1, 1], [], []>} : vector<8x32xf32>, vector<32x32xf32>, vector<8x32xf32> -> vector<8x32xf32>
    %344 = arith.addf %343, %22 : vector<8x32xf32>
    %c0_180 = arith.constant 0 : index
    %c0_181 = arith.constant 0 : index
    %345 = vector.load %arg21[%c0_180, %c0_181] : memref<32x512xf32, #tpu.memory_space<vmem>>, vector<32x512xf32>
    %cst_182 = arith.constant dense<0.000000e+00> : vector<8x512xf32>
    %346 = tpu.matmul %344, %345, %cst_182 {dimension_numbers = #tpu.dot_dimension_numbers<[1], [0], [0], [1], [0, 0, 1, 1], [], []>} : vector<8x32xf32>, vector<32x512xf32>, vector<8x512xf32> -> vector<8x512xf32>
    %347 = arith.addf %7, %346 : vector<8x512xf32>
    %348 = math.tanh %347 : vector<8x512xf32>
    %c0_183 = arith.constant 0 : index
    %c0_184 = arith.constant 0 : index
    %349 = vector.load %arg20[%c0_183, %c0_184] : memref<512x16xf32, #tpu.memory_space<vmem>>, vector<512x16xf32>
    %cst_185 = arith.constant dense<0.000000e+00> : vector<8x16xf32>
    %350 = tpu.matmul %348, %349, %cst_185 {dimension_numbers = #tpu.dot_dimension_numbers<[1], [0], [0], [1], [0, 0, 1, 1], [], []>} : vector<8x512xf32>, vector<512x16xf32>, vector<8x16xf32> -> vector<8x16xf32>
    %351 = arith.addf %341, %344 : vector<8x32xf32>
    %352 = math.tanh %351 : vector<8x32xf32>
    %353 = arith.mulf %352, %10 : vector<8x32xf32>
    %cst_186 = arith.constant dense<0.000000e+00> : vector<8xf32>
    %354 = vector.multi_reduction <add>, %353, %cst_186 [1] : vector<8x32xf32> to vector<8xf32>
    %355 = vector.shape_cast %354 : vector<8xf32> to vector<8x1xf32>
    %cst_187 = arith.constant dense<0xFF800000> : vector<8xf32>
    %356 = vector.multi_reduction <maximumf>, %350, %cst_187 [1] : vector<8x16xf32> to vector<8xf32>
    %357 = vector.shape_cast %356 : vector<8xf32> to vector<8x1xf32>
    %358 = arith.maximumf %357, %355 : vector<8x1xf32>
    %359 = arith.subf %355, %358 : vector<8x1xf32>
    %360 = math.exp %359 : vector<8x1xf32>
    %361 = vector.broadcast %358 : vector<8x1xf32> to vector<8x16xf32>
    %362 = arith.subf %350, %361 : vector<8x16xf32>
    %363 = math.exp %362 : vector<8x16xf32>
    %cst_188 = arith.constant dense<0.000000e+00> : vector<8xf32>
    %364 = vector.multi_reduction <add>, %363, %cst_188 [1] : vector<8x16xf32> to vector<8xf32>
    %365 = vector.shape_cast %364 : vector<8xf32> to vector<8x1xf32>
    %366 = arith.addf %360, %365 : vector<8x1xf32>
    %cst_189 = arith.constant 1.000000e+00 : f32
    %367 = vector.broadcast %cst_189 : f32 to vector<8x1xf32>
    %368 = arith.divf %367, %366 : vector<8x1xf32>
    %c0_190 = arith.constant 0 : index
    %c0_191 = arith.constant 0 : index
    %369 = vector.load %arg22[%c0_190, %c0_191] : memref<16x512xf32, #tpu.memory_space<vmem>>, vector<16x512xf32>
    %cst_192 = arith.constant dense<0.000000e+00> : vector<8x512xf32>
    %370 = tpu.matmul %363, %369, %cst_192 {dimension_numbers = #tpu.dot_dimension_numbers<[1], [0], [0], [1], [0, 0, 1, 1], [], []>} : vector<8x16xf32>, vector<16x512xf32>, vector<8x512xf32> -> vector<8x512xf32>
    %371 = arith.mulf %370, %6 : vector<8x512xf32>
    %c0_193 = arith.constant 0 : index
    %c0_194 = arith.constant 0 : index
    %372 = vector.load %arg23[%c0_193, %c0_194] : memref<512x32xf32, #tpu.memory_space<vmem>>, vector<512x32xf32>
    %cst_195 = arith.constant dense<0.000000e+00> : vector<8x32xf32>
    %373 = tpu.matmul %371, %372, %cst_195 {dimension_numbers = #tpu.dot_dimension_numbers<[1], [0], [0], [1], [0, 0, 1, 1], [], []>} : vector<8x512xf32>, vector<512x32xf32>, vector<8x32xf32> -> vector<8x32xf32>
    %374 = vector.broadcast %360 : vector<8x1xf32> to vector<8x32xf32>
    %375 = arith.mulf %374, %334 : vector<8x32xf32>
    %376 = arith.addf %375, %373 : vector<8x32xf32>
    %377 = vector.broadcast %368 : vector<8x1xf32> to vector<8x32xf32>
    %378 = arith.mulf %377, %376 : vector<8x32xf32>
    %379 = arith.addf %378, %338 : vector<8x32xf32>
    %c0_196 = arith.constant 0 : index
    %c0_197 = arith.constant 0 : index
    %380 = vector.load %arg24[%c0_196, %c0_197] : memref<32x32xf32, #tpu.memory_space<vmem>>, vector<32x32xf32>
    %cst_198 = arith.constant dense<0.000000e+00> : vector<8x32xf32>
    %381 = tpu.matmul %379, %380, %cst_198 {dimension_numbers = #tpu.dot_dimension_numbers<[1], [0], [0], [1], [0, 0, 1, 1], [], []>} : vector<8x32xf32>, vector<32x32xf32>, vector<8x32xf32> -> vector<8x32xf32>
    %382 = arith.addf %381, %25 : vector<8x32xf32>
    %383 = math.tanh %382 : vector<8x32xf32>
    %384 = arith.index_cast %c3_i32 : i32 to index
    %c0_199 = arith.constant 0 : index
    %c0_200 = arith.constant 0 : index
    %385 = vector.load %arg26[%384, %c0_199, %c0_200] : memref<4x8x32xf32, #tpu.memory_space<vmem>>, vector<1x8x32xf32>
    %386 = vector.shape_cast %385 : vector<1x8x32xf32> to vector<8x32xf32>
    %387 = vector.shape_cast %383 : vector<8x32xf32> to vector<1x8x32xf32>
    tpu.vector_store %arg26[%384, %c0_199, %c0_200], %387 {strides = array<i32>} : memref<4x8x32xf32, #tpu.memory_space<vmem>>, vector<1x8x32xf32>,
    %c4_i32 = arith.constant 4 : i32
    %c0_201 = arith.constant 0 : index
    %c0_202 = arith.constant 0 : index
    %388 = vector.load %arg27[%c0_201, %c0_202] : memref<8x32xf32, #tpu.memory_space<vmem>>, vector<8x32xf32>
    tpu.vector_store %arg27[%c0_201, %c0_202], %323 {strides = array<i32>} : memref<8x32xf32, #tpu.memory_space<vmem>>, vector<8x32xf32>,
    %c0_203 = arith.constant 0 : index
    %c0_204 = arith.constant 0 : index
    %389 = vector.load %arg28[%c0_203, %c0_204] : memref<8x32xf32, #tpu.memory_space<vmem>>, vector<8x32xf32>
    tpu.vector_store %arg28[%c0_203, %c0_204], %321 {strides = array<i32>} : memref<8x32xf32, #tpu.memory_space<vmem>>, vector<8x32xf32>,
    return
  }
  func.func @transform_0(%arg0: i32) -> (i32, i32, i32) {
    %c0_i32 = arith.constant 0 : i32
    %c0_i32_0 = arith.constant 0 : i32
    %c0_i32_1 = arith.constant 0 : i32
    %c0_i32_2 = arith.constant 0 : i32
    return %c0_i32, %c0_i32_0, %c0_i32_1 : i32, i32, i32
  }
  func.func @transform_1(%arg0: i32) -> (i32, i32) {
    %c0_i32 = arith.constant 0 : i32
    %c0_i32_0 = arith.constant 0 : i32
    %c0_i32_1 = arith.constant 0 : i32
    return %c0_i32, %c0_i32_0 : i32, i32
  }
  func.func @transform_2(%arg0: i32) -> (i32, i32) {
    %c0_i32 = arith.constant 0 : i32
    %c0_i32_0 = arith.constant 0 : i32
    %c0_i32_1 = arith.constant 0 : i32
    return %c0_i32, %c0_i32_0 : i32, i32
  }
  func.func @transform_3(%arg0: i32) -> (i32, i32) {
    %c0_i32 = arith.constant 0 : i32
    %c0_i32_0 = arith.constant 0 : i32
    %c0_i32_1 = arith.constant 0 : i32
    return %c0_i32, %c0_i32_0 : i32, i32
  }
  func.func @transform_4(%arg0: i32) -> (i32, i32) {
    %c0_i32 = arith.constant 0 : i32
    %c0_i32_0 = arith.constant 0 : i32
    %c0_i32_1 = arith.constant 0 : i32
    return %c0_i32, %c0_i32_0 : i32, i32
  }
  func.func @transform_5(%arg0: i32) -> (i32, i32) {
    %c0_i32 = arith.constant 0 : i32
    %c0_i32_0 = arith.constant 0 : i32
    %c0_i32_1 = arith.constant 0 : i32
    return %c0_i32, %c0_i32_0 : i32, i32
  }
  func.func @transform_6(%arg0: i32) -> (i32, i32) {
    %c0_i32 = arith.constant 0 : i32
    %c0_i32_0 = arith.constant 0 : i32
    %c0_i32_1 = arith.constant 0 : i32
    return %c0_i32, %c0_i32_0 : i32, i32
  }
  func.func @transform_7(%arg0: i32) -> (i32, i32) {
    %c0_i32 = arith.constant 0 : i32
    %c0_i32_0 = arith.constant 0 : i32
    %c0_i32_1 = arith.constant 0 : i32
    return %c0_i32, %c0_i32_0 : i32, i32
  }
  func.func @transform_8(%arg0: i32) -> (i32, i32) {
    %c0_i32 = arith.constant 0 : i32
    %c0_i32_0 = arith.constant 0 : i32
    %c0_i32_1 = arith.constant 0 : i32
    return %c0_i32, %c0_i32_0 : i32, i32
  }
  func.func @transform_9(%arg0: i32) -> (i32, i32) {
    %c0_i32 = arith.constant 0 : i32
    %c0_i32_0 = arith.constant 0 : i32
    %c0_i32_1 = arith.constant 0 : i32
    return %c0_i32, %c0_i32_0 : i32, i32
  }
  func.func @transform_10(%arg0: i32) -> (i32, i32) {
    %c0_i32 = arith.constant 0 : i32
    %c0_i32_0 = arith.constant 0 : i32
    %c0_i32_1 = arith.constant 0 : i32
    return %c0_i32, %c0_i32_0 : i32, i32
  }
  func.func @transform_11(%arg0: i32) -> (i32, i32) {
    %c0_i32 = arith.constant 0 : i32
    %c0_i32_0 = arith.constant 0 : i32
    %c0_i32_1 = arith.constant 0 : i32
    return %c0_i32, %c0_i32_0 : i32, i32
  }
  func.func @transform_12(%arg0: i32) -> (i32, i32) {
    %c0_i32 = arith.constant 0 : i32
    %c0_i32_0 = arith.constant 0 : i32
    %c0_i32_1 = arith.constant 0 : i32
    return %c0_i32, %c0_i32_0 : i32, i32
  }
  func.func @transform_13(%arg0: i32) -> (i32, i32) {
    %c0_i32 = arith.constant 0 : i32
    %c0_i32_0 = arith.constant 0 : i32
    %c0_i32_1 = arith.constant 0 : i32
    return %c0_i32, %c0_i32_0 : i32, i32
  }
  func.func @transform_14(%arg0: i32) -> (i32, i32) {
    %c0_i32 = arith.constant 0 : i32
    %c0_i32_0 = arith.constant 0 : i32
    %c0_i32_1 = arith.constant 0 : i32
    return %c0_i32, %c0_i32_0 : i32, i32
  }
  func.func @transform_15(%arg0: i32) -> (i32, i32) {
    %c0_i32 = arith.constant 0 : i32
    %c0_i32_0 = arith.constant 0 : i32
    %c0_i32_1 = arith.constant 0 : i32
    return %c0_i32, %c0_i32_0 : i32, i32
  }
  func.func @transform_16(%arg0: i32) -> (i32, i32) {
    %c0_i32 = arith.constant 0 : i32
    %c0_i32_0 = arith.constant 0 : i32
    %c0_i32_1 = arith.constant 0 : i32
    return %c0_i32, %c0_i32_0 : i32, i32
  }
  func.func @transform_17(%arg0: i32) -> (i32, i32) {
    %c0_i32 = arith.constant 0 : i32
    %c0_i32_0 = arith.constant 0 : i32
    %c0_i32_1 = arith.constant 0 : i32
    return %c0_i32, %c0_i32_0 : i32, i32
  }
  func.func @transform_18(%arg0: i32) -> (i32, i32) {
    %c0_i32 = arith.constant 0 : i32
    %c0_i32_0 = arith.constant 0 : i32
    %c0_i32_1 = arith.constant 0 : i32
    return %c0_i32, %c0_i32_0 : i32, i32
  }
  func.func @transform_19(%arg0: i32) -> (i32, i32) {
    %c0_i32 = arith.constant 0 : i32
    %c0_i32_0 = arith.constant 0 : i32
    %c0_i32_1 = arith.constant 0 : i32
    return %c0_i32, %c0_i32_0 : i32, i32
  }
  func.func @transform_20(%arg0: i32) -> (i32, i32) {
    %c0_i32 = arith.constant 0 : i32
    %c0_i32_0 = arith.constant 0 : i32
    %c0_i32_1 = arith.constant 0 : i32
    return %c0_i32, %c0_i32_0 : i32, i32
  }
  func.func @transform_21(%arg0: i32) -> (i32, i32) {
    %c0_i32 = arith.constant 0 : i32
    %c0_i32_0 = arith.constant 0 : i32
    %c0_i32_1 = arith.constant 0 : i32
    return %c0_i32, %c0_i32_0 : i32, i32
  }
  func.func @transform_22(%arg0: i32) -> (i32, i32) {
    %c0_i32 = arith.constant 0 : i32
    %c0_i32_0 = arith.constant 0 : i32
    %c0_i32_1 = arith.constant 0 : i32
    return %c0_i32, %c0_i32_0 : i32, i32
  }
  func.func @transform_23(%arg0: i32) -> (i32, i32) {
    %c0_i32 = arith.constant 0 : i32
    %c0_i32_0 = arith.constant 0 : i32
    %c0_i32_1 = arith.constant 0 : i32
    return %c0_i32, %c0_i32_0 : i32, i32
  }
  func.func @transform_24(%arg0: i32) -> (i32, i32) {
    %c0_i32 = arith.constant 0 : i32
    %c0_i32_0 = arith.constant 0 : i32
    %c0_i32_1 = arith.constant 0 : i32
    return %c0_i32, %c0_i32_0 : i32, i32
  }
  func.func @transform_25(%arg0: i32) -> (i32, i32, i32) {
    %c0_i32 = arith.constant 0 : i32
    %c0_i32_0 = arith.constant 0 : i32
    %c0_i32_1 = arith.constant 0 : i32
    %c0_i32_2 = arith.constant 0 : i32
    return %c0_i32, %c0_i32_0, %c0_i32_1 : i32, i32, i32
  }
  func.func @transform_26(%arg0: i32) -> (i32, i32) {
    %c0_i32 = arith.constant 0 : i32
    %c0_i32_0 = arith.constant 0 : i32
    %c0_i32_1 = arith.constant 0 : i32
    return %c0_i32, %c0_i32_0 : i32, i32
  }
  func.func @transform_27(%arg0: i32) -> (i32, i32) {
    %c0_i32 = arith.constant 0 : i32
    %c0_i32_0 = arith.constant 0 : i32
    %c0_i32_1 = arith.constant 0 : i32
    return %c0_i32, %c0_i32_0 : i32, i32
  }
}

</mosaic_0001>

<llo_original>
// kernel: adaatt_core_seq.1
$region0: #{adaatt_core_seq.1}
  #allocation0 [shape = 'u32[]', space=smem, size = 0x4, offset = 0x4, fixed_abs, tag = 'smem constant byte address 0x4 - core index']
  #allocation1 [shape = 'u32[72,128]{1,0:T(1,128)}', space=vmem, size = 0x9000, scoped, tag = 'internal scratch']
  %s0 = inlined_call_operand.vmem [shape: f32[4,8,32], index: 0, kind: input, shape index: {}]
  %s1 = inlined_call_operand.vmem [shape: f32[8,32], index: 1, kind: input, shape index: {}]
  %s2 = inlined_call_operand.vmem [shape: f32[8,512], index: 2, kind: input, shape index: {}]
  %s3 = inlined_call_operand.vmem [shape: f32[8,512], index: 3, kind: input, shape index: {}]
  %s4 = inlined_call_operand.vmem [shape: f32[8,32], index: 4, kind: input, shape index: {}]
  %s5 = inlined_call_operand.vmem [shape: f32[8,32], index: 5, kind: input, shape index: {}]
  %s6 = inlined_call_operand.vmem [shape: f32[32,160], index: 6, kind: input, shape index: {}]
  %s7 = inlined_call_operand.vmem [shape: f32[32,160], index: 7, kind: input, shape index: {}]
  %s8 = inlined_call_operand.vmem [shape: f32[32,160], index: 8, kind: input, shape index: {}]
  %s9 = inlined_call_operand.vmem [shape: f32[1,160], index: 9, kind: input, shape index: {}]
  %s10 = inlined_call_operand.vmem [shape: f32[32,32], index: 10, kind: input, shape index: {}]
  %s11 = inlined_call_operand.vmem [shape: f32[1,32], index: 11, kind: input, shape index: {}]
  %s12 = inlined_call_operand.vmem [shape: f32[32,32], index: 12, kind: input, shape index: {}]
  %s13 = inlined_call_operand.vmem [shape: f32[1,32], index: 13, kind: input, shape index: {}]
  %s14 = inlined_call_operand.vmem [shape: f32[32,32], index: 14, kind: input, shape index: {}]
  %s15 = inlined_call_operand.vmem [shape: f32[1,32], index: 15, kind: input, shape index: {}]
  %s16 = inlined_call_operand.vmem [shape: f32[32,32], index: 16, kind: input, shape index: {}]
  %s17 = inlined_call_operand.vmem [shape: f32[1,32], index: 17, kind: input, shape index: {}]
  %s18 = inlined_call_operand.vmem [shape: f32[1,32], index: 18, kind: input, shape index: {}]
  %s19 = inlined_call_operand.vmem [shape: f32[512,16], index: 19, kind: input, shape index: {}]
  %s20 = inlined_call_operand.vmem [shape: f32[32,512], index: 20, kind: input, shape index: {}]
  %s21 = inlined_call_operand.vmem [shape: f32[16,512], index: 21, kind: input, shape index: {}]
  %s22 = inlined_call_operand.vmem [shape: f32[512,32], index: 22, kind: input, shape index: {}]
  %s23 = inlined_call_operand.vmem [shape: f32[32,32], index: 23, kind: input, shape index: {}]
  %s24 = inlined_call_operand.vmem [shape: f32[1,32], index: 24, kind: input, shape index: {}]
  %s25 = inlined_call_operand.hbm [shape: f32[4,8,32], index: 25, kind: output, shape index: {0}]
  %s26 = inlined_call_operand.hbm [shape: f32[8,32], index: 26, kind: output, shape index: {1}]
  %s27 = inlined_call_operand.hbm [shape: f32[8,32], index: 27, kind: output, shape index: {2}]
  %28 = xla_tuple %s25, %s26, %s27
  %s29 = sld [smem:[#allocation0]]
  $region126: #{adaatt_core_seq.1} parent=0
    _
  %s31 = ssub.s32 1, %s29
  %s32 = scalar_select 0, %s31, %s29
  $region1: #{adaatt_core_seq.1} parent=0
    #allocation2 [shape = 'u8[16384]{0}', space=vmem, size = 0x4000, scoped, tag = 'output window, operand 0, single buffered']
    #allocation3 [shape = 's32[1]{0}', space=sflag, size = 0x4, scoped, tag = 'scoped memory for adaatt_core_seq.1']
    #allocation4 [shape = 'u8[4096]{0}', space=vmem, size = 0x1000, scoped, tag = 'output window, operand 1, single buffered']
    #allocation5 [shape = 's32[1]{0}', space=sflag, size = 0x4, scoped, tag = 'scoped memory for adaatt_core_seq.1']
    #allocation6 [shape = 'u8[4096]{0}', space=vmem, size = 0x1000, scoped, tag = 'output window, operand 2, single buffered']
    %33 = vsyncpa [#allocation3], 0
    %34 = vsyncpa [#allocation5], 0
    // Predicated region
    $region2: #{adaatt_core_seq.1} parent=1 // pred_check
      _
    $region3: #{adaatt_core_seq.1} parent=1 // pred_check_branch
      %36 = sbr.rel (0) target = $region5
    $region4: #{adaatt_core_seq.1} parent=1 // pred_region
      _
    $region5: #{adaatt_core_seq.1} parent=1 // pred_fallthru
      _
    // Predicated region
    $region6: #{adaatt_core_seq.1} parent=1 // pred_check
      _
    $region7: #{adaatt_core_seq.1} parent=1 // pred_check_branch
      %38 = sbr.rel (0) target = $region9
    $region8: #{adaatt_core_seq.1} parent=1 // pred_region
      _
    $region9: #{adaatt_core_seq.1} parent=1 // pred_fallthru
      _
    // Predicated region
    $region10: #{adaatt_core_seq.1} parent=1 // pred_check
      _
    $region11: #{adaatt_core_seq.1} parent=1 // pred_check_branch
      %40 = sbr.rel (0) target = $region13
    $region12: #{adaatt_core_seq.1} parent=1 // pred_region
      _
    $region13: #{adaatt_core_seq.1} parent=1 // pred_fallthru
      _
    // Predicated region
    $region14: #{adaatt_core_seq.1} parent=1 // pred_check
      _
    $region15: #{adaatt_core_seq.1} parent=1 // pred_check_branch
      %42 = sbr.rel (0) target = $region17
    $region16: #{adaatt_core_seq.1} parent=1 // pred_region
      _
    $region17: #{adaatt_core_seq.1} parent=1 // pred_fallthru
      _
    // Predicated region
    $region18: #{adaatt_core_seq.1} parent=1 // pred_check
      _
    $region19: #{adaatt_core_seq.1} parent=1 // pred_check_branch
      %44 = sbr.rel (0) target = $region21
    $region20: #{adaatt_core_seq.1} parent=1 // pred_region
      _
    $region21: #{adaatt_core_seq.1} parent=1 // pred_fallthru
      _
    // Predicated region
    $region22: #{adaatt_core_seq.1} parent=1 // pred_check
      _
    $region23: #{adaatt_core_seq.1} parent=1 // pred_check_branch
      %46 = sbr.rel (0) target = $region25
    $region24: #{adaatt_core_seq.1} parent=1 // pred_region
      _
    $region25: #{adaatt_core_seq.1} parent=1 // pred_fallthru
      _
    // Predicated region
    $region26: #{adaatt_core_seq.1} parent=1 // pred_check
      _
    $region27: #{adaatt_core_seq.1} parent=1 // pred_check_branch
      %48 = sbr.rel (0) target = $region29
    $region28: #{adaatt_core_seq.1} parent=1 // pred_region
      _
    $region29: #{adaatt_core_seq.1} parent=1 // pred_fallthru
      _
    // Predicated region
    $region30: #{adaatt_core_seq.1} parent=1 // pred_check
      _
    $region31: #{adaatt_core_seq.1} parent=1 // pred_check_branch
      %50 = sbr.rel (0) target = $region33
    $region32: #{adaatt_core_seq.1} parent=1 // pred_region
      _
    $region33: #{adaatt_core_seq.1} parent=1 // pred_fallthru
      _
    // Predicated region
    $region34: #{adaatt_core_seq.1} parent=1 // pred_check
      _
    $region35: #{adaatt_core_seq.1} parent=1 // pred_check_branch
      %52 = sbr.rel (0) target = $region37
    $region36: #{adaatt_core_seq.1} parent=1 // pred_region
      _
    $region37: #{adaatt_core_seq.1} parent=1 // pred_fallthru
      _
    // Predicated region
    $region38: #{adaatt_core_seq.1} parent=1 // pred_check
      _
    $region39: #{adaatt_core_seq.1} parent=1 // pred_check_branch
      %54 = sbr.rel (0) target = $region41
    $region40: #{adaatt_core_seq.1} parent=1 // pred_region
      _
    $region41: #{adaatt_core_seq.1} parent=1 // pred_fallthru
      _
    // Predicated region
    $region42: #{adaatt_core_seq.1} parent=1 // pred_check
      _
    $region43: #{adaatt_core_seq.1} parent=1 // pred_check_branch
      %56 = sbr.rel (0) target = $region45
    $region44: #{adaatt_core_seq.1} parent=1 // pred_region
      _
    $region45: #{adaatt_core_seq.1} parent=1 // pred_fallthru
      _
    // Predicated region
    $region46: #{adaatt_core_seq.1} parent=1 // pred_check
      _
    $region47: #{adaatt_core_seq.1} parent=1 // pred_check_branch
      %58 = sbr.rel (0) target = $region49
    $region48: #{adaatt_core_seq.1} parent=1 // pred_region
      _
    $region49: #{adaatt_core_seq.1} parent=1 // pred_fallthru
      _
    // Predicated region
    $region50: #{adaatt_core_seq.1} parent=1 // pred_check
      _
    $region51: #{adaatt_core_seq.1} parent=1 // pred_check_branch
      %60 = sbr.rel (0) target = $region53
    $region52: #{adaatt_core_seq.1} parent=1 // pred_region
      _
    $region53: #{adaatt_core_seq.1} parent=1 // pred_fallthru
      _
    // Predicated region
    $region54: #{adaatt_core_seq.1} parent=1 // pred_check
      _
    $region55: #{adaatt_core_seq.1} parent=1 // pred_check_branch
      %62 = sbr.rel (0) target = $region57
    $region56: #{adaatt_core_seq.1} parent=1 // pred_region
      _
    $region57: #{adaatt_core_seq.1} parent=1 // pred_fallthru
      _
    // Predicated region
    $region58: #{adaatt_core_seq.1} parent=1 // pred_check
      _
    $region59: #{adaatt_core_seq.1} parent=1 // pred_check_branch
      %64 = sbr.rel (0) target = $region61
    $region60: #{adaatt_core_seq.1} parent=1 // pred_region
      _
    $region61: #{adaatt_core_seq.1} parent=1 // pred_fallthru
      _
    // Predicated region
    $region62: #{adaatt_core_seq.1} parent=1 // pred_check
      _
    $region63: #{adaatt_core_seq.1} parent=1 // pred_check_branch
      %66 = sbr.rel (0) target = $region65
    $region64: #{adaatt_core_seq.1} parent=1 // pred_region
      _
    $region65: #{adaatt_core_seq.1} parent=1 // pred_fallthru
      _
    // Predicated region
    $region66: #{adaatt_core_seq.1} parent=1 // pred_check
      _
    $region67: #{adaatt_core_seq.1} parent=1 // pred_check_branch
      %68 = sbr.rel (0) target = $region69
    $region68: #{adaatt_core_seq.1} parent=1 // pred_region
      _
    $region69: #{adaatt_core_seq.1} parent=1 // pred_fallthru
      _
    // Predicated region
    $region70: #{adaatt_core_seq.1} parent=1 // pred_check
      _
    $region71: #{adaatt_core_seq.1} parent=1 // pred_check_branch
      %70 = sbr.rel (0) target = $region73
    $region72: #{adaatt_core_seq.1} parent=1 // pred_region
      _
    $region73: #{adaatt_core_seq.1} parent=1 // pred_fallthru
      _
    // Predicated region
    $region74: #{adaatt_core_seq.1} parent=1 // pred_check
      _
    $region75: #{adaatt_core_seq.1} parent=1 // pred_check_branch
      %72 = sbr.rel (0) target = $region77
    $region76: #{adaatt_core_seq.1} parent=1 // pred_region
      _
    $region77: #{adaatt_core_seq.1} parent=1 // pred_fallthru
      _
    // Predicated region
    $region78: #{adaatt_core_seq.1} parent=1 // pred_check
      _
    $region79: #{adaatt_core_seq.1} parent=1 // pred_check_branch
      %74 = sbr.rel (0) target = $region81
    $region80: #{adaatt_core_seq.1} parent=1 // pred_region
      _
    $region81: #{adaatt_core_seq.1} parent=1 // pred_fallthru
      _
    // Predicated region
    $region82: #{adaatt_core_seq.1} parent=1 // pred_check
      _
    $region83: #{adaatt_core_seq.1} parent=1 // pred_check_branch
      %76 = sbr.rel (0) target = $region85
    $region84: #{adaatt_core_seq.1} parent=1 // pred_region
      _
    $region85: #{adaatt_core_seq.1} parent=1 // pred_fallthru
      _
    // Predicated region
    $region86: #{adaatt_core_seq.1} parent=1 // pred_check
      _
    $region87: #{adaatt_core_seq.1} parent=1 // pred_check_branch
      %78 = sbr.rel (0) target = $region89
    $region88: #{adaatt_core_seq.1} parent=1 // pred_region
      _
    $region89: #{adaatt_core_seq.1} parent=1 // pred_fallthru
      _
    // Predicated region
    $region90: #{adaatt_core_seq.1} parent=1 // pred_check
      _
    $region91: #{adaatt_core_seq.1} parent=1 // pred_check_branch
      %80 = sbr.rel (0) target = $region93
    $region92: #{adaatt_core_seq.1} parent=1 // pred_region
      _
    $region93: #{adaatt_core_seq.1} parent=1 // pred_fallthru
      _
    // Predicated region
    $region94: #{adaatt_core_seq.1} parent=1 // pred_check
      _
    $region95: #{adaatt_core_seq.1} parent=1 // pred_check_branch
      %82 = sbr.rel (0) target = $region97
    $region96: #{adaatt_core_seq.1} parent=1 // pred_region
      _
    $region97: #{adaatt_core_seq.1} parent=1 // pred_fallthru
      _
    // Predicated region
    $region98: #{adaatt_core_seq.1} parent=1 // pred_check
      _
    $region99: #{adaatt_core_seq.1} parent=1 // pred_check_branch
      %84 = sbr.rel (0) target = $region101
    $region100: #{adaatt_core_seq.1} parent=1 // pred_region
      _
    $region101: #{adaatt_core_seq.1} parent=1 // pred_fallthru
      _
    %v85 = vld [vmem:[%s1] sm:$0xff]
    %v86 = vld [vmem:[%s8] sm:$0xff]
    %v87 = vld [vmem:[%s8 + $0x8] sm:$0xff]
    %v88 = vld [vmem:[%s8 + $0x10] sm:$0xff]
    %v89 = vld [vmem:[%s8 + $0x18] sm:$0xff]
    %v90 = vld [vmem:[%s8 + $0x20] sm:$0xff]
    %v91 = vld [vmem:[%s8 + $0x28] sm:$0xff]
    %v92 = vld [vmem:[%s8 + $0x30] sm:$0xff]
    %v93 = vld [vmem:[%s8 + $0x38] sm:$0xff]
    %v94 = vld [vmem:[%s9] sm:$0x3]
    %v96 = vperm.slane %v94, 0
    %v97 = vperm.slane %v94, 1
    %vm100 = vcmask 261120
    %v102 = vsel %vm100, %v85, 0
    %104 = vmatpush.msra.mxu0 0.0
    %105 = vmatpush.msra.mxu0 0.0
    %106 = vmatpush.msra.mxu0 0.0
    %107 = vmatpush.msra.mxu0 0.0
    %108 = vmatpush.msra.mxu0 0.0
    %109 = vmatpush.msra.mxu0 0.0
    %110 = vmatpush.msra.mxu0 0.0
    %111 = vmatpush.msra.mxu0 0.0
    %112 = vmatpush.msra.mxu0 0.0
    %113 = vmatpush.msra.mxu0 0.0
    %114 = vmatpush.msra.mxu0 0.0
    %115 = vmatpush.msra.mxu0 0.0
    %116 = vmatpush.msra.mxu0 %v92
    %117 = vmatpush.msra.mxu0 %v90
    %118 = vmatpush.msra.mxu0 %v88
    %119 = vmatpush.msra.mxu0 %v86
    %120 = vmatmul.f32.gmra.mxu0 %v102
    %v121 = vpop.f32.mrf.mxu0
    %v122 = vadd.f32 %v96, %v121
    %123 = vdwg.mxu0
    %124 = vmatpush.msra.mxu0 0.0
    %125 = vmatpush.msra.mxu0 0.0
    %126 = vmatpush.msra.mxu0 0.0
    %127 = vmatpush.msra.mxu0 0.0
    %128 = vmatpush.msra.mxu0 0.0
    %129 = vmatpush.msra.mxu0 0.0
    %130 = vmatpush.msra.mxu0 0.0
    %131 = vmatpush.msra.mxu0 0.0
    %132 = vmatpush.msra.mxu0 0.0
    %133 = vmatpush.msra.mxu0 0.0
    %134 = vmatpush.msra.mxu0 0.0
    %135 = vmatpush.msra.mxu0 0.0
    %136 = vmatpush.msra.mxu0 %v93
    %137 = vmatpush.msra.mxu0 %v91
    %138 = vmatpush.msra.mxu0 %v89
    %139 = vmatpush.msra.mxu0 %v87
    %140 = vmatmul.f32.gmra.mxu0 %v102
    %v141 = vpop.f32.mrf.mxu0
    %v142 = vadd.f32 %v97, %v141
    %143 = vdwg.mxu0
    %v144 = vld [vmem:[%s2] sm:$0xff]
    %v145 = vld [vmem:[%s2 + $0x8] sm:$0xff]
    %v146 = vld [vmem:[%s2 + $0x10] sm:$0xff]
    %v147 = vld [vmem:[%s2 + $0x18] sm:$0xff]
    %v148 = vld [vmem:[%s3] sm:$0xff]
    %v149 = vld [vmem:[%s3 + $0x8] sm:$0xff]
    %v150 = vld [vmem:[%s3 + $0x10] sm:$0xff]
    %v151 = vld [vmem:[%s3 + $0x18] sm:$0xff]
    %v152 = vld [vmem:[%s18] sm:$0x1]
    %v154 = vperm.slane %v152, 0
    %v156 = vld [vmem:[%s11] sm:$0x1]
    %v158 = vperm.slane %v156, 0
    %v160 = vld [vmem:[%s13] sm:$0x1]
    %v162 = vperm.slane %v160, 0
    %v164 = vld [vmem:[%s15] sm:$0x1]
    %v166 = vperm.slane %v164, 0
    %v168 = vld [vmem:[%s17] sm:$0x1]
    %v170 = vperm.slane %v168, 0
    %v172 = vld [vmem:[%s24] sm:$0x1]
    %v174 = vperm.slane %v172, 0
    %v176 = vld [vmem:[%s4] sm:$0xff]
    %v177 = vld [vmem:[%s5] sm:$0xff]
    %v178 = vld [vmem:[%s0] sm:$0xff]
    %v179 = vld [vmem:[%s6] sm:$0xff]
    %v180 = vld [vmem:[%s6 + $0x8] sm:$0xff]
    %v181 = vld [vmem:[%s6 + $0x10] sm:$0xff]
    %v182 = vld [vmem:[%s6 + $0x18] sm:$0xff]
    %v183 = vld [vmem:[%s6 + $0x20] sm:$0xff]
    %v184 = vld [vmem:[%s6 + $0x28] sm:$0xff]
    %v185 = vld [vmem:[%s6 + $0x30] sm:$0xff]
    %v186 = vld [vmem:[%s6 + $0x38] sm:$0xff]
    %v188 = vsel %vm100, %v178, 0
    %190 = vmatpush.msra.mxu0 0.0
    %191 = vmatpush.msra.mxu0 0.0
    %192 = vmatpush.msra.mxu0 0.0
    %193 = vmatpush.msra.mxu0 0.0
    %194 = vmatpush.msra.mxu0 0.0
    %195 = vmatpush.msra.mxu0 0.0
    %196 = vmatpush.msra.mxu0 0.0
    %197 = vmatpush.msra.mxu0 0.0
    %198 = vmatpush.msra.mxu0 0.0
    %199 = vmatpush.msra.mxu0 0.0
    %200 = vmatpush.msra.mxu0 0.0
    %201 = vmatpush.msra.mxu0 0.0
    %202 = vmatpush.msra.mxu0 %v185
    %203 = vmatpush.msra.mxu0 %v183
    %204 = vmatpush.msra.mxu0 %v181
    %205 = vmatpush.msra.mxu0 %v179
    %206 = vmatmul.f32.gmra.mxu0 %v188
    %v207 = vpop.f32.mrf.mxu0
    %v208 = vadd.f32 0.0, %v207
    %209 = vdwg.mxu0
    %210 = vmatpush.msra.mxu0 0.0
    %211 = vmatpush.msra.mxu0 0.0
    %212 = vmatpush.msra.mxu0 0.0
    %213 = vmatpush.msra.mxu0 0.0
    %214 = vmatpush.msra.mxu0 0.0
    %215 = vmatpush.msra.mxu0 0.0
    %216 = vmatpush.msra.mxu0 0.0
    %217 = vmatpush.msra.mxu0 0.0
    %218 = vmatpush.msra.mxu0 0.0
    %219 = vmatpush.msra.mxu0 0.0
    %220 = vmatpush.msra.mxu0 0.0
    %221 = vmatpush.msra.mxu0 0.0
    %222 = vmatpush.msra.mxu0 %v186
    %223 = vmatpush.msra.mxu0 %v184
    %224 = vmatpush.msra.mxu0 %v182
    %225 = vmatpush.msra.mxu0 %v180
    %226 = vmatmul.f32.gmra.mxu0 %v188
    %v227 = vpop.f32.mrf.mxu0
    %v228 = vadd.f32 0.0, %v227
    %229 = vdwg.mxu0
    %v230 = vadd.f32 %v122, %v208
    %v231 = vadd.f32 %v142, %v228
    %v232 = vld [vmem:[%s7] sm:$0xff]
    %v233 = vld [vmem:[%s7 + $0x8] sm:$0xff]
    %v234 = vld [vmem:[%s7 + $0x10] sm:$0xff]
    %v235 = vld [vmem:[%s7 + $0x18] sm:$0xff]
    %v236 = vld [vmem:[%s7 + $0x20] sm:$0xff]
    %v237 = vld [vmem:[%s7 + $0x28] sm:$0xff]
    %v238 = vld [vmem:[%s7 + $0x30] sm:$0xff]
    %v239 = vld [vmem:[%s7 + $0x38] sm:$0xff]
    %v241 = vsel %vm100, %v176, 0
    %243 = vmatpush.msra.mxu0 0.0
    %244 = vmatpush.msra.mxu0 0.0
    %245 = vmatpush.msra.mxu0 0.0
    %246 = vmatpush.msra.mxu0 0.0
    %247 = vmatpush.msra.mxu0 0.0
    %248 = vmatpush.msra.mxu0 0.0
    %249 = vmatpush.msra.mxu0 0.0
    %250 = vmatpush.msra.mxu0 0.0
    %251 = vmatpush.msra.mxu0 0.0
    %252 = vmatpush.msra.mxu0 0.0
    %253 = vmatpush.msra.mxu0 0.0
    %254 = vmatpush.msra.mxu0 0.0
    %255 = vmatpush.msra.mxu0 %v238
    %256 = vmatpush.msra.mxu0 %v236
    %257 = vmatpush.msra.mxu0 %v234
    %258 = vmatpush.msra.mxu0 %v232
    %259 = vmatmul.f32.gmra.mxu0 %v241
    %v260 = vpop.f32.mrf.mxu0
    %v261 = vadd.f32 0.0, %v260
    %262 = vdwg.mxu0
    %263 = vmatpush.msra.mxu0 0.0
    %264 = vmatpush.msra.mxu0 0.0
    %265 = vmatpush.msra.mxu0 0.0
    %266 = vmatpush.msra.mxu0 0.0
    %267 = vmatpush.msra.mxu0 0.0
    %268 = vmatpush.msra.mxu0 0.0
    %269 = vmatpush.msra.mxu0 0.0
    %270 = vmatpush.msra.mxu0 0.0
    %271 = vmatpush.msra.mxu0 0.0
    %272 = vmatpush.msra.mxu0 0.0
    %273 = vmatpush.msra.mxu0 0.0
    %274 = vmatpush.msra.mxu0 0.0
    %275 = vmatpush.msra.mxu0 %v239
    %276 = vmatpush.msra.mxu0 %v237
    %277 = vmatpush.msra.mxu0 %v235
    %278 = vmatpush.msra.mxu0 %v233
    %279 = vmatmul.f32.gmra.mxu0 %v241
    %v280 = vpop.f32.mrf.mxu0
    %v281 = vadd.f32 0.0, %v280
    %282 = vdwg.mxu0
    %v283 = vadd.f32 %v230, %v261
    %v284 = vadd.f32 %v231, %v281
    %v285 = vxor.u32 %v283, 2147483648
    %v286 = vmul.f32 %v285, 1.442695
    %v287 = vpow.pop %v286
    %v288 = vadd.f32 %v287, 1.0
    %v289 = vrcp.pop %v288
    %v290 = vmul.f32 %v288, %v289
    %v291 = vsub.f32 1.0, %v290
    %v292 = vmul.f32 %v289, %v291
    %v293 = vadd.f32 %v289, %v292
    %vm294 = vweird.f32 %v288
    %vm295 = vweird.f32 %v289
    %vm296 = vmor %vm294, %vm295
    %v297 = vsel %vm296, %v289, %v293
    %v298 = vand.u32 2147483647, %v288
    %vm299 = vcmp.eq.f32.partialorder %v298, 8.507059e+37
    %v300 = vand.u32 %v288, 2147483648
    %v301 = vor.u32 1.1754944e-38, %v300
    %v302 = vsel %vm299, %v301, %v297
    %v303 = vmul.f32 1.0, %v302
    %v304 = vtanh.pop %v283
    %306 = vrot.lane.b32.xlu0 %v177, 32
    %v307 = vpop.permute.xlu0 %306
    %v309 = vmul.f32 %v303, %v307
    %311 = vrot.lane.b32.xlu0 %v304, 32
    %v312 = vpop.permute.xlu0 %311
    %v314 = vmul.f32 %v303, %v312
    %316 = vrot.lane.b32.xlu0 %v314, 32
    %v317 = vpop.permute.xlu0 %316
    %v319 = vadd.f32 %v309, %v317
    %v320 = vtanh.pop %v319
    %322 = vrot.lane.b32.xlu0 %v320, 32
    %v323 = vpop.permute.xlu0 %322
    %v325 = vmul.f32 %v303, %v323
    %v326 = vxor.u32 %v284, 2147483648
    %v327 = vmul.f32 %v326, 1.442695
    %v328 = vpow.pop %v327
    %v329 = vadd.f32 %v328, 1.0
    %v330 = vrcp.pop %v329
    %v331 = vmul.f32 %v329, %v330
    %v332 = vsub.f32 1.0, %v331
    %v333 = vmul.f32 %v330, %v332
    %v334 = vadd.f32 %v330, %v333
    %vm335 = vweird.f32 %v329
    %vm336 = vweird.f32 %v330
    %vm337 = vmor %vm335, %vm336
    %v338 = vsel %vm337, %v330, %v334
    %v339 = vand.u32 2147483647, %v329
    %vm340 = vcmp.eq.f32.partialorder %v339, 8.507059e+37
    %v341 = vand.u32 %v329, 2147483648
    %v342 = vor.u32 1.1754944e-38, %v341
    %v343 = vsel %vm340, %v342, %v338
    %v344 = vmul.f32 1.0, %v343
    %345 = vrot.lane.b32.xlu0 %v320, 96
    %v346 = vpop.permute.xlu0 %345
    %v348 = vmul.f32 %v344, %v346
    %v349 = vld [vmem:[%s10] sm:$0xff]
    %v350 = vld [vmem:[%s10 + $0x8] sm:$0xff]
    %v351 = vld [vmem:[%s10 + $0x10] sm:$0xff]
    %v352 = vld [vmem:[%s10 + $0x18] sm:$0xff]
    %v354 = vsel %vm100, %v348, 0
    %356 = vmatpush.msra.mxu0 0.0
    %357 = vmatpush.msra.mxu0 0.0
    %358 = vmatpush.msra.mxu0 0.0
    %359 = vmatpush.msra.mxu0 0.0
    %360 = vmatpush.msra.mxu0 0.0
    %361 = vmatpush.msra.mxu0 0.0
    %362 = vmatpush.msra.mxu0 0.0
    %363 = vmatpush.msra.mxu0 0.0
    %364 = vmatpush.msra.mxu0 0.0
    %365 = vmatpush.msra.mxu0 0.0
    %366 = vmatpush.msra.mxu0 0.0
    %367 = vmatpush.msra.mxu0 0.0
    %368 = vmatpush.msra.mxu0 %v352
    %369 = vmatpush.msra.mxu0 %v351
    %370 = vmatpush.msra.mxu0 %v350
    %371 = vmatpush.msra.mxu0 %v349
    %372 = vmatmul.f32.gmra.mxu0 %v354
    %v373 = vpop.f32.mrf.mxu0
    %v374 = vadd.f32 %v158, %v373
    %375 = vdwg.mxu0
    %v376 = vmax.f32 %v374, 0.0
    %v377 = vld [vmem:[%s12] sm:$0xff]
    %v378 = vld [vmem:[%s12 + $0x8] sm:$0xff]
    %v379 = vld [vmem:[%s12 + $0x10] sm:$0xff]
    %v380 = vld [vmem:[%s12 + $0x18] sm:$0xff]
    %382 = vrot.lane.b32.xlu0 %v325, 64
    %v383 = vpop.permute.xlu0 %382
    %v384 = vsel %vm100, %v383, 0
    %386 = vmatpush.msra.mxu0 0.0
    %387 = vmatpush.msra.mxu0 0.0
    %388 = vmatpush.msra.mxu0 0.0
    %389 = vmatpush.msra.mxu0 0.0
    %390 = vmatpush.msra.mxu0 0.0
    %391 = vmatpush.msra.mxu0 0.0
    %392 = vmatpush.msra.mxu0 0.0
    %393 = vmatpush.msra.mxu0 0.0
    %394 = vmatpush.msra.mxu0 0.0
    %395 = vmatpush.msra.mxu0 0.0
    %396 = vmatpush.msra.mxu0 0.0
    %397 = vmatpush.msra.mxu0 0.0
    %398 = vmatpush.msra.mxu0 %v380
    %399 = vmatpush.msra.mxu0 %v379
    %400 = vmatpush.msra.mxu0 %v378
    %401 = vmatpush.msra.mxu0 %v377
    %402 = vmatmul.f32.gmra.mxu0 %v384
    %v403 = vpop.f32.mrf.mxu0
    %v404 = vadd.f32 %v162, %v403
    %405 = vdwg.mxu0
    %v406 = vtanh.pop %v404
    %v407 = vld [vmem:[%s14] sm:$0xff]
    %v408 = vld [vmem:[%s14 + $0x8] sm:$0xff]
    %v409 = vld [vmem:[%s14 + $0x10] sm:$0xff]
    %v410 = vld [vmem:[%s14 + $0x18] sm:$0xff]
    %v412 = vsel %vm100, %v376, 0
    %414 = vmatpush.msra.mxu0 0.0
    %415 = vmatpush.msra.mxu0 0.0
    %416 = vmatpush.msra.mxu0 0.0
    %417 = vmatpush.msra.mxu0 0.0
    %418 = vmatpush.msra.mxu0 0.0
    %419 = vmatpush.msra.mxu0 0.0
    %420 = vmatpush.msra.mxu0 0.0
    %421 = vmatpush.msra.mxu0 0.0
    %422 = vmatpush.msra.mxu0 0.0
    %423 = vmatpush.msra.mxu0 0.0
    %424 = vmatpush.msra.mxu0 0.0
    %425 = vmatpush.msra.mxu0 0.0
    %426 = vmatpush.msra.mxu0 %v410
    %427 = vmatpush.msra.mxu0 %v409
    %428 = vmatpush.msra.mxu0 %v408
    %429 = vmatpush.msra.mxu0 %v407
    %430 = vmatmul.f32.gmra.mxu0 %v412
    %v431 = vpop.f32.mrf.mxu0
    %v432 = vadd.f32 %v166, %v431
    %433 = vdwg.mxu0
    %v434 = vld [vmem:[%s16] sm:$0xff]
    %v435 = vld [vmem:[%s16 + $0x8] sm:$0xff]
    %v436 = vld [vmem:[%s16 + $0x10] sm:$0xff]
    %v437 = vld [vmem:[%s16 + $0x18] sm:$0xff]
    %v439 = vsel %vm100, %v406, 0
    %441 = vmatpush.msra.mxu0 0.0
    %442 = vmatpush.msra.mxu0 0.0
    %443 = vmatpush.msra.mxu0 0.0
    %444 = vmatpush.msra.mxu0 0.0
    %445 = vmatpush.msra.mxu0 0.0
    %446 = vmatpush.msra.mxu0 0.0
    %447 = vmatpush.msra.mxu0 0.0
    %448 = vmatpush.msra.mxu0 0.0
    %449 = vmatpush.msra.mxu0 0.0
    %450 = vmatpush.msra.mxu0 0.0
    %451 = vmatpush.msra.mxu0 0.0
    %452 = vmatpush.msra.mxu0 0.0
    %453 = vmatpush.msra.mxu0 %v437
    %454 = vmatpush.msra.mxu0 %v436
    %455 = vmatpush.msra.mxu0 %v435
    %456 = vmatpush.msra.mxu0 %v434
    %457 = vmatmul.f32.gmra.mxu0 %v439
    %v458 = vpop.f32.mrf.mxu0
    %v459 = vadd.f32 %v170, %v458
    %460 = vdwg.mxu0
    %v461 = vld [vmem:[%s20] sm:$0xff]
    %v462 = vld [vmem:[%s20 + $0x8] sm:$0xff]
    %v463 = vld [vmem:[%s20 + $0x10] sm:$0xff]
    %v464 = vld [vmem:[%s20 + $0x18] sm:$0xff]
    %v465 = vld [vmem:[%s20 + $0x20] sm:$0xff]
    %v466 = vld [vmem:[%s20 + $0x28] sm:$0xff]
    %v467 = vld [vmem:[%s20 + $0x30] sm:$0xff]
    %v468 = vld [vmem:[%s20 + $0x38] sm:$0xff]
    %v469 = vld [vmem:[%s20 + $0x40] sm:$0xff]
    %v470 = vld [vmem:[%s20 + $0x48] sm:$0xff]
    %v471 = vld [vmem:[%s20 + $0x50] sm:$0xff]
    %v472 = vld [vmem:[%s20 + $0x58] sm:$0xff]
    %v473 = vld [vmem:[%s20 + $0x60] sm:$0xff]
    %v474 = vld [vmem:[%s20 + $0x68] sm:$0xff]
    %v475 = vld [vmem:[%s20 + $0x70] sm:$0xff]
    %v476 = vld [vmem:[%s20 + $0x78] sm:$0xff]
    %v478 = vsel %vm100, %v459, 0
    %480 = vmatpush.msra.mxu0 0.0
    %481 = vmatpush.msra.mxu0 0.0
    %482 = vmatpush.msra.mxu0 0.0
    %483 = vmatpush.msra.mxu0 0.0
    %484 = vmatpush.msra.mxu0 0.0
    %485 = vmatpush.msra.mxu0 0.0
    %486 = vmatpush.msra.mxu0 0.0
    %487 = vmatpush.msra.mxu0 0.0
    %488 = vmatpush.msra.mxu0 0.0
    %489 = vmatpush.msra.mxu0 0.0
    %490 = vmatpush.msra.mxu0 0.0
    %491 = vmatpush.msra.mxu0 0.0
    %492 = vmatpush.msra.mxu0 %v473
    %493 = vmatpush.msra.mxu0 %v469
    %494 = vmatpush.msra.mxu0 %v465
    %495 = vmatpush.msra.mxu0 %v461
    %496 = vmatmul.f32.gmra.mxu0 %v478
    %v497 = vpop.f32.mrf.mxu0
    %v498 = vadd.f32 0.0, %v497
    %499 = vdwg.mxu0
    %500 = vmatpush.msra.mxu0 0.0
    %501 = vmatpush.msra.mxu0 0.0
    %502 = vmatpush.msra.mxu0 0.0
    %503 = vmatpush.msra.mxu0 0.0
    %504 = vmatpush.msra.mxu0 0.0
    %505 = vmatpush.msra.mxu0 0.0
    %506 = vmatpush.msra.mxu0 0.0
    %507 = vmatpush.msra.mxu0 0.0
    %508 = vmatpush.msra.mxu0 0.0
    %509 = vmatpush.msra.mxu0 0.0
    %510 = vmatpush.msra.mxu0 0.0
    %511 = vmatpush.msra.mxu0 0.0
    %512 = vmatpush.msra.mxu0 %v474
    %513 = vmatpush.msra.mxu0 %v470
    %514 = vmatpush.msra.mxu0 %v466
    %515 = vmatpush.msra.mxu0 %v462
    %516 = vmatmul.f32.gmra.mxu0 %v478
    %v517 = vpop.f32.mrf.mxu0
    %v518 = vadd.f32 0.0, %v517
    %519 = vdwg.mxu0
    %520 = vmatpush.msra.mxu0 0.0
    %521 = vmatpush.msra.mxu0 0.0
    %522 = vmatpush.msra.mxu0 0.0
    %523 = vmatpush.msra.mxu0 0.0
    %524 = vmatpush.msra.mxu0 0.0
    %525 = vmatpush.msra.mxu0 0.0
    %526 = vmatpush.msra.mxu0 0.0
    %527 = vmatpush.msra.mxu0 0.0
    %528 = vmatpush.msra.mxu0 0.0
    %529 = vmatpush.msra.mxu0 0.0
    %530 = vmatpush.msra.mxu0 0.0
    %531 = vmatpush.msra.mxu0 0.0
    %532 = vmatpush.msra.mxu0 %v475
    %533 = vmatpush.msra.mxu0 %v471
    %534 = vmatpush.msra.mxu0 %v467
    %535 = vmatpush.msra.mxu0 %v463
    %536 = vmatmul.f32.gmra.mxu0 %v478
    %v537 = vpop.f32.mrf.mxu0
    %v538 = vadd.f32 0.0, %v537
    %539 = vdwg.mxu0
    %540 = vmatpush.msra.mxu0 0.0
    %541 = vmatpush.msra.mxu0 0.0
    %542 = vmatpush.msra.mxu0 0.0
    %543 = vmatpush.msra.mxu0 0.0
    %544 = vmatpush.msra.mxu0 0.0
    %545 = vmatpush.msra.mxu0 0.0
    %546 = vmatpush.msra.mxu0 0.0
    %547 = vmatpush.msra.mxu0 0.0
    %548 = vmatpush.msra.mxu0 0.0
    %549 = vmatpush.msra.mxu0 0.0
    %550 = vmatpush.msra.mxu0 0.0
    %551 = vmatpush.msra.mxu0 0.0
    %552 = vmatpush.msra.mxu0 %v476
    %553 = vmatpush.msra.mxu0 %v472
    %554 = vmatpush.msra.mxu0 %v468
    %555 = vmatpush.msra.mxu0 %v464
    %556 = vmatmul.f32.gmra.mxu0 %v478
    %v557 = vpop.f32.mrf.mxu0
    %v558 = vadd.f32 0.0, %v557
    %559 = vdwg.mxu0
    %v560 = vadd.f32 %v148, %v498
    %v561 = vadd.f32 %v149, %v518
    %v562 = vadd.f32 %v150, %v538
    %v563 = vadd.f32 %v151, %v558
    %v564 = vtanh.pop %v560
    %v565 = vtanh.pop %v561
    %v566 = vtanh.pop %v562
    %v567 = vtanh.pop %v563
    %v568 = vld [vmem:[%s19] sm:$0xff]
    %v569 = vld [vmem:[%s19 + $0x8] sm:$0xff]
    %v570 = vld [vmem:[%s19 + $0x10] sm:$0xff]
    %v571 = vld [vmem:[%s19 + $0x18] sm:$0xff]
    %v572 = vld [vmem:[%s19 + $0x20] sm:$0xff]
    %v573 = vld [vmem:[%s19 + $0x28] sm:$0xff]
    %v574 = vld [vmem:[%s19 + $0x30] sm:$0xff]
    %v575 = vld [vmem:[%s19 + $0x38] sm:$0xff]
    %v576 = vld [vmem:[%s19 + $0x40] sm:$0xff]
    %v577 = vld [vmem:[%s19 + $0x48] sm:$0xff]
    %v578 = vld [vmem:[%s19 + $0x50] sm:$0xff]
    %v579 = vld [vmem:[%s19 + $0x58] sm:$0xff]
    %v580 = vld [vmem:[%s19 + $0x60] sm:$0xff]
    %v581 = vld [vmem:[%s19 + $0x68] sm:$0xff]
    %v582 = vld [vmem:[%s19 + $0x70] sm:$0xff]
    %v583 = vld [vmem:[%s19 + $0x78] sm:$0xff]
    %v584 = vld [vmem:[%s19 + $0x80] sm:$0xff]
    %v585 = vld [vmem:[%s19 + $0x88] sm:$0xff]
    %v586 = vld [vmem:[%s19 + $0x90] sm:$0xff]
    %v587 = vld [vmem:[%s19 + $0x98] sm:$0xff]
    %v588 = vld [vmem:[%s19 + $0xa0] sm:$0xff]
    %v589 = vld [vmem:[%s19 + $0xa8] sm:$0xff]
    %v590 = vld [vmem:[%s19 + $0xb0] sm:$0xff]
    %v591 = vld [vmem:[%s19 + $0xb8] sm:$0xff]
    %v592 = vld [vmem:[%s19 + $0xc0] sm:$0xff]
    %v593 = vld [vmem:[%s19 + $0xc8] sm:$0xff]
    %v594 = vld [vmem:[%s19 + $0xd0] sm:$0xff]
    %v595 = vld [vmem:[%s19 + $0xd8] sm:$0xff]
    %v596 = vld [vmem:[%s19 + $0xe0] sm:$0xff]
    %v597 = vld [vmem:[%s19 + $0xe8] sm:$0xff]
    %v598 = vld [vmem:[%s19 + $0xf0] sm:$0xff]
    %v599 = vld [vmem:[%s19 + $0xf8] sm:$0xff]
    %v600 = vld [vmem:[%s19 + $0x100] sm:$0xff]
    %v601 = vld [vmem:[%s19 + $0x108] sm:$0xff]
    %v602 = vld [vmem:[%s19 + $0x110] sm:$0xff]
    %v603 = vld [vmem:[%s19 + $0x118] sm:$0xff]
    %v604 = vld [vmem:[%s19 + $0x120] sm:$0xff]
    %v605 = vld [vmem:[%s19 + $0x128] sm:$0xff]
    %v606 = vld [vmem:[%s19 + $0x130] sm:$0xff]
    %v607 = vld [vmem:[%s19 + $0x138] sm:$0xff]
    %v608 = vld [vmem:[%s19 + $0x140] sm:$0xff]
    %v609 = vld [vmem:[%s19 + $0x148] sm:$0xff]
    %v610 = vld [vmem:[%s19 + $0x150] sm:$0xff]
    %v611 = vld [vmem:[%s19 + $0x158] sm:$0xff]
    %v612 = vld [vmem:[%s19 + $0x160] sm:$0xff]
    %v613 = vld [vmem:[%s19 + $0x168] sm:$0xff]
    %v614 = vld [vmem:[%s19 + $0x170] sm:$0xff]
    %v615 = vld [vmem:[%s19 + $0x178] sm:$0xff]
    %v616 = vld [vmem:[%s19 + $0x180] sm:$0xff]
    %v617 = vld [vmem:[%s19 + $0x188] sm:$0xff]
    %v618 = vld [vmem:[%s19 + $0x190] sm:$0xff]
    %v619 = vld [vmem:[%s19 + $0x198] sm:$0xff]
    %v620 = vld [vmem:[%s19 + $0x1a0] sm:$0xff]
    %v621 = vld [vmem:[%s19 + $0x1a8] sm:$0xff]
    %v622 = vld [vmem:[%s19 + $0x1b0] sm:$0xff]
    %v623 = vld [vmem:[%s19 + $0x1b8] sm:$0xff]
    %v624 = vld [vmem:[%s19 + $0x1c0] sm:$0xff]
    %v625 = vld [vmem:[%s19 + $0x1c8] sm:$0xff]
    %v626 = vld [vmem:[%s19 + $0x1d0] sm:$0xff]
    %v627 = vld [vmem:[%s19 + $0x1d8] sm:$0xff]
    %v628 = vld [vmem:[%s19 + $0x1e0] sm:$0xff]
    %v629 = vld [vmem:[%s19 + $0x1e8] sm:$0xff]
    %v630 = vld [vmem:[%s19 + $0x1f0] sm:$0xff]
    %v631 = vld [vmem:[%s19 + $0x1f8] sm:$0xff]
    %632 = vmatpush.msra.mxu0 %v583
    %633 = vmatpush.msra.mxu0 %v582
    %634 = vmatpush.msra.mxu0 %v581
    %635 = vmatpush.msra.mxu0 %v580
    %636 = vmatpush.msra.mxu0 %v579
    %637 = vmatpush.msra.mxu0 %v578
    %638 = vmatpush.msra.mxu0 %v577
    %639 = vmatpush.msra.mxu0 %v576
    %640 = vmatpush.msra.mxu0 %v575
    %641 = vmatpush.msra.mxu0 %v574
    %642 = vmatpush.msra.mxu0 %v573
    %643 = vmatpush.msra.mxu0 %v572
    %644 = vmatpush.msra.mxu0 %v571
    %645 = vmatpush.msra.mxu0 %v570
    %646 = vmatpush.msra.mxu0 %v569
    %647 = vmatpush.msra.mxu0 %v568
    %648 = vmatmul.f32.gmra.mxu0 %v564
    %v649 = vpop.f32.mrf.mxu0
    %v650 = vadd.f32 0.0, %v649
    %651 = vdwg.mxu0
    %652 = vmatpush.msra.mxu0 %v599
    %653 = vmatpush.msra.mxu0 %v598
    %654 = vmatpush.msra.mxu0 %v597
    %655 = vmatpush.msra.mxu0 %v596
    %656 = vmatpush.msra.mxu0 %v595
    %657 = vmatpush.msra.mxu0 %v594
    %658 = vmatpush.msra.mxu0 %v593
    %659 = vmatpush.msra.mxu0 %v592
    %660 = vmatpush.msra.mxu0 %v591
    %661 = vmatpush.msra.mxu0 %v590
    %662 = vmatpush.msra.mxu0 %v589
    %663 = vmatpush.msra.mxu0 %v588
    %664 = vmatpush.msra.mxu0 %v587
    %665 = vmatpush.msra.mxu0 %v586
    %666 = vmatpush.msra.mxu0 %v585
    %667 = vmatpush.msra.mxu0 %v584
    %668 = vmatmul.f32.gmra.mxu0 %v565
    %v669 = vpop.f32.mrf.mxu0
    %v670 = vadd.f32 %v650, %v669
    %671 = vdwg.mxu0
    %672 = vmatpush.msra.mxu0 %v615
    %673 = vmatpush.msra.mxu0 %v614
    %674 = vmatpush.msra.mxu0 %v613
    %675 = vmatpush.msra.mxu0 %v612
    %676 = vmatpush.msra.mxu0 %v611
    %677 = vmatpush.msra.mxu0 %v610
    %678 = vmatpush.msra.mxu0 %v609
    %679 = vmatpush.msra.mxu0 %v608
    %680 = vmatpush.msra.mxu0 %v607
    %681 = vmatpush.msra.mxu0 %v606
    %682 = vmatpush.msra.mxu0 %v605
    %683 = vmatpush.msra.mxu0 %v604
    %684 = vmatpush.msra.mxu0 %v603
    %685 = vmatpush.msra.mxu0 %v602
    %686 = vmatpush.msra.mxu0 %v601
    %687 = vmatpush.msra.mxu0 %v600
    %688 = vmatmul.f32.gmra.mxu0 %v566
    %v689 = vpop.f32.mrf.mxu0
    %v690 = vadd.f32 %v670, %v689
    %691 = vdwg.mxu0
    %692 = vmatpush.msra.mxu0 %v631
    %693 = vmatpush.msra.mxu0 %v630
    %694 = vmatpush.msra.mxu0 %v629
    %695 = vmatpush.msra.mxu0 %v628
    %696 = vmatpush.msra.mxu0 %v627
    %697 = vmatpush.msra.mxu0 %v626
    %698 = vmatpush.msra.mxu0 %v625
    %699 = vmatpush.msra.mxu0 %v624
    %700 = vmatpush.msra.mxu0 %v623
    %701 = vmatpush.msra.mxu0 %v622
    %702 = vmatpush.msra.mxu0 %v621
    %703 = vmatpush.msra.mxu0 %v620
    %704 = vmatpush.msra.mxu0 %v619
    %705 = vmatpush.msra.mxu0 %v618
    %706 = vmatpush.msra.mxu0 %v617
    %707 = vmatpush.msra.mxu0 %v616
    %708 = vmatmul.f32.gmra.mxu0 %v567
    %v709 = vpop.f32.mrf.mxu0
    %v710 = vadd.f32 %v690, %v709
    %711 = vdwg.mxu0
    %v712 = vadd.f32 %v432, %v459
    %v713 = vtanh.pop %v712
    %v714 = vmul.f32 %v713, %v154
    %v715 = vsel %vm100, %v714, 0.0
    %716 = vadd.xlane.f32.xlu0 %v715
    %v717 = vpop.xlane.xlu0 %716
    %vm718 = vcmask 130048
    %v719 = vsel %vm718, %v710, -inf
    %720 = vmax.xlane.f32.xlu0 %v719
    %v721 = vpop.xlane.xlu0 %720
    %v722 = vmax.f32 %v721, %v717
    %v723 = vsub.f32 %v717, %v722
    %v724 = vmul.f32 %v723, 1.442695
    %v725 = vpow.pop %v724
    %v726 = vsub.f32 %v710, %v722
    %v727 = vmul.f32 %v726, 1.442695
    %v728 = vpow.pop %v727
    %v729 = vsel %vm718, %v728, 0.0
    %730 = vadd.xlane.f32.xlu0 %v729
    %v731 = vpop.xlane.xlu0 %730
    %v732 = vadd.f32 %v725, %v731
    %v733 = vrcp.pop %v732
    %v734 = vmul.f32 %v732, %v733
    %v735 = vsub.f32 1.0, %v734
    %v736 = vmul.f32 %v733, %v735
    %v737 = vadd.f32 %v733, %v736
    %vm738 = vweird.f32 %v732
    %vm739 = vweird.f32 %v733
    %vm740 = vmor %vm738, %vm739
    %v741 = vsel %vm740, %v733, %v737
    %v742 = vand.u32 2147483647, %v732
    %vm743 = vcmp.eq.f32.partialorder %v742, 8.507059e+37
    %v744 = vand.u32 %v732, 2147483648
    %v745 = vor.u32 1.1754944e-38, %v744
    %v746 = vsel %vm743, %v745, %v741
    %v747 = vmul.f32 1.0, %v746
    %v748 = vld [vmem:[%s21] sm:$0xff]
    %v749 = vld [vmem:[%s21 + $0x8] sm:$0xff]
    %v750 = vld [vmem:[%s21 + $0x10] sm:$0xff]
    %v751 = vld [vmem:[%s21 + $0x18] sm:$0xff]
    %v752 = vld [vmem:[%s21 + $0x20] sm:$0xff]
    %v753 = vld [vmem:[%s21 + $0x28] sm:$0xff]
    %v754 = vld [vmem:[%s21 + $0x30] sm:$0xff]
    %v755 = vld [vmem:[%s21 + $0x38] sm:$0xff]
    %v757 = vsel %vm718, %v728, 0
    %759 = vmatpush.msra.mxu0 0.0
    %760 = vmatpush.msra.mxu0 0.0
    %761 = vmatpush.msra.mxu0 0.0
    %762 = vmatpush.msra.mxu0 0.0
    %763 = vmatpush.msra.mxu0 0.0
    %764 = vmatpush.msra.mxu0 0.0
    %765 = vmatpush.msra.mxu0 0.0
    %766 = vmatpush.msra.mxu0 0.0
    %767 = vmatpush.msra.mxu0 0.0
    %768 = vmatpush.msra.mxu0 0.0
    %769 = vmatpush.msra.mxu0 0.0
    %770 = vmatpush.msra.mxu0 0.0
    %771 = vmatpush.msra.mxu0 0.0
    %772 = vmatpush.msra.mxu0 0.0
    %773 = vmatpush.msra.mxu0 %v752
    %774 = vmatpush.msra.mxu0 %v748
    %775 = vmatmul.f32.gmra.mxu0 %v757
    %v776 = vpop.f32.mrf.mxu0
    %v777 = vadd.f32 0.0, %v776
    %778 = vdwg.mxu0
    %779 = vmatpush.msra.mxu0 0.0
    %780 = vmatpush.msra.mxu0 0.0
    %781 = vmatpush.msra.mxu0 0.0
    %782 = vmatpush.msra.mxu0 0.0
    %783 = vmatpush.msra.mxu0 0.0
    %784 = vmatpush.msra.mxu0 0.0
    %785 = vmatpush.msra.mxu0 0.0
    %786 = vmatpush.msra.mxu0 0.0
    %787 = vmatpush.msra.mxu0 0.0
    %788 = vmatpush.msra.mxu0 0.0
    %789 = vmatpush.msra.mxu0 0.0
    %790 = vmatpush.msra.mxu0 0.0
    %791 = vmatpush.msra.mxu0 0.0
    %792 = vmatpush.msra.mxu0 0.0
    %793 = vmatpush.msra.mxu0 %v753
    %794 = vmatpush.msra.mxu0 %v749
    %795 = vmatmul.f32.gmra.mxu0 %v757
    %v796 = vpop.f32.mrf.mxu0
    %v797 = vadd.f32 0.0, %v796
    %798 = vdwg.mxu0
    %799 = vmatpush.msra.mxu0 0.0
    %800 = vmatpush.msra.mxu0 0.0
    %801 = vmatpush.msra.mxu0 0.0
    %802 = vmatpush.msra.mxu0 0.0
    %803 = vmatpush.msra.mxu0 0.0
    %804 = vmatpush.msra.mxu0 0.0
    %805 = vmatpush.msra.mxu0 0.0
    %806 = vmatpush.msra.mxu0 0.0
    %807 = vmatpush.msra.mxu0 0.0
    %808 = vmatpush.msra.mxu0 0.0
    %809 = vmatpush.msra.mxu0 0.0
    %810 = vmatpush.msra.mxu0 0.0
    %811 = vmatpush.msra.mxu0 0.0
    %812 = vmatpush.msra.mxu0 0.0
    %813 = vmatpush.msra.mxu0 %v754
    %814 = vmatpush.msra.mxu0 %v750
    %815 = vmatmul.f32.gmra.mxu0 %v757
    %v816 = vpop.f32.mrf.mxu0
    %v817 = vadd.f32 0.0, %v816
    %818 = vdwg.mxu0
    %819 = vmatpush.msra.mxu0 0.0
    %820 = vmatpush.msra.mxu0 0.0
    %821 = vmatpush.msra.mxu0 0.0
    %822 = vmatpush.msra.mxu0 0.0
    %823 = vmatpush.msra.mxu0 0.0
    %824 = vmatpush.msra.mxu0 0.0
    %825 = vmatpush.msra.mxu0 0.0
    %826 = vmatpush.msra.mxu0 0.0
    %827 = vmatpush.msra.mxu0 0.0
    %828 = vmatpush.msra.mxu0 0.0
    %829 = vmatpush.msra.mxu0 0.0
    %830 = vmatpush.msra.mxu0 0.0
    %831 = vmatpush.msra.mxu0 0.0
    %832 = vmatpush.msra.mxu0 0.0
    %833 = vmatpush.msra.mxu0 %v755
    %834 = vmatpush.msra.mxu0 %v751
    %835 = vmatmul.f32.gmra.mxu0 %v757
    %v836 = vpop.f32.mrf.mxu0
    %v837 = vadd.f32 0.0, %v836
    %838 = vdwg.mxu0
    %v839 = vmul.f32 %v777, %v144
    %v840 = vmul.f32 %v797, %v145
    %v841 = vmul.f32 %v817, %v146
    %v842 = vmul.f32 %v837, %v147
    %v843 = vld [vmem:[%s22] sm:$0xff]
    %v844 = vld [vmem:[%s22 + $0x8] sm:$0xff]
    %v845 = vld [vmem:[%s22 + $0x10] sm:$0xff]
    %v846 = vld [vmem:[%s22 + $0x18] sm:$0xff]
    %v847 = vld [vmem:[%s22 + $0x20] sm:$0xff]
    %v848 = vld [vmem:[%s22 + $0x28] sm:$0xff]
    %v849 = vld [vmem:[%s22 + $0x30] sm:$0xff]
    %v850 = vld [vmem:[%s22 + $0x38] sm:$0xff]
    %v851 = vld [vmem:[%s22 + $0x40] sm:$0xff]
    %v852 = vld [vmem:[%s22 + $0x48] sm:$0xff]
    %v853 = vld [vmem:[%s22 + $0x50] sm:$0xff]
    %v854 = vld [vmem:[%s22 + $0x58] sm:$0xff]
    %v855 = vld [vmem:[%s22 + $0x60] sm:$0xff]
    %v856 = vld [vmem:[%s22 + $0x68] sm:$0xff]
    %v857 = vld [vmem:[%s22 + $0x70] sm:$0xff]
    %v858 = vld [vmem:[%s22 + $0x78] sm:$0xff]
    %v859 = vld [vmem:[%s22 + $0x80] sm:$0xff]
    %v860 = vld [vmem:[%s22 + $0x88] sm:$0xff]
    %v861 = vld [vmem:[%s22 + $0x90] sm:$0xff]
    %v862 = vld [vmem:[%s22 + $0x98] sm:$0xff]
    %v863 = vld [vmem:[%s22 + $0xa0] sm:$0xff]
    %v864 = vld [vmem:[%s22 + $0xa8] sm:$0xff]
    %v865 = vld [vmem:[%s22 + $0xb0] sm:$0xff]
    %v866 = vld [vmem:[%s22 + $0xb8] sm:$0xff]
    %v867 = vld [vmem:[%s22 + $0xc0] sm:$0xff]
    %v868 = vld [vmem:[%s22 + $0xc8] sm:$0xff]
    %v869 = vld [vmem:[%s22 + $0xd0] sm:$0xff]
    %v870 = vld [vmem:[%s22 + $0xd8] sm:$0xff]
    %v871 = vld [vmem:[%s22 + $0xe0] sm:$0xff]
    %v872 = vld [vmem:[%s22 + $0xe8] sm:$0xff]
    %v873 = vld [vmem:[%s22 + $0xf0] sm:$0xff]
    %v874 = vld [vmem:[%s22 + $0xf8] sm:$0xff]
    %v875 = vld [vmem:[%s22 + $0x100] sm:$0xff]
    %v876 = vld [vmem:[%s22 + $0x108] sm:$0xff]
    %v877 = vld [vmem:[%s22 + $0x110] sm:$0xff]
    %v878 = vld [vmem:[%s22 + $0x118] sm:$0xff]
    %v879 = vld [vmem:[%s22 + $0x120] sm:$0xff]
    %v880 = vld [vmem:[%s22 + $0x128] sm:$0xff]
    %v881 = vld [vmem:[%s22 + $0x130] sm:$0xff]
    %v882 = vld [vmem:[%s22 + $0x138] sm:$0xff]
    %v883 = vld [vmem:[%s22 + $0x140] sm:$0xff]
    %v884 = vld [vmem:[%s22 + $0x148] sm:$0xff]
    %v885 = vld [vmem:[%s22 + $0x150] sm:$0xff]
    %v886 = vld [vmem:[%s22 + $0x158] sm:$0xff]
    %v887 = vld [vmem:[%s22 + $0x160] sm:$0xff]
    %v888 = vld [vmem:[%s22 + $0x168] sm:$0xff]
    %v889 = vld [vmem:[%s22 + $0x170] sm:$0xff]
    %v890 = vld [vmem:[%s22 + $0x178] sm:$0xff]
    %v891 = vld [vmem:[%s22 + $0x180] sm:$0xff]
    %v892 = vld [vmem:[%s22 + $0x188] sm:$0xff]
    %v893 = vld [vmem:[%s22 + $0x190] sm:$0xff]
    %v894 = vld [vmem:[%s22 + $0x198] sm:$0xff]
    %v895 = vld [vmem:[%s22 + $0x1a0] sm:$0xff]
    %v896 = vld [vmem:[%s22 + $0x1a8] sm:$0xff]
    %v897 = vld [vmem:[%s22 + $0x1b0] sm:$0xff]
    %v898 = vld [vmem:[%s22 + $0x1b8] sm:$0xff]
    %v899 = vld [vmem:[%s22 + $0x1c0] sm:$0xff]
    %v900 = vld [vmem:[%s22 + $0x1c8] sm:$0xff]
    %v901 = vld [vmem:[%s22 + $0x1d0] sm:$0xff]
    %v902 = vld [vmem:[%s22 + $0x1d8] sm:$0xff]
    %v903 = vld [vmem:[%s22 + $0x1e0] sm:$0xff]
    %v904 = vld [vmem:[%s22 + $0x1e8] sm:$0xff]
    %v905 = vld [vmem:[%s22 + $0x1f0] sm:$0xff]
    %v906 = vld [vmem:[%s22 + $0x1f8] sm:$0xff]
    %907 = vmatpush.msra.mxu0 %v858
    %908 = vmatpush.msra.mxu0 %v857
    %909 = vmatpush.msra.mxu0 %v856
    %910 = vmatpush.msra.mxu0 %v855
    %911 = vmatpush.msra.mxu0 %v854
    %912 = vmatpush.msra.mxu0 %v853
    %913 = vmatpush.msra.mxu0 %v852
    %914 = vmatpush.msra.mxu0 %v851
    %915 = vmatpush.msra.mxu0 %v850
    %916 = vmatpush.msra.mxu0 %v849
    %917 = vmatpush.msra.mxu0 %v848
    %918 = vmatpush.msra.mxu0 %v847
    %919 = vmatpush.msra.mxu0 %v846
    %920 = vmatpush.msra.mxu0 %v845
    %921 = vmatpush.msra.mxu0 %v844
    %922 = vmatpush.msra.mxu0 %v843
    %923 = vmatmul.f32.gmra.mxu0 %v839
    %v924 = vpop.f32.mrf.mxu0
    %v925 = vadd.f32 0.0, %v924
    %926 = vdwg.mxu0
    %927 = vmatpush.msra.mxu0 %v874
    %928 = vmatpush.msra.mxu0 %v873
    %929 = vmatpush.msra.mxu0 %v872
    %930 = vmatpush.msra.mxu0 %v871
    %931 = vmatpush.msra.mxu0 %v870
    %932 = vmatpush.msra.mxu0 %v869
    %933 = vmatpush.msra.mxu0 %v868
    %934 = vmatpush.msra.mxu0 %v867
    %935 = vmatpush.msra.mxu0 %v866
    %936 = vmatpush.msra.mxu0 %v865
    %937 = vmatpush.msra.mxu0 %v864
    %938 = vmatpush.msra.mxu0 %v863
    %939 = vmatpush.msra.mxu0 %v862
    %940 = vmatpush.msra.mxu0 %v861
    %941 = vmatpush.msra.mxu0 %v860
    %942 = vmatpush.msra.mxu0 %v859
    %943 = vmatmul.f32.gmra.mxu0 %v840
    %v944 = vpop.f32.mrf.mxu0
    %v945 = vadd.f32 %v925, %v944
    %946 = vdwg.mxu0
    %947 = vmatpush.msra.mxu0 %v890
    %948 = vmatpush.msra.mxu0 %v889
    %949 = vmatpush.msra.mxu0 %v888
    %950 = vmatpush.msra.mxu0 %v887
    %951 = vmatpush.msra.mxu0 %v886
    %952 = vmatpush.msra.mxu0 %v885
    %953 = vmatpush.msra.mxu0 %v884
    %954 = vmatpush.msra.mxu0 %v883
    %955 = vmatpush.msra.mxu0 %v882
    %956 = vmatpush.msra.mxu0 %v881
    %957 = vmatpush.msra.mxu0 %v880
    %958 = vmatpush.msra.mxu0 %v879
    %959 = vmatpush.msra.mxu0 %v878
    %960 = vmatpush.msra.mxu0 %v877
    %961 = vmatpush.msra.mxu0 %v876
    %962 = vmatpush.msra.mxu0 %v875
    %963 = vmatmul.f32.gmra.mxu0 %v841
    %v964 = vpop.f32.mrf.mxu0
    %v965 = vadd.f32 %v945, %v964
    %966 = vdwg.mxu0
    %967 = vmatpush.msra.mxu0 %v906
    %968 = vmatpush.msra.mxu0 %v905
    %969 = vmatpush.msra.mxu0 %v904
    %970 = vmatpush.msra.mxu0 %v903
    %971 = vmatpush.msra.mxu0 %v902
    %972 = vmatpush.msra.mxu0 %v901
    %973 = vmatpush.msra.mxu0 %v900
    %974 = vmatpush.msra.mxu0 %v899
    %975 = vmatpush.msra.mxu0 %v898
    %976 = vmatpush.msra.mxu0 %v897
    %977 = vmatpush.msra.mxu0 %v896
    %978 = vmatpush.msra.mxu0 %v895
    %979 = vmatpush.msra.mxu0 %v894
    %980 = vmatpush.msra.mxu0 %v893
    %981 = vmatpush.msra.mxu0 %v892
    %982 = vmatpush.msra.mxu0 %v891
    %983 = vmatmul.f32.gmra.mxu0 %v842
    %v984 = vpop.f32.mrf.mxu0
    %v985 = vadd.f32 %v965, %v984
    %986 = vdwg.mxu0
    %v987 = vmul.f32 %v725, %v376
    %v988 = vadd.f32 %v987, %v985
    %v989 = vmul.f32 %v747, %v988
    %v990 = vadd.f32 %v989, %v406
    %v991 = vld [vmem:[%s23] sm:$0xff]
    %v992 = vld [vmem:[%s23 + $0x8] sm:$0xff]
    %v993 = vld [vmem:[%s23 + $0x10] sm:$0xff]
    %v994 = vld [vmem:[%s23 + $0x18] sm:$0xff]
    %v996 = vsel %vm100, %v990, 0
    %998 = vmatpush.msra.mxu0 0.0
    %999 = vmatpush.msra.mxu0 0.0
    %1000 = vmatpush.msra.mxu0 0.0
    %1001 = vmatpush.msra.mxu0 0.0
    %1002 = vmatpush.msra.mxu0 0.0
    %1003 = vmatpush.msra.mxu0 0.0
    %1004 = vmatpush.msra.mxu0 0.0
    %1005 = vmatpush.msra.mxu0 0.0
    %1006 = vmatpush.msra.mxu0 0.0
    %1007 = vmatpush.msra.mxu0 0.0
    %1008 = vmatpush.msra.mxu0 0.0
    %1009 = vmatpush.msra.mxu0 0.0
    %1010 = vmatpush.msra.mxu0 %v994
    %1011 = vmatpush.msra.mxu0 %v993
    %1012 = vmatpush.msra.mxu0 %v992
    %1013 = vmatpush.msra.mxu0 %v991
    %1014 = vmatmul.f32.gmra.mxu0 %v996
    %v1015 = vpop.f32.mrf.mxu0
    %v1016 = vadd.f32 %v174, %v1015
    %1017 = vdwg.mxu0
    %v1018 = vtanh.pop %v1016
    %1019 = vst.msk [vmem:[#allocation2] sm:$0xff] %vm100, %v1018
    %s1020 = scalar_lea.vmem %s0, 8
    %v1021 = vld [vmem:[%s1020] sm:$0xff]
    %v1022 = vld [vmem:[%s6] sm:$0xff]
    %v1023 = vld [vmem:[%s6 + $0x8] sm:$0xff]
    %v1024 = vld [vmem:[%s6 + $0x10] sm:$0xff]
    %v1025 = vld [vmem:[%s6 + $0x18] sm:$0xff]
    %v1026 = vld [vmem:[%s6 + $0x20] sm:$0xff]
    %v1027 = vld [vmem:[%s6 + $0x28] sm:$0xff]
    %v1028 = vld [vmem:[%s6 + $0x30] sm:$0xff]
    %v1029 = vld [vmem:[%s6 + $0x38] sm:$0xff]
    %v1031 = vsel %vm100, %v1021, 0
    %1033 = vmatpush.msra.mxu0 0.0
    %1034 = vmatpush.msra.mxu0 0.0
    %1035 = vmatpush.msra.mxu0 0.0
    %1036 = vmatpush.msra.mxu0 0.0
    %1037 = vmatpush.msra.mxu0 0.0
    %1038 = vmatpush.msra.mxu0 0.0
    %1039 = vmatpush.msra.mxu0 0.0
    %1040 = vmatpush.msra.mxu0 0.0
    %1041 = vmatpush.msra.mxu0 0.0
    %1042 = vmatpush.msra.mxu0 0.0
    %1043 = vmatpush.msra.mxu0 0.0
    %1044 = vmatpush.msra.mxu0 0.0
    %1045 = vmatpush.msra.mxu0 %v1028
    %1046 = vmatpush.msra.mxu0 %v1026
    %1047 = vmatpush.msra.mxu0 %v1024
    %1048 = vmatpush.msra.mxu0 %v1022
    %1049 = vmatmul.f32.gmra.mxu0 %v1031
    %v1050 = vpop.f32.mrf.mxu0
    %v1051 = vadd.f32 0.0, %v1050
    %1052 = vdwg.mxu0
    %1053 = vmatpush.msra.mxu0 0.0
    %1054 = vmatpush.msra.mxu0 0.0
    %1055 = vmatpush.msra.mxu0 0.0
    %1056 = vmatpush.msra.mxu0 0.0
    %1057 = vmatpush.msra.mxu0 0.0
    %1058 = vmatpush.msra.mxu0 0.0
    %1059 = vmatpush.msra.mxu0 0.0
    %1060 = vmatpush.msra.mxu0 0.0
    %1061 = vmatpush.msra.mxu0 0.0
    %1062 = vmatpush.msra.mxu0 0.0
    %1063 = vmatpush.msra.mxu0 0.0
    %1064 = vmatpush.msra.mxu0 0.0
    %1065 = vmatpush.msra.mxu0 %v1029
    %1066 = vmatpush.msra.mxu0 %v1027
    %1067 = vmatpush.msra.mxu0 %v1025
    %1068 = vmatpush.msra.mxu0 %v1023
    %1069 = vmatmul.f32.gmra.mxu0 %v1031
    %v1070 = vpop.f32.mrf.mxu0
    %v1071 = vadd.f32 0.0, %v1070
    %1072 = vdwg.mxu0
    %v1073 = vadd.f32 %v122, %v1051
    %v1074 = vadd.f32 %v142, %v1071
    %v1075 = vld [vmem:[%s7] sm:$0xff]
    %v1076 = vld [vmem:[%s7 + $0x8] sm:$0xff]
    %v1077 = vld [vmem:[%s7 + $0x10] sm:$0xff]
    %v1078 = vld [vmem:[%s7 + $0x18] sm:$0xff]
    %v1079 = vld [vmem:[%s7 + $0x20] sm:$0xff]
    %v1080 = vld [vmem:[%s7 + $0x28] sm:$0xff]
    %v1081 = vld [vmem:[%s7 + $0x30] sm:$0xff]
    %v1082 = vld [vmem:[%s7 + $0x38] sm:$0xff]
    %1083 = vmatpush.msra.mxu0 0.0
    %1084 = vmatpush.msra.mxu0 0.0
    %1085 = vmatpush.msra.mxu0 0.0
    %1086 = vmatpush.msra.mxu0 0.0
    %1087 = vmatpush.msra.mxu0 0.0
    %1088 = vmatpush.msra.mxu0 0.0
    %1089 = vmatpush.msra.mxu0 0.0
    %1090 = vmatpush.msra.mxu0 0.0
    %1091 = vmatpush.msra.mxu0 0.0
    %1092 = vmatpush.msra.mxu0 0.0
    %1093 = vmatpush.msra.mxu0 0.0
    %1094 = vmatpush.msra.mxu0 0.0
    %1095 = vmatpush.msra.mxu0 %v1081
    %1096 = vmatpush.msra.mxu0 %v1079
    %1097 = vmatpush.msra.mxu0 %v1077
    %1098 = vmatpush.msra.mxu0 %v1075
    %1099 = vmatmul.f32.gmra.mxu0 %v384
    %v1100 = vpop.f32.mrf.mxu0
    %v1101 = vadd.f32 0.0, %v1100
    %1102 = vdwg.mxu0
    %1103 = vmatpush.msra.mxu0 0.0
    %1104 = vmatpush.msra.mxu0 0.0
    %1105 = vmatpush.msra.mxu0 0.0
    %1106 = vmatpush.msra.mxu0 0.0
    %1107 = vmatpush.msra.mxu0 0.0
    %1108 = vmatpush.msra.mxu0 0.0
    %1109 = vmatpush.msra.mxu0 0.0
    %1110 = vmatpush.msra.mxu0 0.0
    %1111 = vmatpush.msra.mxu0 0.0
    %1112 = vmatpush.msra.mxu0 0.0
    %1113 = vmatpush.msra.mxu0 0.0
    %1114 = vmatpush.msra.mxu0 0.0
    %1115 = vmatpush.msra.mxu0 %v1082
    %1116 = vmatpush.msra.mxu0 %v1080
    %1117 = vmatpush.msra.mxu0 %v1078
    %1118 = vmatpush.msra.mxu0 %v1076
    %1119 = vmatmul.f32.gmra.mxu0 %v384
    %v1120 = vpop.f32.mrf.mxu0
    %v1121 = vadd.f32 0.0, %v1120
    %1122 = vdwg.mxu0
    %v1123 = vadd.f32 %v1073, %v1101
    %v1124 = vadd.f32 %v1074, %v1121
    %v1125 = vxor.u32 %v1123, 2147483648
    %v1126 = vmul.f32 %v1125, 1.442695
    %v1127 = vpow.pop %v1126
    %v1128 = vadd.f32 %v1127, 1.0
    %v1129 = vrcp.pop %v1128
    %v1130 = vmul.f32 %v1128, %v1129
    %v1131 = vsub.f32 1.0, %v1130
    %v1132 = vmul.f32 %v1129, %v1131
    %v1133 = vadd.f32 %v1129, %v1132
    %vm1134 = vweird.f32 %v1128
    %vm1135 = vweird.f32 %v1129
    %vm1136 = vmor %vm1134, %vm1135
    %v1137 = vsel %vm1136, %v1129, %v1133
    %v1138 = vand.u32 2147483647, %v1128
    %vm1139 = vcmp.eq.f32.partialorder %v1138, 8.507059e+37
    %v1140 = vand.u32 %v1128, 2147483648
    %v1141 = vor.u32 1.1754944e-38, %v1140
    %v1142 = vsel %vm1139, %v1141, %v1137
    %v1143 = vmul.f32 1.0, %v1142
    %v1144 = vtanh.pop %v1123
    %v1145 = vmul.f32 %v1143, %v319
    %1147 = vrot.lane.b32.xlu0 %v1144, 32
    %v1148 = vpop.permute.xlu0 %1147
    %v1150 = vmul.f32 %v1143, %v1148
    %1152 = vrot.lane.b32.xlu0 %v1150, 32
    %v1153 = vpop.permute.xlu0 %1152
    %v1155 = vadd.f32 %v1145, %v1153
    %v1156 = vtanh.pop %v1155
    %1158 = vrot.lane.b32.xlu0 %v1156, 32
    %v1159 = vpop.permute.xlu0 %1158
    %v1161 = vmul.f32 %v1143, %v1159
    %v1162 = vxor.u32 %v1124, 2147483648
    %v1163 = vmul.f32 %v1162, 1.442695
    %v1164 = vpow.pop %v1163
    %v1165 = vadd.f32 %v1164, 1.0
    %v1166 = vrcp.pop %v1165
    %v1167 = vmul.f32 %v1165, %v1166
    %v1168 = vsub.f32 1.0, %v1167
    %v1169 = vmul.f32 %v1166, %v1168
    %v1170 = vadd.f32 %v1166, %v1169
    %vm1171 = vweird.f32 %v1165
    %vm1172 = vweird.f32 %v1166
    %vm1173 = vmor %vm1171, %vm1172
    %v1174 = vsel %vm1173, %v1166, %v1170
    %v1175 = vand.u32 2147483647, %v1165
    %vm1176 = vcmp.eq.f32.partialorder %v1175, 8.507059e+37
    %v1177 = vand.u32 %v1165, 2147483648
    %v1178 = vor.u32 1.1754944e-38, %v1177
    %v1179 = vsel %vm1176, %v1178, %v1174
    %v1180 = vmul.f32 1.0, %v1179
    %1181 = vrot.lane.b32.xlu0 %v1156, 96
    %v1182 = vpop.permute.xlu0 %1181
    %v1184 = vmul.f32 %v1180, %v1182
    %v1185 = vld [vmem:[%s10] sm:$0xff]
    %v1186 = vld [vmem:[%s10 + $0x8] sm:$0xff]
    %v1187 = vld [vmem:[%s10 + $0x10] sm:$0xff]
    %v1188 = vld [vmem:[%s10 + $0x18] sm:$0xff]
    %v1190 = vsel %vm100, %v1184, 0
    %1192 = vmatpush.msra.mxu0 0.0
    %1193 = vmatpush.msra.mxu0 0.0
    %1194 = vmatpush.msra.mxu0 0.0
    %1195 = vmatpush.msra.mxu0 0.0
    %1196 = vmatpush.msra.mxu0 0.0
    %1197 = vmatpush.msra.mxu0 0.0
    %1198 = vmatpush.msra.mxu0 0.0
    %1199 = vmatpush.msra.mxu0 0.0
    %1200 = vmatpush.msra.mxu0 0.0
    %1201 = vmatpush.msra.mxu0 0.0
    %1202 = vmatpush.msra.mxu0 0.0
    %1203 = vmatpush.msra.mxu0 0.0
    %1204 = vmatpush.msra.mxu0 %v1188
    %1205 = vmatpush.msra.mxu0 %v1187
    %1206 = vmatpush.msra.mxu0 %v1186
    %1207 = vmatpush.msra.mxu0 %v1185
    %1208 = vmatmul.f32.gmra.mxu0 %v1190
    %v1209 = vpop.f32.mrf.mxu0
    %v1210 = vadd.f32 %v158, %v1209
    %1211 = vdwg.mxu0
    %v1212 = vmax.f32 %v1210, 0.0
    %v1213 = vld [vmem:[%s12] sm:$0xff]
    %v1214 = vld [vmem:[%s12 + $0x8] sm:$0xff]
    %v1215 = vld [vmem:[%s12 + $0x10] sm:$0xff]
    %v1216 = vld [vmem:[%s12 + $0x18] sm:$0xff]
    %1218 = vrot.lane.b32.xlu0 %v1161, 64
    %v1219 = vpop.permute.xlu0 %1218
    %v1220 = vsel %vm100, %v1219, 0
    %1222 = vmatpush.msra.mxu0 0.0
    %1223 = vmatpush.msra.mxu0 0.0
    %1224 = vmatpush.msra.mxu0 0.0
    %1225 = vmatpush.msra.mxu0 0.0
    %1226 = vmatpush.msra.mxu0 0.0
    %1227 = vmatpush.msra.mxu0 0.0
    %1228 = vmatpush.msra.mxu0 0.0
    %1229 = vmatpush.msra.mxu0 0.0
    %1230 = vmatpush.msra.mxu0 0.0
    %1231 = vmatpush.msra.mxu0 0.0
    %1232 = vmatpush.msra.mxu0 0.0
    %1233 = vmatpush.msra.mxu0 0.0
    %1234 = vmatpush.msra.mxu0 %v1216
    %1235 = vmatpush.msra.mxu0 %v1215
    %1236 = vmatpush.msra.mxu0 %v1214
    %1237 = vmatpush.msra.mxu0 %v1213
    %1238 = vmatmul.f32.gmra.mxu0 %v1220
    %v1239 = vpop.f32.mrf.mxu0
    %v1240 = vadd.f32 %v162, %v1239
    %1241 = vdwg.mxu0
    %v1242 = vtanh.pop %v1240
    %v1243 = vld [vmem:[%s14] sm:$0xff]
    %v1244 = vld [vmem:[%s14 + $0x8] sm:$0xff]
    %v1245 = vld [vmem:[%s14 + $0x10] sm:$0xff]
    %v1246 = vld [vmem:[%s14 + $0x18] sm:$0xff]
    %v1248 = vsel %vm100, %v1212, 0
    %1250 = vmatpush.msra.mxu0 0.0
    %1251 = vmatpush.msra.mxu0 0.0
    %1252 = vmatpush.msra.mxu0 0.0
    %1253 = vmatpush.msra.mxu0 0.0
    %1254 = vmatpush.msra.mxu0 0.0
    %1255 = vmatpush.msra.mxu0 0.0
    %1256 = vmatpush.msra.mxu0 0.0
    %1257 = vmatpush.msra.mxu0 0.0
    %1258 = vmatpush.msra.mxu0 0.0
    %1259 = vmatpush.msra.mxu0 0.0
    %1260 = vmatpush.msra.mxu0 0.0
    %1261 = vmatpush.msra.mxu0 0.0
    %1262 = vmatpush.msra.mxu0 %v1246
    %1263 = vmatpush.msra.mxu0 %v1245
    %1264 = vmatpush.msra.mxu0 %v1244
    %1265 = vmatpush.msra.mxu0 %v1243
    %1266 = vmatmul.f32.gmra.mxu0 %v1248
    %v1267 = vpop.f32.mrf.mxu0
    %v1268 = vadd.f32 %v166, %v1267
    %1269 = vdwg.mxu0
    %v1270 = vld [vmem:[%s16] sm:$0xff]
    %v1271 = vld [vmem:[%s16 + $0x8] sm:$0xff]
    %v1272 = vld [vmem:[%s16 + $0x10] sm:$0xff]
    %v1273 = vld [vmem:[%s16 + $0x18] sm:$0xff]
    %v1275 = vsel %vm100, %v1242, 0
    %1277 = vmatpush.msra.mxu0 0.0
    %1278 = vmatpush.msra.mxu0 0.0
    %1279 = vmatpush.msra.mxu0 0.0
    %1280 = vmatpush.msra.mxu0 0.0
    %1281 = vmatpush.msra.mxu0 0.0
    %1282 = vmatpush.msra.mxu0 0.0
    %1283 = vmatpush.msra.mxu0 0.0
    %1284 = vmatpush.msra.mxu0 0.0
    %1285 = vmatpush.msra.mxu0 0.0
    %1286 = vmatpush.msra.mxu0 0.0
    %1287 = vmatpush.msra.mxu0 0.0
    %1288 = vmatpush.msra.mxu0 0.0
    %1289 = vmatpush.msra.mxu0 %v1273
    %1290 = vmatpush.msra.mxu0 %v1272
    %1291 = vmatpush.msra.mxu0 %v1271
    %1292 = vmatpush.msra.mxu0 %v1270
    %1293 = vmatmul.f32.gmra.mxu0 %v1275
    %v1294 = vpop.f32.mrf.mxu0
    %v1295 = vadd.f32 %v170, %v1294
    %1296 = vdwg.mxu0
    %v1297 = vld [vmem:[%s20] sm:$0xff]
    %v1298 = vld [vmem:[%s20 + $0x8] sm:$0xff]
    %v1299 = vld [vmem:[%s20 + $0x10] sm:$0xff]
    %v1300 = vld [vmem:[%s20 + $0x18] sm:$0xff]
    %v1301 = vld [vmem:[%s20 + $0x20] sm:$0xff]
    %v1302 = vld [vmem:[%s20 + $0x28] sm:$0xff]
    %v1303 = vld [vmem:[%s20 + $0x30] sm:$0xff]
    %v1304 = vld [vmem:[%s20 + $0x38] sm:$0xff]
    %v1305 = vld [vmem:[%s20 + $0x40] sm:$0xff]
    %v1306 = vld [vmem:[%s20 + $0x48] sm:$0xff]
    %v1307 = vld [vmem:[%s20 + $0x50] sm:$0xff]
    %v1308 = vld [vmem:[%s20 + $0x58] sm:$0xff]
    %v1309 = vld [vmem:[%s20 + $0x60] sm:$0xff]
    %v1310 = vld [vmem:[%s20 + $0x68] sm:$0xff]
    %v1311 = vld [vmem:[%s20 + $0x70] sm:$0xff]
    %v1312 = vld [vmem:[%s20 + $0x78] sm:$0xff]
    %v1314 = vsel %vm100, %v1295, 0
    %1316 = vmatpush.msra.mxu0 0.0
    %1317 = vmatpush.msra.mxu0 0.0
    %1318 = vmatpush.msra.mxu0 0.0
    %1319 = vmatpush.msra.mxu0 0.0
    %1320 = vmatpush.msra.mxu0 0.0
    %1321 = vmatpush.msra.mxu0 0.0
    %1322 = vmatpush.msra.mxu0 0.0
    %1323 = vmatpush.msra.mxu0 0.0
    %1324 = vmatpush.msra.mxu0 0.0
    %1325 = vmatpush.msra.mxu0 0.0
    %1326 = vmatpush.msra.mxu0 0.0
    %1327 = vmatpush.msra.mxu0 0.0
    %1328 = vmatpush.msra.mxu0 %v1309
    %1329 = vmatpush.msra.mxu0 %v1305
    %1330 = vmatpush.msra.mxu0 %v1301
    %1331 = vmatpush.msra.mxu0 %v1297
    %1332 = vmatmul.f32.gmra.mxu0 %v1314
    %v1333 = vpop.f32.mrf.mxu0
    %v1334 = vadd.f32 0.0, %v1333
    %1335 = vdwg.mxu0
    %1336 = vmatpush.msra.mxu0 0.0
    %1337 = vmatpush.msra.mxu0 0.0
    %1338 = vmatpush.msra.mxu0 0.0
    %1339 = vmatpush.msra.mxu0 0.0
    %1340 = vmatpush.msra.mxu0 0.0
    %1341 = vmatpush.msra.mxu0 0.0
    %1342 = vmatpush.msra.mxu0 0.0
    %1343 = vmatpush.msra.mxu0 0.0
    %1344 = vmatpush.msra.mxu0 0.0
    %1345 = vmatpush.msra.mxu0 0.0
    %1346 = vmatpush.msra.mxu0 0.0
    %1347 = vmatpush.msra.mxu0 0.0
    %1348 = vmatpush.msra.mxu0 %v1310
    %1349 = vmatpush.msra.mxu0 %v1306
    %1350 = vmatpush.msra.mxu0 %v1302
    %1351 = vmatpush.msra.mxu0 %v1298
    %1352 = vmatmul.f32.gmra.mxu0 %v1314
    %v1353 = vpop.f32.mrf.mxu0
    %v1354 = vadd.f32 0.0, %v1353
    %1355 = vdwg.mxu0
    %1356 = vmatpush.msra.mxu0 0.0
    %1357 = vmatpush.msra.mxu0 0.0
    %1358 = vmatpush.msra.mxu0 0.0
    %1359 = vmatpush.msra.mxu0 0.0
    %1360 = vmatpush.msra.mxu0 0.0
    %1361 = vmatpush.msra.mxu0 0.0
    %1362 = vmatpush.msra.mxu0 0.0
    %1363 = vmatpush.msra.mxu0 0.0
    %1364 = vmatpush.msra.mxu0 0.0
    %1365 = vmatpush.msra.mxu0 0.0
    %1366 = vmatpush.msra.mxu0 0.0
    %1367 = vmatpush.msra.mxu0 0.0
    %1368 = vmatpush.msra.mxu0 %v1311
    %1369 = vmatpush.msra.mxu0 %v1307
    %1370 = vmatpush.msra.mxu0 %v1303
    %1371 = vmatpush.msra.mxu0 %v1299
    %1372 = vmatmul.f32.gmra.mxu0 %v1314
    %v1373 = vpop.f32.mrf.mxu0
    %v1374 = vadd.f32 0.0, %v1373
    %1375 = vdwg.mxu0
    %1376 = vmatpush.msra.mxu0 0.0
    %1377 = vmatpush.msra.mxu0 0.0
    %1378 = vmatpush.msra.mxu0 0.0
    %1379 = vmatpush.msra.mxu0 0.0
    %1380 = vmatpush.msra.mxu0 0.0
    %1381 = vmatpush.msra.mxu0 0.0
    %1382 = vmatpush.msra.mxu0 0.0
    %1383 = vmatpush.msra.mxu0 0.0
    %1384 = vmatpush.msra.mxu0 0.0
    %1385 = vmatpush.msra.mxu0 0.0
    %1386 = vmatpush.msra.mxu0 0.0
    %1387 = vmatpush.msra.mxu0 0.0
    %1388 = vmatpush.msra.mxu0 %v1312
    %1389 = vmatpush.msra.mxu0 %v1308
    %1390 = vmatpush.msra.mxu0 %v1304
    %1391 = vmatpush.msra.mxu0 %v1300
    %1392 = vmatmul.f32.gmra.mxu0 %v1314
    %v1393 = vpop.f32.mrf.mxu0
    %v1394 = vadd.f32 0.0, %v1393
    %1395 = vdwg.mxu0
    %v1396 = vadd.f32 %v148, %v1334
    %v1397 = vadd.f32 %v149, %v1354
    %v1398 = vadd.f32 %v150, %v1374
    %v1399 = vadd.f32 %v151, %v1394
    %v1400 = vtanh.pop %v1396
    %v1401 = vtanh.pop %v1397
    %v1402 = vtanh.pop %v1398
    %v1403 = vtanh.pop %v1399
    %v1404 = vld [vmem:[%s19] sm:$0xff]
    %v1405 = vld [vmem:[%s19 + $0x8] sm:$0xff]
    %v1406 = vld [vmem:[%s19 + $0x10] sm:$0xff]
    %v1407 = vld [vmem:[%s19 + $0x18] sm:$0xff]
    %v1408 = vld [vmem:[%s19 + $0x20] sm:$0xff]
    %v1409 = vld [vmem:[%s19 + $0x28] sm:$0xff]
    %v1410 = vld [vmem:[%s19 + $0x30] sm:$0xff]
    %v1411 = vld [vmem:[%s19 + $0x38] sm:$0xff]
    %v1412 = vld [vmem:[%s19 + $0x40] sm:$0xff]
    %v1413 = vld [vmem:[%s19 + $0x48] sm:$0xff]
    %v1414 = vld [vmem:[%s19 + $0x50] sm:$0xff]
    %v1415 = vld [vmem:[%s19 + $0x58] sm:$0xff]
    %v1416 = vld [vmem:[%s19 + $0x60] sm:$0xff]
    %v1417 = vld [vmem:[%s19 + $0x68] sm:$0xff]
    %v1418 = vld [vmem:[%s19 + $0x70] sm:$0xff]
    %v1419 = vld [vmem:[%s19 + $0x78] sm:$0xff]
    %v1420 = vld [vmem:[%s19 + $0x80] sm:$0xff]
    %v1421 = vld [vmem:[%s19 + $0x88] sm:$0xff]
    %v1422 = vld [vmem:[%s19 + $0x90] sm:$0xff]
    %v1423 = vld [vmem:[%s19 + $0x98] sm:$0xff]
    %v1424 = vld [vmem:[%s19 + $0xa0] sm:$0xff]
    %v1425 = vld [vmem:[%s19 + $0xa8] sm:$0xff]
    %v1426 = vld [vmem:[%s19 + $0xb0] sm:$0xff]
    %v1427 = vld [vmem:[%s19 + $0xb8] sm:$0xff]
    %v1428 = vld [vmem:[%s19 + $0xc0] sm:$0xff]
    %v1429 = vld [vmem:[%s19 + $0xc8] sm:$0xff]
    %v1430 = vld [vmem:[%s19 + $0xd0] sm:$0xff]
    %v1431 = vld [vmem:[%s19 + $0xd8] sm:$0xff]
    %v1432 = vld [vmem:[%s19 + $0xe0] sm:$0xff]
    %v1433 = vld [vmem:[%s19 + $0xe8] sm:$0xff]
    %v1434 = vld [vmem:[%s19 + $0xf0] sm:$0xff]
    %v1435 = vld [vmem:[%s19 + $0xf8] sm:$0xff]
    %v1436 = vld [vmem:[%s19 + $0x100] sm:$0xff]
    %v1437 = vld [vmem:[%s19 + $0x108] sm:$0xff]
    %v1438 = vld [vmem:[%s19 + $0x110] sm:$0xff]
    %v1439 = vld [vmem:[%s19 + $0x118] sm:$0xff]
    %v1440 = vld [vmem:[%s19 + $0x120] sm:$0xff]
    %v1441 = vld [vmem:[%s19 + $0x128] sm:$0xff]
    %v1442 = vld [vmem:[%s19 + $0x130] sm:$0xff]
    %v1443 = vld [vmem:[%s19 + $0x138] sm:$0xff]
    %v1444 = vld [vmem:[%s19 + $0x140] sm:$0xff]
    %v1445 = vld [vmem:[%s19 + $0x148] sm:$0xff]
    %v1446 = vld [vmem:[%s19 + $0x150] sm:$0xff]
    %v1447 = vld [vmem:[%s19 + $0x158] sm:$0xff]
    %v1448 = vld [vmem:[%s19 + $0x160] sm:$0xff]
    %v1449 = vld [vmem:[%s19 + $0x168] sm:$0xff]
    %v1450 = vld [vmem:[%s19 + $0x170] sm:$0xff]
    %v1451 = vld [vmem:[%s19 + $0x178] sm:$0xff]
    %v1452 = vld [vmem:[%s19 + $0x180] sm:$0xff]
    %v1453 = vld [vmem:[%s19 + $0x188] sm:$0xff]
    %v1454 = vld [vmem:[%s19 + $0x190] sm:$0xff]
    %v1455 = vld [vmem:[%s19 + $0x198] sm:$0xff]
    %v1456 = vld [vmem:[%s19 + $0x1a0] sm:$0xff]
    %v1457 = vld [vmem:[%s19 + $0x1a8] sm:$0xff]
    %v1458 = vld [vmem:[%s19 + $0x1b0] sm:$0xff]
    %v1459 = vld [vmem:[%s19 + $0x1b8] sm:$0xff]
    %v1460 = vld [vmem:[%s19 + $0x1c0] sm:$0xff]
    %v1461 = vld [vmem:[%s19 + $0x1c8] sm:$0xff]
    %v1462 = vld [vmem:[%s19 + $0x1d0] sm:$0xff]
    %v1463 = vld [vmem:[%s19 + $0x1d8] sm:$0xff]
    %v1464 = vld [vmem:[%s19 + $0x1e0] sm:$0xff]
    %v1465 = vld [vmem:[%s19 + $0x1e8] sm:$0xff]
    %v1466 = vld [vmem:[%s19 + $0x1f0] sm:$0xff]
    %v1467 = vld [vmem:[%s19 + $0x1f8] sm:$0xff]
    %1468 = vmatpush.msra.mxu0 %v1419
    %1469 = vmatpush.msra.mxu0 %v1418
    %1470 = vmatpush.msra.mxu0 %v1417
    %1471 = vmatpush.msra.mxu0 %v1416
    %1472 = vmatpush.msra.mxu0 %v1415
    %1473 = vmatpush.msra.mxu0 %v1414
    %1474 = vmatpush.msra.mxu0 %v1413
    %1475 = vmatpush.msra.mxu0 %v1412
    %1476 = vmatpush.msra.mxu0 %v1411
    %1477 = vmatpush.msra.mxu0 %v1410
    %1478 = vmatpush.msra.mxu0 %v1409
    %1479 = vmatpush.msra.mxu0 %v1408
    %1480 = vmatpush.msra.mxu0 %v1407
    %1481 = vmatpush.msra.mxu0 %v1406
    %1482 = vmatpush.msra.mxu0 %v1405
    %1483 = vmatpush.msra.mxu0 %v1404
    %1484 = vmatmul.f32.gmra.mxu0 %v1400
    %v1485 = vpop.f32.mrf.mxu0
    %v1486 = vadd.f32 0.0, %v1485
    %1487 = vdwg.mxu0
    %1488 = vmatpush.msra.mxu0 %v1435
    %1489 = vmatpush.msra.mxu0 %v1434
    %1490 = vmatpush.msra.mxu0 %v1433
    %1491 = vmatpush.msra.mxu0 %v1432
    %1492 = vmatpush.msra.mxu0 %v1431
    %1493 = vmatpush.msra.mxu0 %v1430
    %1494 = vmatpush.msra.mxu0 %v1429
    %1495 = vmatpush.msra.mxu0 %v1428
    %1496 = vmatpush.msra.mxu0 %v1427
    %1497 = vmatpush.msra.mxu0 %v1426
    %1498 = vmatpush.msra.mxu0 %v1425
    %1499 = vmatpush.msra.mxu0 %v1424
    %1500 = vmatpush.msra.mxu0 %v1423
    %1501 = vmatpush.msra.mxu0 %v1422
    %1502 = vmatpush.msra.mxu0 %v1421
    %1503 = vmatpush.msra.mxu0 %v1420
    %1504 = vmatmul.f32.gmra.mxu0 %v1401
    %v1505 = vpop.f32.mrf.mxu0
    %v1506 = vadd.f32 %v1486, %v1505
    %1507 = vdwg.mxu0
    %1508 = vmatpush.msra.mxu0 %v1451
    %1509 = vmatpush.msra.mxu0 %v1450
    %1510 = vmatpush.msra.mxu0 %v1449
    %1511 = vmatpush.msra.mxu0 %v1448
    %1512 = vmatpush.msra.mxu0 %v1447
    %1513 = vmatpush.msra.mxu0 %v1446
    %1514 = vmatpush.msra.mxu0 %v1445
    %1515 = vmatpush.msra.mxu0 %v1444
    %1516 = vmatpush.msra.mxu0 %v1443
    %1517 = vmatpush.msra.mxu0 %v1442
    %1518 = vmatpush.msra.mxu0 %v1441
    %1519 = vmatpush.msra.mxu0 %v1440
    %1520 = vmatpush.msra.mxu0 %v1439
    %1521 = vmatpush.msra.mxu0 %v1438
    %1522 = vmatpush.msra.mxu0 %v1437
    %1523 = vmatpush.msra.mxu0 %v1436
    %1524 = vmatmul.f32.gmra.mxu0 %v1402
    %v1525 = vpop.f32.mrf.mxu0
    %v1526 = vadd.f32 %v1506, %v1525
    %1527 = vdwg.mxu0
    %1528 = vmatpush.msra.mxu0 %v1467
    %1529 = vmatpush.msra.mxu0 %v1466
    %1530 = vmatpush.msra.mxu0 %v1465
    %1531 = vmatpush.msra.mxu0 %v1464
    %1532 = vmatpush.msra.mxu0 %v1463
    %1533 = vmatpush.msra.mxu0 %v1462
    %1534 = vmatpush.msra.mxu0 %v1461
    %1535 = vmatpush.msra.mxu0 %v1460
    %1536 = vmatpush.msra.mxu0 %v1459
    %1537 = vmatpush.msra.mxu0 %v1458
    %1538 = vmatpush.msra.mxu0 %v1457
    %1539 = vmatpush.msra.mxu0 %v1456
    %1540 = vmatpush.msra.mxu0 %v1455
    %1541 = vmatpush.msra.mxu0 %v1454
    %1542 = vmatpush.msra.mxu0 %v1453
    %1543 = vmatpush.msra.mxu0 %v1452
    %1544 = vmatmul.f32.gmra.mxu0 %v1403
    %v1545 = vpop.f32.mrf.mxu0
    %v1546 = vadd.f32 %v1526, %v1545
    %1547 = vdwg.mxu0
    %v1548 = vadd.f32 %v1268, %v1295
    %v1549 = vtanh.pop %v1548
    %v1550 = vmul.f32 %v1549, %v154
    %v1551 = vsel %vm100, %v1550, 0.0
    %1552 = vadd.xlane.f32.xlu0 %v1551
    %v1553 = vpop.xlane.xlu0 %1552
    %v1554 = vsel %vm718, %v1546, -inf
    %1555 = vmax.xlane.f32.xlu0 %v1554
    %v1556 = vpop.xlane.xlu0 %1555
    %v1557 = vmax.f32 %v1556, %v1553
    %v1558 = vsub.f32 %v1553, %v1557
    %v1559 = vmul.f32 %v1558, 1.442695
    %v1560 = vpow.pop %v1559
    %v1561 = vsub.f32 %v1546, %v1557
    %v1562 = vmul.f32 %v1561, 1.442695
    %v1563 = vpow.pop %v1562
    %v1564 = vsel %vm718, %v1563, 0.0
    %1565 = vadd.xlane.f32.xlu0 %v1564
    %v1566 = vpop.xlane.xlu0 %1565
    %v1567 = vadd.f32 %v1560, %v1566
    %v1568 = vrcp.pop %v1567
    %v1569 = vmul.f32 %v1567, %v1568
    %v1570 = vsub.f32 1.0, %v1569
    %v1571 = vmul.f32 %v1568, %v1570
    %v1572 = vadd.f32 %v1568, %v1571
    %vm1573 = vweird.f32 %v1567
    %vm1574 = vweird.f32 %v1568
    %vm1575 = vmor %vm1573, %vm1574
    %v1576 = vsel %vm1575, %v1568, %v1572
    %v1577 = vand.u32 2147483647, %v1567
    %vm1578 = vcmp.eq.f32.partialorder %v1577, 8.507059e+37
    %v1579 = vand.u32 %v1567, 2147483648
    %v1580 = vor.u32 1.1754944e-38, %v1579
    %v1581 = vsel %vm1578, %v1580, %v1576
    %v1582 = vmul.f32 1.0, %v1581
    %v1583 = vld [vmem:[%s21] sm:$0xff]
    %v1584 = vld [vmem:[%s21 + $0x8] sm:$0xff]
    %v1585 = vld [vmem:[%s21 + $0x10] sm:$0xff]
    %v1586 = vld [vmem:[%s21 + $0x18] sm:$0xff]
    %v1587 = vld [vmem:[%s21 + $0x20] sm:$0xff]
    %v1588 = vld [vmem:[%s21 + $0x28] sm:$0xff]
    %v1589 = vld [vmem:[%s21 + $0x30] sm:$0xff]
    %v1590 = vld [vmem:[%s21 + $0x38] sm:$0xff]
    %v1592 = vsel %vm718, %v1563, 0
    %1594 = vmatpush.msra.mxu0 0.0
    %1595 = vmatpush.msra.mxu0 0.0
    %1596 = vmatpush.msra.mxu0 0.0
    %1597 = vmatpush.msra.mxu0 0.0
    %1598 = vmatpush.msra.mxu0 0.0
    %1599 = vmatpush.msra.mxu0 0.0
    %1600 = vmatpush.msra.mxu0 0.0
    %1601 = vmatpush.msra.mxu0 0.0
    %1602 = vmatpush.msra.mxu0 0.0
    %1603 = vmatpush.msra.mxu0 0.0
    %1604 = vmatpush.msra.mxu0 0.0
    %1605 = vmatpush.msra.mxu0 0.0
    %1606 = vmatpush.msra.mxu0 0.0
    %1607 = vmatpush.msra.mxu0 0.0
    %1608 = vmatpush.msra.mxu0 %v1587
    %1609 = vmatpush.msra.mxu0 %v1583
    %1610 = vmatmul.f32.gmra.mxu0 %v1592
    %v1611 = vpop.f32.mrf.mxu0
    %v1612 = vadd.f32 0.0, %v1611
    %1613 = vdwg.mxu0
    %1614 = vmatpush.msra.mxu0 0.0
    %1615 = vmatpush.msra.mxu0 0.0
    %1616 = vmatpush.msra.mxu0 0.0
    %1617 = vmatpush.msra.mxu0 0.0
    %1618 = vmatpush.msra.mxu0 0.0
    %1619 = vmatpush.msra.mxu0 0.0
    %1620 = vmatpush.msra.mxu0 0.0
    %1621 = vmatpush.msra.mxu0 0.0
    %1622 = vmatpush.msra.mxu0 0.0
    %1623 = vmatpush.msra.mxu0 0.0
    %1624 = vmatpush.msra.mxu0 0.0
    %1625 = vmatpush.msra.mxu0 0.0
    %1626 = vmatpush.msra.mxu0 0.0
    %1627 = vmatpush.msra.mxu0 0.0
    %1628 = vmatpush.msra.mxu0 %v1588
    %1629 = vmatpush.msra.mxu0 %v1584
    %1630 = vmatmul.f32.gmra.mxu0 %v1592
    %v1631 = vpop.f32.mrf.mxu0
    %v1632 = vadd.f32 0.0, %v1631
    %1633 = vdwg.mxu0
    %1634 = vmatpush.msra.mxu0 0.0
    %1635 = vmatpush.msra.mxu0 0.0
    %1636 = vmatpush.msra.mxu0 0.0
    %1637 = vmatpush.msra.mxu0 0.0
    %1638 = vmatpush.msra.mxu0 0.0
    %1639 = vmatpush.msra.mxu0 0.0
    %1640 = vmatpush.msra.mxu0 0.0
    %1641 = vmatpush.msra.mxu0 0.0
    %1642 = vmatpush.msra.mxu0 0.0
    %1643 = vmatpush.msra.mxu0 0.0
    %1644 = vmatpush.msra.mxu0 0.0
    %1645 = vmatpush.msra.mxu0 0.0
    %1646 = vmatpush.msra.mxu0 0.0
    %1647 = vmatpush.msra.mxu0 0.0
    %1648 = vmatpush.msra.mxu0 %v1589
    %1649 = vmatpush.msra.mxu0 %v1585
    %1650 = vmatmul.f32.gmra.mxu0 %v1592
    %v1651 = vpop.f32.mrf.mxu0
    %v1652 = vadd.f32 0.0, %v1651
    %1653 = vdwg.mxu0
    %1654 = vmatpush.msra.mxu0 0.0
    %1655 = vmatpush.msra.mxu0 0.0
    %1656 = vmatpush.msra.mxu0 0.0
    %1657 = vmatpush.msra.mxu0 0.0
    %1658 = vmatpush.msra.mxu0 0.0
    %1659 = vmatpush.msra.mxu0 0.0
    %1660 = vmatpush.msra.mxu0 0.0
    %1661 = vmatpush.msra.mxu0 0.0
    %1662 = vmatpush.msra.mxu0 0.0
    %1663 = vmatpush.msra.mxu0 0.0
    %1664 = vmatpush.msra.mxu0 0.0
    %1665 = vmatpush.msra.mxu0 0.0
    %1666 = vmatpush.msra.mxu0 0.0
    %1667 = vmatpush.msra.mxu0 0.0
    %1668 = vmatpush.msra.mxu0 %v1590
    %1669 = vmatpush.msra.mxu0 %v1586
    %1670 = vmatmul.f32.gmra.mxu0 %v1592
    %v1671 = vpop.f32.mrf.mxu0
    %v1672 = vadd.f32 0.0, %v1671
    %1673 = vdwg.mxu0
    %v1674 = vmul.f32 %v1612, %v144
    %v1675 = vmul.f32 %v1632, %v145
    %v1676 = vmul.f32 %v1652, %v146
    %v1677 = vmul.f32 %v1672, %v147
    %v1678 = vld [vmem:[%s22] sm:$0xff]
    %v1679 = vld [vmem:[%s22 + $0x8] sm:$0xff]
    %v1680 = vld [vmem:[%s22 + $0x10] sm:$0xff]
    %v1681 = vld [vmem:[%s22 + $0x18] sm:$0xff]
    %v1682 = vld [vmem:[%s22 + $0x20] sm:$0xff]
    %v1683 = vld [vmem:[%s22 + $0x28] sm:$0xff]
    %v1684 = vld [vmem:[%s22 + $0x30] sm:$0xff]
    %v1685 = vld [vmem:[%s22 + $0x38] sm:$0xff]
    %v1686 = vld [vmem:[%s22 + $0x40] sm:$0xff]
    %v1687 = vld [vmem:[%s22 + $0x48] sm:$0xff]
    %v1688 = vld [vmem:[%s22 + $0x50] sm:$0xff]
    %v1689 = vld [vmem:[%s22 + $0x58] sm:$0xff]
    %v1690 = vld [vmem:[%s22 + $0x60] sm:$0xff]
    %v1691 = vld [vmem:[%s22 + $0x68] sm:$0xff]
    %v1692 = vld [vmem:[%s22 + $0x70] sm:$0xff]
    %v1693 = vld [vmem:[%s22 + $0x78] sm:$0xff]
    %v1694 = vld [vmem:[%s22 + $0x80] sm:$0xff]
    %v1695 = vld [vmem:[%s22 + $0x88] sm:$0xff]
    %v1696 = vld [vmem:[%s22 + $0x90] sm:$0xff]
    %v1697 = vld [vmem:[%s22 + $0x98] sm:$0xff]
    %v1698 = vld [vmem:[%s22 + $0xa0] sm:$0xff]
    %v1699 = vld [vmem:[%s22 + $0xa8] sm:$0xff]
    %v1700 = vld [vmem:[%s22 + $0xb0] sm:$0xff]
    %v1701 = vld [vmem:[%s22 + $0xb8] sm:$0xff]
    %v1702 = vld [vmem:[%s22 + $0xc0] sm:$0xff]
    %v1703 = vld [vmem:[%s22 + $0xc8] sm:$0xff]
    %v1704 = vld [vmem:[%s22 + $0xd0] sm:$0xff]
    %v1705 = vld [vmem:[%s22 + $0xd8] sm:$0xff]
    %v1706 = vld [vmem:[%s22 + $0xe0] sm:$0xff]
    %v1707 = vld [vmem:[%s22 + $0xe8] sm:$0xff]
    %v1708 = vld [vmem:[%s22 + $0xf0] sm:$0xff]
    %v1709 = vld [vmem:[%s22 + $0xf8] sm:$0xff]
    %v1710 = vld [vmem:[%s22 + $0x100] sm:$0xff]
    %v1711 = vld [vmem:[%s22 + $0x108] sm:$0xff]
    %v1712 = vld [vmem:[%s22 + $0x110] sm:$0xff]
    %v1713 = vld [vmem:[%s22 + $0x118] sm:$0xff]
    %v1714 = vld [vmem:[%s22 + $0x120] sm:$0xff]
    %v1715 = vld [vmem:[%s22 + $0x128] sm:$0xff]
    %v1716 = vld [vmem:[%s22 + $0x130] sm:$0xff]
    %v1717 = vld [vmem:[%s22 + $0x138] sm:$0xff]
    %v1718 = vld [vmem:[%s22 + $0x140] sm:$0xff]
    %v1719 = vld [vmem:[%s22 + $0x148] sm:$0xff]
    %v1720 = vld [vmem:[%s22 + $0x150] sm:$0xff]
    %v1721 = vld [vmem:[%s22 + $0x158] sm:$0xff]
    %v1722 = vld [vmem:[%s22 + $0x160] sm:$0xff]
    %v1723 = vld [vmem:[%s22 + $0x168] sm:$0xff]
    %v1724 = vld [vmem:[%s22 + $0x170] sm:$0xff]
    %v1725 = vld [vmem:[%s22 + $0x178] sm:$0xff]
    %v1726 = vld [vmem:[%s22 + $0x180] sm:$0xff]
    %v1727 = vld [vmem:[%s22 + $0x188] sm:$0xff]
    %v1728 = vld [vmem:[%s22 + $0x190] sm:$0xff]
    %v1729 = vld [vmem:[%s22 + $0x198] sm:$0xff]
    %v1730 = vld [vmem:[%s22 + $0x1a0] sm:$0xff]
    %v1731 = vld [vmem:[%s22 + $0x1a8] sm:$0xff]
    %v1732 = vld [vmem:[%s22 + $0x1b0] sm:$0xff]
    %v1733 = vld [vmem:[%s22 + $0x1b8] sm:$0xff]
    %v1734 = vld [vmem:[%s22 + $0x1c0] sm:$0xff]
    %v1735 = vld [vmem:[%s22 + $0x1c8] sm:$0xff]
    %v1736 = vld [vmem:[%s22 + $0x1d0] sm:$0xff]
    %v1737 = vld [vmem:[%s22 + $0x1d8] sm:$0xff]
    %v1738 = vld [vmem:[%s22 + $0x1e0] sm:$0xff]
    %v1739 = vld [vmem:[%s22 + $0x1e8] sm:$0xff]
    %v1740 = vld [vmem:[%s22 + $0x1f0] sm:$0xff]
    %v1741 = vld [vmem:[%s22 + $0x1f8] sm:$0xff]
    %1742 = vmatpush.msra.mxu0 %v1693
    %1743 = vmatpush.msra.mxu0 %v1692
    %1744 = vmatpush.msra.mxu0 %v1691
    %1745 = vmatpush.msra.mxu0 %v1690
    %1746 = vmatpush.msra.mxu0 %v1689
    %1747 = vmatpush.msra.mxu0 %v1688
    %1748 = vmatpush.msra.mxu0 %v1687
    %1749 = vmatpush.msra.mxu0 %v1686
    %1750 = vmatpush.msra.mxu0 %v1685
    %1751 = vmatpush.msra.mxu0 %v1684
    %1752 = vmatpush.msra.mxu0 %v1683
    %1753 = vmatpush.msra.mxu0 %v1682
    %1754 = vmatpush.msra.mxu0 %v1681
    %1755 = vmatpush.msra.mxu0 %v1680
    %1756 = vmatpush.msra.mxu0 %v1679
    %1757 = vmatpush.msra.mxu0 %v1678
    %1758 = vmatmul.f32.gmra.mxu0 %v1674
    %v1759 = vpop.f32.mrf.mxu0
    %v1760 = vadd.f32 0.0, %v1759
    %1761 = vdwg.mxu0
    %1762 = vmatpush.msra.mxu0 %v1709
    %1763 = vmatpush.msra.mxu0 %v1708
    %1764 = vmatpush.msra.mxu0 %v1707
    %1765 = vmatpush.msra.mxu0 %v1706
    %1766 = vmatpush.msra.mxu0 %v1705
    %1767 = vmatpush.msra.mxu0 %v1704
    %1768 = vmatpush.msra.mxu0 %v1703
    %1769 = vmatpush.msra.mxu0 %v1702
    %1770 = vmatpush.msra.mxu0 %v1701
    %1771 = vmatpush.msra.mxu0 %v1700
    %1772 = vmatpush.msra.mxu0 %v1699
    %1773 = vmatpush.msra.mxu0 %v1698
    %1774 = vmatpush.msra.mxu0 %v1697
    %1775 = vmatpush.msra.mxu0 %v1696
    %1776 = vmatpush.msra.mxu0 %v1695
    %1777 = vmatpush.msra.mxu0 %v1694
    %1778 = vmatmul.f32.gmra.mxu0 %v1675
    %v1779 = vpop.f32.mrf.mxu0
    %v1780 = vadd.f32 %v1760, %v1779
    %1781 = vdwg.mxu0
    %1782 = vmatpush.msra.mxu0 %v1725
    %1783 = vmatpush.msra.mxu0 %v1724
    %1784 = vmatpush.msra.mxu0 %v1723
    %1785 = vmatpush.msra.mxu0 %v1722
    %1786 = vmatpush.msra.mxu0 %v1721
    %1787 = vmatpush.msra.mxu0 %v1720
    %1788 = vmatpush.msra.mxu0 %v1719
    %1789 = vmatpush.msra.mxu0 %v1718
    %1790 = vmatpush.msra.mxu0 %v1717
    %1791 = vmatpush.msra.mxu0 %v1716
    %1792 = vmatpush.msra.mxu0 %v1715
    %1793 = vmatpush.msra.mxu0 %v1714
    %1794 = vmatpush.msra.mxu0 %v1713
    %1795 = vmatpush.msra.mxu0 %v1712
    %1796 = vmatpush.msra.mxu0 %v1711
    %1797 = vmatpush.msra.mxu0 %v1710
    %1798 = vmatmul.f32.gmra.mxu0 %v1676
    %v1799 = vpop.f32.mrf.mxu0
    %v1800 = vadd.f32 %v1780, %v1799
    %1801 = vdwg.mxu0
    %1802 = vmatpush.msra.mxu0 %v1741
    %1803 = vmatpush.msra.mxu0 %v1740
    %1804 = vmatpush.msra.mxu0 %v1739
    %1805 = vmatpush.msra.mxu0 %v1738
    %1806 = vmatpush.msra.mxu0 %v1737
    %1807 = vmatpush.msra.mxu0 %v1736
    %1808 = vmatpush.msra.mxu0 %v1735
    %1809 = vmatpush.msra.mxu0 %v1734
    %1810 = vmatpush.msra.mxu0 %v1733
    %1811 = vmatpush.msra.mxu0 %v1732
    %1812 = vmatpush.msra.mxu0 %v1731
    %1813 = vmatpush.msra.mxu0 %v1730
    %1814 = vmatpush.msra.mxu0 %v1729
    %1815 = vmatpush.msra.mxu0 %v1728
    %1816 = vmatpush.msra.mxu0 %v1727
    %1817 = vmatpush.msra.mxu0 %v1726
    %1818 = vmatmul.f32.gmra.mxu0 %v1677
    %v1819 = vpop.f32.mrf.mxu0
    %v1820 = vadd.f32 %v1800, %v1819
    %1821 = vdwg.mxu0
    %v1822 = vmul.f32 %v1560, %v1212
    %v1823 = vadd.f32 %v1822, %v1820
    %v1824 = vmul.f32 %v1582, %v1823
    %v1825 = vadd.f32 %v1824, %v1242
    %v1826 = vld [vmem:[%s23] sm:$0xff]
    %v1827 = vld [vmem:[%s23 + $0x8] sm:$0xff]
    %v1828 = vld [vmem:[%s23 + $0x10] sm:$0xff]
    %v1829 = vld [vmem:[%s23 + $0x18] sm:$0xff]
    %v1831 = vsel %vm100, %v1825, 0
    %1833 = vmatpush.msra.mxu0 0.0
    %1834 = vmatpush.msra.mxu0 0.0
    %1835 = vmatpush.msra.mxu0 0.0
    %1836 = vmatpush.msra.mxu0 0.0
    %1837 = vmatpush.msra.mxu0 0.0
    %1838 = vmatpush.msra.mxu0 0.0
    %1839 = vmatpush.msra.mxu0 0.0
    %1840 = vmatpush.msra.mxu0 0.0
    %1841 = vmatpush.msra.mxu0 0.0
    %1842 = vmatpush.msra.mxu0 0.0
    %1843 = vmatpush.msra.mxu0 0.0
    %1844 = vmatpush.msra.mxu0 0.0
    %1845 = vmatpush.msra.mxu0 %v1829
    %1846 = vmatpush.msra.mxu0 %v1828
    %1847 = vmatpush.msra.mxu0 %v1827
    %1848 = vmatpush.msra.mxu0 %v1826
    %1849 = vmatmul.f32.gmra.mxu0 %v1831
    %v1850 = vpop.f32.mrf.mxu0
    %v1851 = vadd.f32 %v174, %v1850
    %1852 = vdwg.mxu0
    %v1853 = vtanh.pop %v1851
    %s1854 = scalar_lea.vmem [#allocation2], 8
    %1855 = vst.msk [vmem:[%s1854] sm:$0xff] %vm100, %v1853
    %s1856 = scalar_lea.vmem %s0, 16
    %v1857 = vld [vmem:[%s1856] sm:$0xff]
    %v1858 = vld [vmem:[%s6] sm:$0xff]
    %v1859 = vld [vmem:[%s6 + $0x8] sm:$0xff]
    %v1860 = vld [vmem:[%s6 + $0x10] sm:$0xff]
    %v1861 = vld [vmem:[%s6 + $0x18] sm:$0xff]
    %v1862 = vld [vmem:[%s6 + $0x20] sm:$0xff]
    %v1863 = vld [vmem:[%s6 + $0x28] sm:$0xff]
    %v1864 = vld [vmem:[%s6 + $0x30] sm:$0xff]
    %v1865 = vld [vmem:[%s6 + $0x38] sm:$0xff]
    %v1867 = vsel %vm100, %v1857, 0
    %1869 = vmatpush.msra.mxu0 0.0
    %1870 = vmatpush.msra.mxu0 0.0
    %1871 = vmatpush.msra.mxu0 0.0
    %1872 = vmatpush.msra.mxu0 0.0
    %1873 = vmatpush.msra.mxu0 0.0
    %1874 = vmatpush.msra.mxu0 0.0
    %1875 = vmatpush.msra.mxu0 0.0
    %1876 = vmatpush.msra.mxu0 0.0
    %1877 = vmatpush.msra.mxu0 0.0
    %1878 = vmatpush.msra.mxu0 0.0
    %1879 = vmatpush.msra.mxu0 0.0
    %1880 = vmatpush.msra.mxu0 0.0
    %1881 = vmatpush.msra.mxu0 %v1864
    %1882 = vmatpush.msra.mxu0 %v1862
    %1883 = vmatpush.msra.mxu0 %v1860
    %1884 = vmatpush.msra.mxu0 %v1858
    %1885 = vmatmul.f32.gmra.mxu0 %v1867
    %v1886 = vpop.f32.mrf.mxu0
    %v1887 = vadd.f32 0.0, %v1886
    %1888 = vdwg.mxu0
    %1889 = vmatpush.msra.mxu0 0.0
    %1890 = vmatpush.msra.mxu0 0.0
    %1891 = vmatpush.msra.mxu0 0.0
    %1892 = vmatpush.msra.mxu0 0.0
    %1893 = vmatpush.msra.mxu0 0.0
    %1894 = vmatpush.msra.mxu0 0.0
    %1895 = vmatpush.msra.mxu0 0.0
    %1896 = vmatpush.msra.mxu0 0.0
    %1897 = vmatpush.msra.mxu0 0.0
    %1898 = vmatpush.msra.mxu0 0.0
    %1899 = vmatpush.msra.mxu0 0.0
    %1900 = vmatpush.msra.mxu0 0.0
    %1901 = vmatpush.msra.mxu0 %v1865
    %1902 = vmatpush.msra.mxu0 %v1863
    %1903 = vmatpush.msra.mxu0 %v1861
    %1904 = vmatpush.msra.mxu0 %v1859
    %1905 = vmatmul.f32.gmra.mxu0 %v1867
    %v1906 = vpop.f32.mrf.mxu0
    %v1907 = vadd.f32 0.0, %v1906
    %1908 = vdwg.mxu0
    %v1909 = vadd.f32 %v122, %v1887
    %v1910 = vadd.f32 %v142, %v1907
    %v1911 = vld [vmem:[%s7] sm:$0xff]
    %v1912 = vld [vmem:[%s7 + $0x8] sm:$0xff]
    %v1913 = vld [vmem:[%s7 + $0x10] sm:$0xff]
    %v1914 = vld [vmem:[%s7 + $0x18] sm:$0xff]
    %v1915 = vld [vmem:[%s7 + $0x20] sm:$0xff]
    %v1916 = vld [vmem:[%s7 + $0x28] sm:$0xff]
    %v1917 = vld [vmem:[%s7 + $0x30] sm:$0xff]
    %v1918 = vld [vmem:[%s7 + $0x38] sm:$0xff]
    %1919 = vmatpush.msra.mxu0 0.0
    %1920 = vmatpush.msra.mxu0 0.0
    %1921 = vmatpush.msra.mxu0 0.0
    %1922 = vmatpush.msra.mxu0 0.0
    %1923 = vmatpush.msra.mxu0 0.0
    %1924 = vmatpush.msra.mxu0 0.0
    %1925 = vmatpush.msra.mxu0 0.0
    %1926 = vmatpush.msra.mxu0 0.0
    %1927 = vmatpush.msra.mxu0 0.0
    %1928 = vmatpush.msra.mxu0 0.0
    %1929 = vmatpush.msra.mxu0 0.0
    %1930 = vmatpush.msra.mxu0 0.0
    %1931 = vmatpush.msra.mxu0 %v1917
    %1932 = vmatpush.msra.mxu0 %v1915
    %1933 = vmatpush.msra.mxu0 %v1913
    %1934 = vmatpush.msra.mxu0 %v1911
    %1935 = vmatmul.f32.gmra.mxu0 %v1220
    %v1936 = vpop.f32.mrf.mxu0
    %v1937 = vadd.f32 0.0, %v1936
    %1938 = vdwg.mxu0
    %1939 = vmatpush.msra.mxu0 0.0
    %1940 = vmatpush.msra.mxu0 0.0
    %1941 = vmatpush.msra.mxu0 0.0
    %1942 = vmatpush.msra.mxu0 0.0
    %1943 = vmatpush.msra.mxu0 0.0
    %1944 = vmatpush.msra.mxu0 0.0
    %1945 = vmatpush.msra.mxu0 0.0
    %1946 = vmatpush.msra.mxu0 0.0
    %1947 = vmatpush.msra.mxu0 0.0
    %1948 = vmatpush.msra.mxu0 0.0
    %1949 = vmatpush.msra.mxu0 0.0
    %1950 = vmatpush.msra.mxu0 0.0
    %1951 = vmatpush.msra.mxu0 %v1918
    %1952 = vmatpush.msra.mxu0 %v1916
    %1953 = vmatpush.msra.mxu0 %v1914
    %1954 = vmatpush.msra.mxu0 %v1912
    %1955 = vmatmul.f32.gmra.mxu0 %v1220
    %v1956 = vpop.f32.mrf.mxu0
    %v1957 = vadd.f32 0.0, %v1956
    %1958 = vdwg.mxu0
    %v1959 = vadd.f32 %v1909, %v1937
    %v1960 = vadd.f32 %v1910, %v1957
    %v1961 = vxor.u32 %v1959, 2147483648
    %v1962 = vmul.f32 %v1961, 1.442695
    %v1963 = vpow.pop %v1962
    %v1964 = vadd.f32 %v1963, 1.0
    %v1965 = vrcp.pop %v1964
    %v1966 = vmul.f32 %v1964, %v1965
    %v1967 = vsub.f32 1.0, %v1966
    %v1968 = vmul.f32 %v1965, %v1967
    %v1969 = vadd.f32 %v1965, %v1968
    %vm1970 = vweird.f32 %v1964
    %vm1971 = vweird.f32 %v1965
    %vm1972 = vmor %vm1970, %vm1971
    %v1973 = vsel %vm1972, %v1965, %v1969
    %v1974 = vand.u32 2147483647, %v1964
    %vm1975 = vcmp.eq.f32.partialorder %v1974, 8.507059e+37
    %v1976 = vand.u32 %v1964, 2147483648
    %v1977 = vor.u32 1.1754944e-38, %v1976
    %v1978 = vsel %vm1975, %v1977, %v1973
    %v1979 = vmul.f32 1.0, %v1978
    %v1980 = vtanh.pop %v1959
    %v1981 = vmul.f32 %v1979, %v1155
    %1983 = vrot.lane.b32.xlu0 %v1980, 32
    %v1984 = vpop.permute.xlu0 %1983
    %v1986 = vmul.f32 %v1979, %v1984
    %1988 = vrot.lane.b32.xlu0 %v1986, 32
    %v1989 = vpop.permute.xlu0 %1988
    %v1991 = vadd.f32 %v1981, %v1989
    %v1992 = vtanh.pop %v1991
    %1994 = vrot.lane.b32.xlu0 %v1992, 32
    %v1995 = vpop.permute.xlu0 %1994
    %v1997 = vmul.f32 %v1979, %v1995
    %v1998 = vxor.u32 %v1960, 2147483648
    %v1999 = vmul.f32 %v1998, 1.442695
    %v2000 = vpow.pop %v1999
    %v2001 = vadd.f32 %v2000, 1.0
    %v2002 = vrcp.pop %v2001
    %v2003 = vmul.f32 %v2001, %v2002
    %v2004 = vsub.f32 1.0, %v2003
    %v2005 = vmul.f32 %v2002, %v2004
    %v2006 = vadd.f32 %v2002, %v2005
    %vm2007 = vweird.f32 %v2001
    %vm2008 = vweird.f32 %v2002
    %vm2009 = vmor %vm2007, %vm2008
    %v2010 = vsel %vm2009, %v2002, %v2006
    %v2011 = vand.u32 2147483647, %v2001
    %vm2012 = vcmp.eq.f32.partialorder %v2011, 8.507059e+37
    %v2013 = vand.u32 %v2001, 2147483648
    %v2014 = vor.u32 1.1754944e-38, %v2013
    %v2015 = vsel %vm2012, %v2014, %v2010
    %v2016 = vmul.f32 1.0, %v2015
    %2017 = vrot.lane.b32.xlu0 %v1992, 96
    %v2018 = vpop.permute.xlu0 %2017
    %v2020 = vmul.f32 %v2016, %v2018
    %v2021 = vld [vmem:[%s10] sm:$0xff]
    %v2022 = vld [vmem:[%s10 + $0x8] sm:$0xff]
    %v2023 = vld [vmem:[%s10 + $0x10] sm:$0xff]
    %v2024 = vld [vmem:[%s10 + $0x18] sm:$0xff]
    %v2026 = vsel %vm100, %v2020, 0
    %2028 = vmatpush.msra.mxu0 0.0
    %2029 = vmatpush.msra.mxu0 0.0
    %2030 = vmatpush.msra.mxu0 0.0
    %2031 = vmatpush.msra.mxu0 0.0
    %2032 = vmatpush.msra.mxu0 0.0
    %2033 = vmatpush.msra.mxu0 0.0
    %2034 = vmatpush.msra.mxu0 0.0
    %2035 = vmatpush.msra.mxu0 0.0
    %2036 = vmatpush.msra.mxu0 0.0
    %2037 = vmatpush.msra.mxu0 0.0
    %2038 = vmatpush.msra.mxu0 0.0
    %2039 = vmatpush.msra.mxu0 0.0
    %2040 = vmatpush.msra.mxu0 %v2024
    %2041 = vmatpush.msra.mxu0 %v2023
    %2042 = vmatpush.msra.mxu0 %v2022
    %2043 = vmatpush.msra.mxu0 %v2021
    %2044 = vmatmul.f32.gmra.mxu0 %v2026
    %v2045 = vpop.f32.mrf.mxu0
    %v2046 = vadd.f32 %v158, %v2045
    %2047 = vdwg.mxu0
    %v2048 = vmax.f32 %v2046, 0.0
    %v2049 = vld [vmem:[%s12] sm:$0xff]
    %v2050 = vld [vmem:[%s12 + $0x8] sm:$0xff]
    %v2051 = vld [vmem:[%s12 + $0x10] sm:$0xff]
    %v2052 = vld [vmem:[%s12 + $0x18] sm:$0xff]
    %2054 = vrot.lane.b32.xlu0 %v1997, 64
    %v2055 = vpop.permute.xlu0 %2054
    %v2056 = vsel %vm100, %v2055, 0
    %2058 = vmatpush.msra.mxu0 0.0
    %2059 = vmatpush.msra.mxu0 0.0
    %2060 = vmatpush.msra.mxu0 0.0
    %2061 = vmatpush.msra.mxu0 0.0
    %2062 = vmatpush.msra.mxu0 0.0
    %2063 = vmatpush.msra.mxu0 0.0
    %2064 = vmatpush.msra.mxu0 0.0
    %2065 = vmatpush.msra.mxu0 0.0
    %2066 = vmatpush.msra.mxu0 0.0
    %2067 = vmatpush.msra.mxu0 0.0
    %2068 = vmatpush.msra.mxu0 0.0
    %2069 = vmatpush.msra.mxu0 0.0
    %2070 = vmatpush.msra.mxu0 %v2052
    %2071 = vmatpush.msra.mxu0 %v2051
    %2072 = vmatpush.msra.mxu0 %v2050
    %2073 = vmatpush.msra.mxu0 %v2049
    %2074 = vmatmul.f32.gmra.mxu0 %v2056
    %v2075 = vpop.f32.mrf.mxu0
    %v2076 = vadd.f32 %v162, %v2075
    %2077 = vdwg.mxu0
    %v2078 = vtanh.pop %v2076
    %v2079 = vld [vmem:[%s14] sm:$0xff]
    %v2080 = vld [vmem:[%s14 + $0x8] sm:$0xff]
    %v2081 = vld [vmem:[%s14 + $0x10] sm:$0xff]
    %v2082 = vld [vmem:[%s14 + $0x18] sm:$0xff]
    %v2084 = vsel %vm100, %v2048, 0
    %2086 = vmatpush.msra.mxu0 0.0
    %2087 = vmatpush.msra.mxu0 0.0
    %2088 = vmatpush.msra.mxu0 0.0
    %2089 = vmatpush.msra.mxu0 0.0
    %2090 = vmatpush.msra.mxu0 0.0
    %2091 = vmatpush.msra.mxu0 0.0
    %2092 = vmatpush.msra.mxu0 0.0
    %2093 = vmatpush.msra.mxu0 0.0
    %2094 = vmatpush.msra.mxu0 0.0
    %2095 = vmatpush.msra.mxu0 0.0
    %2096 = vmatpush.msra.mxu0 0.0
    %2097 = vmatpush.msra.mxu0 0.0
    %2098 = vmatpush.msra.mxu0 %v2082
    %2099 = vmatpush.msra.mxu0 %v2081
    %2100 = vmatpush.msra.mxu0 %v2080
    %2101 = vmatpush.msra.mxu0 %v2079
    %2102 = vmatmul.f32.gmra.mxu0 %v2084
    %v2103 = vpop.f32.mrf.mxu0
    %v2104 = vadd.f32 %v166, %v2103
    %2105 = vdwg.mxu0
    %v2106 = vld [vmem:[%s16] sm:$0xff]
    %v2107 = vld [vmem:[%s16 + $0x8] sm:$0xff]
    %v2108 = vld [vmem:[%s16 + $0x10] sm:$0xff]
    %v2109 = vld [vmem:[%s16 + $0x18] sm:$0xff]
    %v2111 = vsel %vm100, %v2078, 0
    %2113 = vmatpush.msra.mxu0 0.0
    %2114 = vmatpush.msra.mxu0 0.0
    %2115 = vmatpush.msra.mxu0 0.0
    %2116 = vmatpush.msra.mxu0 0.0
    %2117 = vmatpush.msra.mxu0 0.0
    %2118 = vmatpush.msra.mxu0 0.0
    %2119 = vmatpush.msra.mxu0 0.0
    %2120 = vmatpush.msra.mxu0 0.0
    %2121 = vmatpush.msra.mxu0 0.0
    %2122 = vmatpush.msra.mxu0 0.0
    %2123 = vmatpush.msra.mxu0 0.0
    %2124 = vmatpush.msra.mxu0 0.0
    %2125 = vmatpush.msra.mxu0 %v2109
    %2126 = vmatpush.msra.mxu0 %v2108
    %2127 = vmatpush.msra.mxu0 %v2107
    %2128 = vmatpush.msra.mxu0 %v2106
    %2129 = vmatmul.f32.gmra.mxu0 %v2111
    %v2130 = vpop.f32.mrf.mxu0
    %v2131 = vadd.f32 %v170, %v2130
    %2132 = vdwg.mxu0
    %v2133 = vld [vmem:[%s20] sm:$0xff]
    %v2134 = vld [vmem:[%s20 + $0x8] sm:$0xff]
    %v2135 = vld [vmem:[%s20 + $0x10] sm:$0xff]
    %v2136 = vld [vmem:[%s20 + $0x18] sm:$0xff]
    %v2137 = vld [vmem:[%s20 + $0x20] sm:$0xff]
    %v2138 = vld [vmem:[%s20 + $0x28] sm:$0xff]
    %v2139 = vld [vmem:[%s20 + $0x30] sm:$0xff]
    %v2140 = vld [vmem:[%s20 + $0x38] sm:$0xff]
    %v2141 = vld [vmem:[%s20 + $0x40] sm:$0xff]
    %v2142 = vld [vmem:[%s20 + $0x48] sm:$0xff]
    %v2143 = vld [vmem:[%s20 + $0x50] sm:$0xff]
    %v2144 = vld [vmem:[%s20 + $0x58] sm:$0xff]
    %v2145 = vld [vmem:[%s20 + $0x60] sm:$0xff]
    %v2146 = vld [vmem:[%s20 + $0x68] sm:$0xff]
    %v2147 = vld [vmem:[%s20 + $0x70] sm:$0xff]
    %v2148 = vld [vmem:[%s20 + $0x78] sm:$0xff]
    %v2150 = vsel %vm100, %v2131, 0
    %2152 = vmatpush.msra.mxu0 0.0
    %2153 = vmatpush.msra.mxu0 0.0
    %2154 = vmatpush.msra.mxu0 0.0
    %2155 = vmatpush.msra.mxu0 0.0
    %2156 = vmatpush.msra.mxu0 0.0
    %2157 = vmatpush.msra.mxu0 0.0
    %2158 = vmatpush.msra.mxu0 0.0
    %2159 = vmatpush.msra.mxu0 0.0
    %2160 = vmatpush.msra.mxu0 0.0
    %2161 = vmatpush.msra.mxu0 0.0
    %2162 = vmatpush.msra.mxu0 0.0
    %2163 = vmatpush.msra.mxu0 0.0
    %2164 = vmatpush.msra.mxu0 %v2145
    %2165 = vmatpush.msra.mxu0 %v2141
    %2166 = vmatpush.msra.mxu0 %v2137
    %2167 = vmatpush.msra.mxu0 %v2133
    %2168 = vmatmul.f32.gmra.mxu0 %v2150
    %v2169 = vpop.f32.mrf.mxu0
    %v2170 = vadd.f32 0.0, %v2169
    %2171 = vdwg.mxu0
    %2172 = vmatpush.msra.mxu0 0.0
    %2173 = vmatpush.msra.mxu0 0.0
    %2174 = vmatpush.msra.mxu0 0.0
    %2175 = vmatpush.msra.mxu0 0.0
    %2176 = vmatpush.msra.mxu0 0.0
    %2177 = vmatpush.msra.mxu0 0.0
    %2178 = vmatpush.msra.mxu0 0.0
    %2179 = vmatpush.msra.mxu0 0.0
    %2180 = vmatpush.msra.mxu0 0.0
    %2181 = vmatpush.msra.mxu0 0.0
    %2182 = vmatpush.msra.mxu0 0.0
    %2183 = vmatpush.msra.mxu0 0.0
    %2184 = vmatpush.msra.mxu0 %v2146
    %2185 = vmatpush.msra.mxu0 %v2142
    %2186 = vmatpush.msra.mxu0 %v2138
    %2187 = vmatpush.msra.mxu0 %v2134
    %2188 = vmatmul.f32.gmra.mxu0 %v2150
    %v2189 = vpop.f32.mrf.mxu0
    %v2190 = vadd.f32 0.0, %v2189
    %2191 = vdwg.mxu0
    %2192 = vmatpush.msra.mxu0 0.0
    %2193 = vmatpush.msra.mxu0 0.0
    %2194 = vmatpush.msra.mxu0 0.0
    %2195 = vmatpush.msra.mxu0 0.0
    %2196 = vmatpush.msra.mxu0 0.0
    %2197 = vmatpush.msra.mxu0 0.0
    %2198 = vmatpush.msra.mxu0 0.0
    %2199 = vmatpush.msra.mxu0 0.0
    %2200 = vmatpush.msra.mxu0 0.0
    %2201 = vmatpush.msra.mxu0 0.0
    %2202 = vmatpush.msra.mxu0 0.0
    %2203 = vmatpush.msra.mxu0 0.0
    %2204 = vmatpush.msra.mxu0 %v2147
    %2205 = vmatpush.msra.mxu0 %v2143
    %2206 = vmatpush.msra.mxu0 %v2139
    %2207 = vmatpush.msra.mxu0 %v2135
    %2208 = vmatmul.f32.gmra.mxu0 %v2150
    %v2209 = vpop.f32.mrf.mxu0
    %v2210 = vadd.f32 0.0, %v2209
    %2211 = vdwg.mxu0
    %2212 = vmatpush.msra.mxu0 0.0
    %2213 = vmatpush.msra.mxu0 0.0
    %2214 = vmatpush.msra.mxu0 0.0
    %2215 = vmatpush.msra.mxu0 0.0
    %2216 = vmatpush.msra.mxu0 0.0
    %2217 = vmatpush.msra.mxu0 0.0
    %2218 = vmatpush.msra.mxu0 0.0
    %2219 = vmatpush.msra.mxu0 0.0
    %2220 = vmatpush.msra.mxu0 0.0
    %2221 = vmatpush.msra.mxu0 0.0
    %2222 = vmatpush.msra.mxu0 0.0
    %2223 = vmatpush.msra.mxu0 0.0
    %2224 = vmatpush.msra.mxu0 %v2148
    %2225 = vmatpush.msra.mxu0 %v2144
    %2226 = vmatpush.msra.mxu0 %v2140
    %2227 = vmatpush.msra.mxu0 %v2136
    %2228 = vmatmul.f32.gmra.mxu0 %v2150
    %v2229 = vpop.f32.mrf.mxu0
    %v2230 = vadd.f32 0.0, %v2229
    %2231 = vdwg.mxu0
    %v2232 = vadd.f32 %v148, %v2170
    %v2233 = vadd.f32 %v149, %v2190
    %v2234 = vadd.f32 %v150, %v2210
    %v2235 = vadd.f32 %v151, %v2230
    %v2236 = vtanh.pop %v2232
    %v2237 = vtanh.pop %v2233
    %v2238 = vtanh.pop %v2234
    %v2239 = vtanh.pop %v2235
    %v2240 = vld [vmem:[%s19] sm:$0xff]
    %v2241 = vld [vmem:[%s19 + $0x8] sm:$0xff]
    %v2242 = vld [vmem:[%s19 + $0x10] sm:$0xff]
    %v2243 = vld [vmem:[%s19 + $0x18] sm:$0xff]
    %v2244 = vld [vmem:[%s19 + $0x20] sm:$0xff]
    %v2245 = vld [vmem:[%s19 + $0x28] sm:$0xff]
    %v2246 = vld [vmem:[%s19 + $0x30] sm:$0xff]
    %v2247 = vld [vmem:[%s19 + $0x38] sm:$0xff]
    %v2248 = vld [vmem:[%s19 + $0x40] sm:$0xff]
    %v2249 = vld [vmem:[%s19 + $0x48] sm:$0xff]
    %v2250 = vld [vmem:[%s19 + $0x50] sm:$0xff]
    %v2251 = vld [vmem:[%s19 + $0x58] sm:$0xff]
    %v2252 = vld [vmem:[%s19 + $0x60] sm:$0xff]
    %v2253 = vld [vmem:[%s19 + $0x68] sm:$0xff]
    %v2254 = vld [vmem:[%s19 + $0x70] sm:$0xff]
    %v2255 = vld [vmem:[%s19 + $0x78] sm:$0xff]
    %v2256 = vld [vmem:[%s19 + $0x80] sm:$0xff]
    %v2257 = vld [vmem:[%s19 + $0x88] sm:$0xff]
    %v2258 = vld [vmem:[%s19 + $0x90] sm:$0xff]
    %v2259 = vld [vmem:[%s19 + $0x98] sm:$0xff]
    %v2260 = vld [vmem:[%s19 + $0xa0] sm:$0xff]
    %v2261 = vld [vmem:[%s19 + $0xa8] sm:$0xff]
    %v2262 = vld [vmem:[%s19 + $0xb0] sm:$0xff]
    %v2263 = vld [vmem:[%s19 + $0xb8] sm:$0xff]
    %v2264 = vld [vmem:[%s19 + $0xc0] sm:$0xff]
    %v2265 = vld [vmem:[%s19 + $0xc8] sm:$0xff]
    %v2266 = vld [vmem:[%s19 + $0xd0] sm:$0xff]
    %v2267 = vld [vmem:[%s19 + $0xd8] sm:$0xff]
    %v2268 = vld [vmem:[%s19 + $0xe0] sm:$0xff]
    %v2269 = vld [vmem:[%s19 + $0xe8] sm:$0xff]
    %v2270 = vld [vmem:[%s19 + $0xf0] sm:$0xff]
    %v2271 = vld [vmem:[%s19 + $0xf8] sm:$0xff]
    %v2272 = vld [vmem:[%s19 + $0x100] sm:$0xff]
    %v2273 = vld [vmem:[%s19 + $0x108] sm:$0xff]
    %v2274 = vld [vmem:[%s19 + $0x110] sm:$0xff]
    %v2275 = vld [vmem:[%s19 + $0x118] sm:$0xff]
    %v2276 = vld [vmem:[%s19 + $0x120] sm:$0xff]
    %v2277 = vld [vmem:[%s19 + $0x128] sm:$0xff]
    %v2278 = vld [vmem:[%s19 + $0x130] sm:$0xff]
    %v2279 = vld [vmem:[%s19 + $0x138] sm:$0xff]
    %v2280 = vld [vmem:[%s19 + $0x140] sm:$0xff]
    %v2281 = vld [vmem:[%s19 + $0x148] sm:$0xff]
    %v2282 = vld [vmem:[%s19 + $0x150] sm:$0xff]
    %v2283 = vld [vmem:[%s19 + $0x158] sm:$0xff]
    %v2284 = vld [vmem:[%s19 + $0x160] sm:$0xff]
    %v2285 = vld [vmem:[%s19 + $0x168] sm:$0xff]
    %v2286 = vld [vmem:[%s19 + $0x170] sm:$0xff]
    %v2287 = vld [vmem:[%s19 + $0x178] sm:$0xff]
    %v2288 = vld [vmem:[%s19 + $0x180] sm:$0xff]
    %v2289 = vld [vmem:[%s19 + $0x188] sm:$0xff]
    %v2290 = vld [vmem:[%s19 + $0x190] sm:$0xff]
    %v2291 = vld [vmem:[%s19 + $0x198] sm:$0xff]
    %v2292 = vld [vmem:[%s19 + $0x1a0] sm:$0xff]
    %v2293 = vld [vmem:[%s19 + $0x1a8] sm:$0xff]
    %v2294 = vld [vmem:[%s19 + $0x1b0] sm:$0xff]
    %v2295 = vld [vmem:[%s19 + $0x1b8] sm:$0xff]
    %v2296 = vld [vmem:[%s19 + $0x1c0] sm:$0xff]
    %v2297 = vld [vmem:[%s19 + $0x1c8] sm:$0xff]
    %v2298 = vld [vmem:[%s19 + $0x1d0] sm:$0xff]
    %v2299 = vld [vmem:[%s19 + $0x1d8] sm:$0xff]
    %v2300 = vld [vmem:[%s19 + $0x1e0] sm:$0xff]
    %v2301 = vld [vmem:[%s19 + $0x1e8] sm:$0xff]
    %v2302 = vld [vmem:[%s19 + $0x1f0] sm:$0xff]
    %v2303 = vld [vmem:[%s19 + $0x1f8] sm:$0xff]
    %2304 = vmatpush.msra.mxu0 %v2255
    %2305 = vmatpush.msra.mxu0 %v2254
    %2306 = vmatpush.msra.mxu0 %v2253
    %2307 = vmatpush.msra.mxu0 %v2252
    %2308 = vmatpush.msra.mxu0 %v2251
    %2309 = vmatpush.msra.mxu0 %v2250
    %2310 = vmatpush.msra.mxu0 %v2249
    %2311 = vmatpush.msra.mxu0 %v2248
    %2312 = vmatpush.msra.mxu0 %v2247
    %2313 = vmatpush.msra.mxu0 %v2246
    %2314 = vmatpush.msra.mxu0 %v2245
    %2315 = vmatpush.msra.mxu0 %v2244
    %2316 = vmatpush.msra.mxu0 %v2243
    %2317 = vmatpush.msra.mxu0 %v2242
    %2318 = vmatpush.msra.mxu0 %v2241
    %2319 = vmatpush.msra.mxu0 %v2240
    %2320 = vmatmul.f32.gmra.mxu0 %v2236
    %v2321 = vpop.f32.mrf.mxu0
    %v2322 = vadd.f32 0.0, %v2321
    %2323 = vdwg.mxu0
    %2324 = vmatpush.msra.mxu0 %v2271
    %2325 = vmatpush.msra.mxu0 %v2270
    %2326 = vmatpush.msra.mxu0 %v2269
    %2327 = vmatpush.msra.mxu0 %v2268
    %2328 = vmatpush.msra.mxu0 %v2267
    %2329 = vmatpush.msra.mxu0 %v2266
    %2330 = vmatpush.msra.mxu0 %v2265
    %2331 = vmatpush.msra.mxu0 %v2264
    %2332 = vmatpush.msra.mxu0 %v2263
    %2333 = vmatpush.msra.mxu0 %v2262
    %2334 = vmatpush.msra.mxu0 %v2261
    %2335 = vmatpush.msra.mxu0 %v2260
    %2336 = vmatpush.msra.mxu0 %v2259
    %2337 = vmatpush.msra.mxu0 %v2258
    %2338 = vmatpush.msra.mxu0 %v2257
    %2339 = vmatpush.msra.mxu0 %v2256
    %2340 = vmatmul.f32.gmra.mxu0 %v2237
    %v2341 = vpop.f32.mrf.mxu0
    %v2342 = vadd.f32 %v2322, %v2341
    %2343 = vdwg.mxu0
    %2344 = vmatpush.msra.mxu0 %v2287
    %2345 = vmatpush.msra.mxu0 %v2286
    %2346 = vmatpush.msra.mxu0 %v2285
    %2347 = vmatpush.msra.mxu0 %v2284
    %2348 = vmatpush.msra.mxu0 %v2283
    %2349 = vmatpush.msra.mxu0 %v2282
    %2350 = vmatpush.msra.mxu0 %v2281
    %2351 = vmatpush.msra.mxu0 %v2280
    %2352 = vmatpush.msra.mxu0 %v2279
    %2353 = vmatpush.msra.mxu0 %v2278
    %2354 = vmatpush.msra.mxu0 %v2277
    %2355 = vmatpush.msra.mxu0 %v2276
    %2356 = vmatpush.msra.mxu0 %v2275
    %2357 = vmatpush.msra.mxu0 %v2274
    %2358 = vmatpush.msra.mxu0 %v2273
    %2359 = vmatpush.msra.mxu0 %v2272
    %2360 = vmatmul.f32.gmra.mxu0 %v2238
    %v2361 = vpop.f32.mrf.mxu0
    %v2362 = vadd.f32 %v2342, %v2361
    %2363 = vdwg.mxu0
    %2364 = vmatpush.msra.mxu0 %v2303
    %2365 = vmatpush.msra.mxu0 %v2302
    %2366 = vmatpush.msra.mxu0 %v2301
    %2367 = vmatpush.msra.mxu0 %v2300
    %2368 = vmatpush.msra.mxu0 %v2299
    %2369 = vmatpush.msra.mxu0 %v2298
    %2370 = vmatpush.msra.mxu0 %v2297
    %2371 = vmatpush.msra.mxu0 %v2296
    %2372 = vmatpush.msra.mxu0 %v2295
    %2373 = vmatpush.msra.mxu0 %v2294
    %2374 = vmatpush.msra.mxu0 %v2293
    %2375 = vmatpush.msra.mxu0 %v2292
    %2376 = vmatpush.msra.mxu0 %v2291
    %2377 = vmatpush.msra.mxu0 %v2290
    %2378 = vmatpush.msra.mxu0 %v2289
    %2379 = vmatpush.msra.mxu0 %v2288
    %2380 = vmatmul.f32.gmra.mxu0 %v2239
    %v2381 = vpop.f32.mrf.mxu0
    %v2382 = vadd.f32 %v2362, %v2381
    %2383 = vdwg.mxu0
    %v2384 = vadd.f32 %v2104, %v2131
    %v2385 = vtanh.pop %v2384
    %v2386 = vmul.f32 %v2385, %v154
    %v2387 = vsel %vm100, %v2386, 0.0
    %2388 = vadd.xlane.f32.xlu0 %v2387
    %v2389 = vpop.xlane.xlu0 %2388
    %v2390 = vsel %vm718, %v2382, -inf
    %2391 = vmax.xlane.f32.xlu0 %v2390
    %v2392 = vpop.xlane.xlu0 %2391
    %v2393 = vmax.f32 %v2392, %v2389
    %v2394 = vsub.f32 %v2389, %v2393
    %v2395 = vmul.f32 %v2394, 1.442695
    %v2396 = vpow.pop %v2395
    %v2397 = vsub.f32 %v2382, %v2393
    %v2398 = vmul.f32 %v2397, 1.442695
    %v2399 = vpow.pop %v2398
    %v2400 = vsel %vm718, %v2399, 0.0
    %2401 = vadd.xlane.f32.xlu0 %v2400
    %v2402 = vpop.xlane.xlu0 %2401
    %v2403 = vadd.f32 %v2396, %v2402
    %v2404 = vrcp.pop %v2403
    %v2405 = vmul.f32 %v2403, %v2404
    %v2406 = vsub.f32 1.0, %v2405
    %v2407 = vmul.f32 %v2404, %v2406
    %v2408 = vadd.f32 %v2404, %v2407
    %vm2409 = vweird.f32 %v2403
    %vm2410 = vweird.f32 %v2404
    %vm2411 = vmor %vm2409, %vm2410
    %v2412 = vsel %vm2411, %v2404, %v2408
    %v2413 = vand.u32 2147483647, %v2403
    %vm2414 = vcmp.eq.f32.partialorder %v2413, 8.507059e+37
    %v2415 = vand.u32 %v2403, 2147483648
    %v2416 = vor.u32 1.1754944e-38, %v2415
    %v2417 = vsel %vm2414, %v2416, %v2412
    %v2418 = vmul.f32 1.0, %v2417
    %v2419 = vld [vmem:[%s21] sm:$0xff]
    %v2420 = vld [vmem:[%s21 + $0x8] sm:$0xff]
    %v2421 = vld [vmem:[%s21 + $0x10] sm:$0xff]
    %v2422 = vld [vmem:[%s21 + $0x18] sm:$0xff]
    %v2423 = vld [vmem:[%s21 + $0x20] sm:$0xff]
    %v2424 = vld [vmem:[%s21 + $0x28] sm:$0xff]
    %v2425 = vld [vmem:[%s21 + $0x30] sm:$0xff]
    %v2426 = vld [vmem:[%s21 + $0x38] sm:$0xff]
    %v2428 = vsel %vm718, %v2399, 0
    %2430 = vmatpush.msra.mxu0 0.0
    %2431 = vmatpush.msra.mxu0 0.0
    %2432 = vmatpush.msra.mxu0 0.0
    %2433 = vmatpush.msra.mxu0 0.0
    %2434 = vmatpush.msra.mxu0 0.0
    %2435 = vmatpush.msra.mxu0 0.0
    %2436 = vmatpush.msra.mxu0 0.0
    %2437 = vmatpush.msra.mxu0 0.0
    %2438 = vmatpush.msra.mxu0 0.0
    %2439 = vmatpush.msra.mxu0 0.0
    %2440 = vmatpush.msra.mxu0 0.0
    %2441 = vmatpush.msra.mxu0 0.0
    %2442 = vmatpush.msra.mxu0 0.0
    %2443 = vmatpush.msra.mxu0 0.0
    %2444 = vmatpush.msra.mxu0 %v2423
    %2445 = vmatpush.msra.mxu0 %v2419
    %2446 = vmatmul.f32.gmra.mxu0 %v2428
    %v2447 = vpop.f32.mrf.mxu0
    %v2448 = vadd.f32 0.0, %v2447
    %2449 = vdwg.mxu0
    %2450 = vmatpush.msra.mxu0 0.0
    %2451 = vmatpush.msra.mxu0 0.0
    %2452 = vmatpush.msra.mxu0 0.0
    %2453 = vmatpush.msra.mxu0 0.0
    %2454 = vmatpush.msra.mxu0 0.0
    %2455 = vmatpush.msra.mxu0 0.0
    %2456 = vmatpush.msra.mxu0 0.0
    %2457 = vmatpush.msra.mxu0 0.0
    %2458 = vmatpush.msra.mxu0 0.0
    %2459 = vmatpush.msra.mxu0 0.0
    %2460 = vmatpush.msra.mxu0 0.0
    %2461 = vmatpush.msra.mxu0 0.0
    %2462 = vmatpush.msra.mxu0 0.0
    %2463 = vmatpush.msra.mxu0 0.0
    %2464 = vmatpush.msra.mxu0 %v2424
    %2465 = vmatpush.msra.mxu0 %v2420
    %2466 = vmatmul.f32.gmra.mxu0 %v2428
    %v2467 = vpop.f32.mrf.mxu0
    %v2468 = vadd.f32 0.0, %v2467
    %2469 = vdwg.mxu0
    %2470 = vmatpush.msra.mxu0 0.0
    %2471 = vmatpush.msra.mxu0 0.0
    %2472 = vmatpush.msra.mxu0 0.0
    %2473 = vmatpush.msra.mxu0 0.0
    %2474 = vmatpush.msra.mxu0 0.0
    %2475 = vmatpush.msra.mxu0 0.0
    %2476 = vmatpush.msra.mxu0 0.0
    %2477 = vmatpush.msra.mxu0 0.0
    %2478 = vmatpush.msra.mxu0 0.0
    %2479 = vmatpush.msra.mxu0 0.0
    %2480 = vmatpush.msra.mxu0 0.0
    %2481 = vmatpush.msra.mxu0 0.0
    %2482 = vmatpush.msra.mxu0 0.0
    %2483 = vmatpush.msra.mxu0 0.0
    %2484 = vmatpush.msra.mxu0 %v2425
    %2485 = vmatpush.msra.mxu0 %v2421
    %2486 = vmatmul.f32.gmra.mxu0 %v2428
    %v2487 = vpop.f32.mrf.mxu0
    %v2488 = vadd.f32 0.0, %v2487
    %2489 = vdwg.mxu0
    %2490 = vmatpush.msra.mxu0 0.0
    %2491 = vmatpush.msra.mxu0 0.0
    %2492 = vmatpush.msra.mxu0 0.0
    %2493 = vmatpush.msra.mxu0 0.0
    %2494 = vmatpush.msra.mxu0 0.0
    %2495 = vmatpush.msra.mxu0 0.0
    %2496 = vmatpush.msra.mxu0 0.0
    %2497 = vmatpush.msra.mxu0 0.0
    %2498 = vmatpush.msra.mxu0 0.0
    %2499 = vmatpush.msra.mxu0 0.0
    %2500 = vmatpush.msra.mxu0 0.0
    %2501 = vmatpush.msra.mxu0 0.0
    %2502 = vmatpush.msra.mxu0 0.0
    %2503 = vmatpush.msra.mxu0 0.0
    %2504 = vmatpush.msra.mxu0 %v2426
    %2505 = vmatpush.msra.mxu0 %v2422
    %2506 = vmatmul.f32.gmra.mxu0 %v2428
    %v2507 = vpop.f32.mrf.mxu0
    %v2508 = vadd.f32 0.0, %v2507
    %2509 = vdwg.mxu0
    %v2510 = vmul.f32 %v2448, %v144
    %v2511 = vmul.f32 %v2468, %v145
    %v2512 = vmul.f32 %v2488, %v146
    %v2513 = vmul.f32 %v2508, %v147
    %v2514 = vld [vmem:[%s22] sm:$0xff]
    %v2515 = vld [vmem:[%s22 + $0x8] sm:$0xff]
    %v2516 = vld [vmem:[%s22 + $0x10] sm:$0xff]
    %v2517 = vld [vmem:[%s22 + $0x18] sm:$0xff]
    %v2518 = vld [vmem:[%s22 + $0x20] sm:$0xff]
    %v2519 = vld [vmem:[%s22 + $0x28] sm:$0xff]
    %v2520 = vld [vmem:[%s22 + $0x30] sm:$0xff]
    %v2521 = vld [vmem:[%s22 + $0x38] sm:$0xff]
    %v2522 = vld [vmem:[%s22 + $0x40] sm:$0xff]
    %v2523 = vld [vmem:[%s22 + $0x48] sm:$0xff]
    %v2524 = vld [vmem:[%s22 + $0x50] sm:$0xff]
    %v2525 = vld [vmem:[%s22 + $0x58] sm:$0xff]
    %v2526 = vld [vmem:[%s22 + $0x60] sm:$0xff]
    %v2527 = vld [vmem:[%s22 + $0x68] sm:$0xff]
    %v2528 = vld [vmem:[%s22 + $0x70] sm:$0xff]
    %v2529 = vld [vmem:[%s22 + $0x78] sm:$0xff]
    %v2530 = vld [vmem:[%s22 + $0x80] sm:$0xff]
    %v2531 = vld [vmem:[%s22 + $0x88] sm:$0xff]
    %v2532 = vld [vmem:[%s22 + $0x90] sm:$0xff]
    %v2533 = vld [vmem:[%s22 + $0x98] sm:$0xff]
    %v2534 = vld [vmem:[%s22 + $0xa0] sm:$0xff]
    %v2535 = vld [vmem:[%s22 + $0xa8] sm:$0xff]
    %v2536 = vld [vmem:[%s22 + $0xb0] sm:$0xff]
    %v2537 = vld [vmem:[%s22 + $0xb8] sm:$0xff]
    %v2538 = vld [vmem:[%s22 + $0xc0] sm:$0xff]
    %v2539 = vld [vmem:[%s22 + $0xc8] sm:$0xff]
    %v2540 = vld [vmem:[%s22 + $0xd0] sm:$0xff]
    %v2541 = vld [vmem:[%s22 + $0xd8] sm:$0xff]
    %v2542 = vld [vmem:[%s22 + $0xe0] sm:$0xff]
    %v2543 = vld [vmem:[%s22 + $0xe8] sm:$0xff]
    %v2544 = vld [vmem:[%s22 + $0xf0] sm:$0xff]
    %v2545 = vld [vmem:[%s22 + $0xf8] sm:$0xff]
    %v2546 = vld [vmem:[%s22 + $0x100] sm:$0xff]
    %v2547 = vld [vmem:[%s22 + $0x108] sm:$0xff]
    %v2548 = vld [vmem:[%s22 + $0x110] sm:$0xff]
    %v2549 = vld [vmem:[%s22 + $0x118] sm:$0xff]
    %v2550 = vld [vmem:[%s22 + $0x120] sm:$0xff]
    %v2551 = vld [vmem:[%s22 + $0x128] sm:$0xff]
    %v2552 = vld [vmem:[%s22 + $0x130] sm:$0xff]
    %v2553 = vld [vmem:[%s22 + $0x138] sm:$0xff]
    %v2554 = vld [vmem:[%s22 + $0x140] sm:$0xff]
    %v2555 = vld [vmem:[%s22 + $0x148] sm:$0xff]
    %v2556 = vld [vmem:[%s22 + $0x150] sm:$0xff]
    %v2557 = vld [vmem:[%s22 + $0x158] sm:$0xff]
    %v2558 = vld [vmem:[%s22 + $0x160] sm:$0xff]
    %v2559 = vld [vmem:[%s22 + $0x168] sm:$0xff]
    %v2560 = vld [vmem:[%s22 + $0x170] sm:$0xff]
    %v2561 = vld [vmem:[%s22 + $0x178] sm:$0xff]
    %v2562 = vld [vmem:[%s22 + $0x180] sm:$0xff]
    %v2563 = vld [vmem:[%s22 + $0x188] sm:$0xff]
    %v2564 = vld [vmem:[%s22 + $0x190] sm:$0xff]
    %v2565 = vld [vmem:[%s22 + $0x198] sm:$0xff]
    %v2566 = vld [vmem:[%s22 + $0x1a0] sm:$0xff]
    %v2567 = vld [vmem:[%s22 + $0x1a8] sm:$0xff]
    %v2568 = vld [vmem:[%s22 + $0x1b0] sm:$0xff]
    %v2569 = vld [vmem:[%s22 + $0x1b8] sm:$0xff]
    %v2570 = vld [vmem:[%s22 + $0x1c0] sm:$0xff]
    %v2571 = vld [vmem:[%s22 + $0x1c8] sm:$0xff]
    %v2572 = vld [vmem:[%s22 + $0x1d0] sm:$0xff]
    %v2573 = vld [vmem:[%s22 + $0x1d8] sm:$0xff]
    %v2574 = vld [vmem:[%s22 + $0x1e0] sm:$0xff]
    %v2575 = vld [vmem:[%s22 + $0x1e8] sm:$0xff]
    %v2576 = vld [vmem:[%s22 + $0x1f0] sm:$0xff]
    %v2577 = vld [vmem:[%s22 + $0x1f8] sm:$0xff]
    %2578 = vmatpush.msra.mxu0 %v2529
    %2579 = vmatpush.msra.mxu0 %v2528
    %2580 = vmatpush.msra.mxu0 %v2527
    %2581 = vmatpush.msra.mxu0 %v2526
    %2582 = vmatpush.msra.mxu0 %v2525
    %2583 = vmatpush.msra.mxu0 %v2524
    %2584 = vmatpush.msra.mxu0 %v2523
    %2585 = vmatpush.msra.mxu0 %v2522
    %2586 = vmatpush.msra.mxu0 %v2521
    %2587 = vmatpush.msra.mxu0 %v2520
    %2588 = vmatpush.msra.mxu0 %v2519
    %2589 = vmatpush.msra.mxu0 %v2518
    %2590 = vmatpush.msra.mxu0 %v2517
    %2591 = vmatpush.msra.mxu0 %v2516
    %2592 = vmatpush.msra.mxu0 %v2515
    %2593 = vmatpush.msra.mxu0 %v2514
    %2594 = vmatmul.f32.gmra.mxu0 %v2510
    %v2595 = vpop.f32.mrf.mxu0
    %v2596 = vadd.f32 0.0, %v2595
    %2597 = vdwg.mxu0
    %2598 = vmatpush.msra.mxu0 %v2545
    %2599 = vmatpush.msra.mxu0 %v2544
    %2600 = vmatpush.msra.mxu0 %v2543
    %2601 = vmatpush.msra.mxu0 %v2542
    %2602 = vmatpush.msra.mxu0 %v2541
    %2603 = vmatpush.msra.mxu0 %v2540
    %2604 = vmatpush.msra.mxu0 %v2539
    %2605 = vmatpush.msra.mxu0 %v2538
    %2606 = vmatpush.msra.mxu0 %v2537
    %2607 = vmatpush.msra.mxu0 %v2536
    %2608 = vmatpush.msra.mxu0 %v2535
    %2609 = vmatpush.msra.mxu0 %v2534
    %2610 = vmatpush.msra.mxu0 %v2533
    %2611 = vmatpush.msra.mxu0 %v2532
    %2612 = vmatpush.msra.mxu0 %v2531
    %2613 = vmatpush.msra.mxu0 %v2530
    %2614 = vmatmul.f32.gmra.mxu0 %v2511
    %v2615 = vpop.f32.mrf.mxu0
    %v2616 = vadd.f32 %v2596, %v2615
    %2617 = vdwg.mxu0
    %2618 = vmatpush.msra.mxu0 %v2561
    %2619 = vmatpush.msra.mxu0 %v2560
    %2620 = vmatpush.msra.mxu0 %v2559
    %2621 = vmatpush.msra.mxu0 %v2558
    %2622 = vmatpush.msra.mxu0 %v2557
    %2623 = vmatpush.msra.mxu0 %v2556
    %2624 = vmatpush.msra.mxu0 %v2555
    %2625 = vmatpush.msra.mxu0 %v2554
    %2626 = vmatpush.msra.mxu0 %v2553
    %2627 = vmatpush.msra.mxu0 %v2552
    %2628 = vmatpush.msra.mxu0 %v2551
    %2629 = vmatpush.msra.mxu0 %v2550
    %2630 = vmatpush.msra.mxu0 %v2549
    %2631 = vmatpush.msra.mxu0 %v2548
    %2632 = vmatpush.msra.mxu0 %v2547
    %2633 = vmatpush.msra.mxu0 %v2546
    %2634 = vmatmul.f32.gmra.mxu0 %v2512
    %v2635 = vpop.f32.mrf.mxu0
    %v2636 = vadd.f32 %v2616, %v2635
    %2637 = vdwg.mxu0
    %2638 = vmatpush.msra.mxu0 %v2577
    %2639 = vmatpush.msra.mxu0 %v2576
    %2640 = vmatpush.msra.mxu0 %v2575
    %2641 = vmatpush.msra.mxu0 %v2574
    %2642 = vmatpush.msra.mxu0 %v2573
    %2643 = vmatpush.msra.mxu0 %v2572
    %2644 = vmatpush.msra.mxu0 %v2571
    %2645 = vmatpush.msra.mxu0 %v2570
    %2646 = vmatpush.msra.mxu0 %v2569
    %2647 = vmatpush.msra.mxu0 %v2568
    %2648 = vmatpush.msra.mxu0 %v2567
    %2649 = vmatpush.msra.mxu0 %v2566
    %2650 = vmatpush.msra.mxu0 %v2565
    %2651 = vmatpush.msra.mxu0 %v2564
    %2652 = vmatpush.msra.mxu0 %v2563
    %2653 = vmatpush.msra.mxu0 %v2562
    %2654 = vmatmul.f32.gmra.mxu0 %v2513
    %v2655 = vpop.f32.mrf.mxu0
    %v2656 = vadd.f32 %v2636, %v2655
    %2657 = vdwg.mxu0
    %v2658 = vmul.f32 %v2396, %v2048
    %v2659 = vadd.f32 %v2658, %v2656
    %v2660 = vmul.f32 %v2418, %v2659
    %v2661 = vadd.f32 %v2660, %v2078
    %v2662 = vld [vmem:[%s23] sm:$0xff]
    %v2663 = vld [vmem:[%s23 + $0x8] sm:$0xff]
    %v2664 = vld [vmem:[%s23 + $0x10] sm:$0xff]
    %v2665 = vld [vmem:[%s23 + $0x18] sm:$0xff]
    %v2667 = vsel %vm100, %v2661, 0
    %2669 = vmatpush.msra.mxu0 0.0
    %2670 = vmatpush.msra.mxu0 0.0
    %2671 = vmatpush.msra.mxu0 0.0
    %2672 = vmatpush.msra.mxu0 0.0
    %2673 = vmatpush.msra.mxu0 0.0
    %2674 = vmatpush.msra.mxu0 0.0
    %2675 = vmatpush.msra.mxu0 0.0
    %2676 = vmatpush.msra.mxu0 0.0
    %2677 = vmatpush.msra.mxu0 0.0
    %2678 = vmatpush.msra.mxu0 0.0
    %2679 = vmatpush.msra.mxu0 0.0
    %2680 = vmatpush.msra.mxu0 0.0
    %2681 = vmatpush.msra.mxu0 %v2665
    %2682 = vmatpush.msra.mxu0 %v2664
    %2683 = vmatpush.msra.mxu0 %v2663
    %2684 = vmatpush.msra.mxu0 %v2662
    %2685 = vmatmul.f32.gmra.mxu0 %v2667
    %v2686 = vpop.f32.mrf.mxu0
    %v2687 = vadd.f32 %v174, %v2686
    %2688 = vdwg.mxu0
    %v2689 = vtanh.pop %v2687
    %s2690 = scalar_lea.vmem [#allocation2], 16
    %2691 = vst.msk [vmem:[%s2690] sm:$0xff] %vm100, %v2689
    %s2692 = scalar_lea.vmem %s0, 24
    %v2693 = vld [vmem:[%s2692] sm:$0xff]
    %v2694 = vld [vmem:[%s6] sm:$0xff]
    %v2695 = vld [vmem:[%s6 + $0x8] sm:$0xff]
    %v2696 = vld [vmem:[%s6 + $0x10] sm:$0xff]
    %v2697 = vld [vmem:[%s6 + $0x18] sm:$0xff]
    %v2698 = vld [vmem:[%s6 + $0x20] sm:$0xff]
    %v2699 = vld [vmem:[%s6 + $0x28] sm:$0xff]
    %v2700 = vld [vmem:[%s6 + $0x30] sm:$0xff]
    %v2701 = vld [vmem:[%s6 + $0x38] sm:$0xff]
    %v2703 = vsel %vm100, %v2693, 0
    %2705 = vmatpush.msra.mxu0 0.0
    %2706 = vmatpush.msra.mxu0 0.0
    %2707 = vmatpush.msra.mxu0 0.0
    %2708 = vmatpush.msra.mxu0 0.0
    %2709 = vmatpush.msra.mxu0 0.0
    %2710 = vmatpush.msra.mxu0 0.0
    %2711 = vmatpush.msra.mxu0 0.0
    %2712 = vmatpush.msra.mxu0 0.0
    %2713 = vmatpush.msra.mxu0 0.0
    %2714 = vmatpush.msra.mxu0 0.0
    %2715 = vmatpush.msra.mxu0 0.0
    %2716 = vmatpush.msra.mxu0 0.0
    %2717 = vmatpush.msra.mxu0 %v2700
    %2718 = vmatpush.msra.mxu0 %v2698
    %2719 = vmatpush.msra.mxu0 %v2696
    %2720 = vmatpush.msra.mxu0 %v2694
    %2721 = vmatmul.f32.gmra.mxu0 %v2703
    %v2722 = vpop.f32.mrf.mxu0
    %v2723 = vadd.f32 0.0, %v2722
    %2724 = vdwg.mxu0
    %2725 = vmatpush.msra.mxu0 0.0
    %2726 = vmatpush.msra.mxu0 0.0
    %2727 = vmatpush.msra.mxu0 0.0
    %2728 = vmatpush.msra.mxu0 0.0
    %2729 = vmatpush.msra.mxu0 0.0
    %2730 = vmatpush.msra.mxu0 0.0
    %2731 = vmatpush.msra.mxu0 0.0
    %2732 = vmatpush.msra.mxu0 0.0
    %2733 = vmatpush.msra.mxu0 0.0
    %2734 = vmatpush.msra.mxu0 0.0
    %2735 = vmatpush.msra.mxu0 0.0
    %2736 = vmatpush.msra.mxu0 0.0
    %2737 = vmatpush.msra.mxu0 %v2701
    %2738 = vmatpush.msra.mxu0 %v2699
    %2739 = vmatpush.msra.mxu0 %v2697
    %2740 = vmatpush.msra.mxu0 %v2695
    %2741 = vmatmul.f32.gmra.mxu0 %v2703
    %v2742 = vpop.f32.mrf.mxu0
    %v2743 = vadd.f32 0.0, %v2742
    %2744 = vdwg.mxu0
    %v2745 = vadd.f32 %v122, %v2723
    %v2746 = vadd.f32 %v142, %v2743
    %v2747 = vld [vmem:[%s7] sm:$0xff]
    %v2748 = vld [vmem:[%s7 + $0x8] sm:$0xff]
    %v2749 = vld [vmem:[%s7 + $0x10] sm:$0xff]
    %v2750 = vld [vmem:[%s7 + $0x18] sm:$0xff]
    %v2751 = vld [vmem:[%s7 + $0x20] sm:$0xff]
    %v2752 = vld [vmem:[%s7 + $0x28] sm:$0xff]
    %v2753 = vld [vmem:[%s7 + $0x30] sm:$0xff]
    %v2754 = vld [vmem:[%s7 + $0x38] sm:$0xff]
    %2755 = vmatpush.msra.mxu0 0.0
    %2756 = vmatpush.msra.mxu0 0.0
    %2757 = vmatpush.msra.mxu0 0.0
    %2758 = vmatpush.msra.mxu0 0.0
    %2759 = vmatpush.msra.mxu0 0.0
    %2760 = vmatpush.msra.mxu0 0.0
    %2761 = vmatpush.msra.mxu0 0.0
    %2762 = vmatpush.msra.mxu0 0.0
    %2763 = vmatpush.msra.mxu0 0.0
    %2764 = vmatpush.msra.mxu0 0.0
    %2765 = vmatpush.msra.mxu0 0.0
    %2766 = vmatpush.msra.mxu0 0.0
    %2767 = vmatpush.msra.mxu0 %v2753
    %2768 = vmatpush.msra.mxu0 %v2751
    %2769 = vmatpush.msra.mxu0 %v2749
    %2770 = vmatpush.msra.mxu0 %v2747
    %2771 = vmatmul.f32.gmra.mxu0 %v2056
    %v2772 = vpop.f32.mrf.mxu0
    %v2773 = vadd.f32 0.0, %v2772
    %2774 = vdwg.mxu0
    %2775 = vmatpush.msra.mxu0 0.0
    %2776 = vmatpush.msra.mxu0 0.0
    %2777 = vmatpush.msra.mxu0 0.0
    %2778 = vmatpush.msra.mxu0 0.0
    %2779 = vmatpush.msra.mxu0 0.0
    %2780 = vmatpush.msra.mxu0 0.0
    %2781 = vmatpush.msra.mxu0 0.0
    %2782 = vmatpush.msra.mxu0 0.0
    %2783 = vmatpush.msra.mxu0 0.0
    %2784 = vmatpush.msra.mxu0 0.0
    %2785 = vmatpush.msra.mxu0 0.0
    %2786 = vmatpush.msra.mxu0 0.0
    %2787 = vmatpush.msra.mxu0 %v2754
    %2788 = vmatpush.msra.mxu0 %v2752
    %2789 = vmatpush.msra.mxu0 %v2750
    %2790 = vmatpush.msra.mxu0 %v2748
    %2791 = vmatmul.f32.gmra.mxu0 %v2056
    %v2792 = vpop.f32.mrf.mxu0
    %v2793 = vadd.f32 0.0, %v2792
    %2794 = vdwg.mxu0
    %v2795 = vadd.f32 %v2745, %v2773
    %v2796 = vadd.f32 %v2746, %v2793
    %v2797 = vxor.u32 %v2795, 2147483648
    %v2798 = vmul.f32 %v2797, 1.442695
    %v2799 = vpow.pop %v2798
    %v2800 = vadd.f32 %v2799, 1.0
    %v2801 = vrcp.pop %v2800
    %v2802 = vmul.f32 %v2800, %v2801
    %v2803 = vsub.f32 1.0, %v2802
    %v2804 = vmul.f32 %v2801, %v2803
    %v2805 = vadd.f32 %v2801, %v2804
    %vm2806 = vweird.f32 %v2800
    %vm2807 = vweird.f32 %v2801
    %vm2808 = vmor %vm2806, %vm2807
    %v2809 = vsel %vm2808, %v2801, %v2805
    %v2810 = vand.u32 2147483647, %v2800
    %vm2811 = vcmp.eq.f32.partialorder %v2810, 8.507059e+37
    %v2812 = vand.u32 %v2800, 2147483648
    %v2813 = vor.u32 1.1754944e-38, %v2812
    %v2814 = vsel %vm2811, %v2813, %v2809
    %v2815 = vmul.f32 1.0, %v2814
    %v2816 = vtanh.pop %v2795
    %v2817 = vmul.f32 %v2815, %v1991
    %2819 = vrot.lane.b32.xlu0 %v2816, 32
    %v2820 = vpop.permute.xlu0 %2819
    %v2822 = vmul.f32 %v2815, %v2820
    %2824 = vrot.lane.b32.xlu0 %v2822, 32
    %v2825 = vpop.permute.xlu0 %2824
    %v2827 = vadd.f32 %v2817, %v2825
    %v2828 = vtanh.pop %v2827
    %2830 = vrot.lane.b32.xlu0 %v2828, 32
    %v2831 = vpop.permute.xlu0 %2830
    %v2833 = vmul.f32 %v2815, %v2831
    %v2834 = vxor.u32 %v2796, 2147483648
    %v2835 = vmul.f32 %v2834, 1.442695
    %v2836 = vpow.pop %v2835
    %v2837 = vadd.f32 %v2836, 1.0
    %v2838 = vrcp.pop %v2837
    %v2839 = vmul.f32 %v2837, %v2838
    %v2840 = vsub.f32 1.0, %v2839
    %v2841 = vmul.f32 %v2838, %v2840
    %v2842 = vadd.f32 %v2838, %v2841
    %vm2843 = vweird.f32 %v2837
    %vm2844 = vweird.f32 %v2838
    %vm2845 = vmor %vm2843, %vm2844
    %v2846 = vsel %vm2845, %v2838, %v2842
    %v2847 = vand.u32 2147483647, %v2837
    %vm2848 = vcmp.eq.f32.partialorder %v2847, 8.507059e+37
    %v2849 = vand.u32 %v2837, 2147483648
    %v2850 = vor.u32 1.1754944e-38, %v2849
    %v2851 = vsel %vm2848, %v2850, %v2846
    %v2852 = vmul.f32 1.0, %v2851
    %2853 = vrot.lane.b32.xlu0 %v2828, 96
    %v2854 = vpop.permute.xlu0 %2853
    %v2856 = vmul.f32 %v2852, %v2854
    %v2857 = vld [vmem:[%s10] sm:$0xff]
    %v2858 = vld [vmem:[%s10 + $0x8] sm:$0xff]
    %v2859 = vld [vmem:[%s10 + $0x10] sm:$0xff]
    %v2860 = vld [vmem:[%s10 + $0x18] sm:$0xff]
    %v2862 = vsel %vm100, %v2856, 0
    %2864 = vmatpush.msra.mxu0 0.0
    %2865 = vmatpush.msra.mxu0 0.0
    %2866 = vmatpush.msra.mxu0 0.0
    %2867 = vmatpush.msra.mxu0 0.0
    %2868 = vmatpush.msra.mxu0 0.0
    %2869 = vmatpush.msra.mxu0 0.0
    %2870 = vmatpush.msra.mxu0 0.0
    %2871 = vmatpush.msra.mxu0 0.0
    %2872 = vmatpush.msra.mxu0 0.0
    %2873 = vmatpush.msra.mxu0 0.0
    %2874 = vmatpush.msra.mxu0 0.0
    %2875 = vmatpush.msra.mxu0 0.0
    %2876 = vmatpush.msra.mxu0 %v2860
    %2877 = vmatpush.msra.mxu0 %v2859
    %2878 = vmatpush.msra.mxu0 %v2858
    %2879 = vmatpush.msra.mxu0 %v2857
    %2880 = vmatmul.f32.gmra.mxu0 %v2862
    %v2881 = vpop.f32.mrf.mxu0
    %v2882 = vadd.f32 %v158, %v2881
    %2883 = vdwg.mxu0
    %v2884 = vmax.f32 %v2882, 0.0
    %v2885 = vld [vmem:[%s12] sm:$0xff]
    %v2886 = vld [vmem:[%s12 + $0x8] sm:$0xff]
    %v2887 = vld [vmem:[%s12 + $0x10] sm:$0xff]
    %v2888 = vld [vmem:[%s12 + $0x18] sm:$0xff]
    %2890 = vrot.lane.b32.xlu0 %v2833, 64
    %v2891 = vpop.permute.xlu0 %2890
    %v2892 = vsel %vm100, %v2891, 0
    %2894 = vmatpush.msra.mxu0 0.0
    %2895 = vmatpush.msra.mxu0 0.0
    %2896 = vmatpush.msra.mxu0 0.0
    %2897 = vmatpush.msra.mxu0 0.0
    %2898 = vmatpush.msra.mxu0 0.0
    %2899 = vmatpush.msra.mxu0 0.0
    %2900 = vmatpush.msra.mxu0 0.0
    %2901 = vmatpush.msra.mxu0 0.0
    %2902 = vmatpush.msra.mxu0 0.0
    %2903 = vmatpush.msra.mxu0 0.0
    %2904 = vmatpush.msra.mxu0 0.0
    %2905 = vmatpush.msra.mxu0 0.0
    %2906 = vmatpush.msra.mxu0 %v2888
    %2907 = vmatpush.msra.mxu0 %v2887
    %2908 = vmatpush.msra.mxu0 %v2886
    %2909 = vmatpush.msra.mxu0 %v2885
    %2910 = vmatmul.f32.gmra.mxu0 %v2892
    %v2911 = vpop.f32.mrf.mxu0
    %v2912 = vadd.f32 %v162, %v2911
    %2913 = vdwg.mxu0
    %v2914 = vtanh.pop %v2912
    %v2915 = vld [vmem:[%s14] sm:$0xff]
    %v2916 = vld [vmem:[%s14 + $0x8] sm:$0xff]
    %v2917 = vld [vmem:[%s14 + $0x10] sm:$0xff]
    %v2918 = vld [vmem:[%s14 + $0x18] sm:$0xff]
    %v2920 = vsel %vm100, %v2884, 0
    %2922 = vmatpush.msra.mxu0 0.0
    %2923 = vmatpush.msra.mxu0 0.0
    %2924 = vmatpush.msra.mxu0 0.0
    %2925 = vmatpush.msra.mxu0 0.0
    %2926 = vmatpush.msra.mxu0 0.0
    %2927 = vmatpush.msra.mxu0 0.0
    %2928 = vmatpush.msra.mxu0 0.0
    %2929 = vmatpush.msra.mxu0 0.0
    %2930 = vmatpush.msra.mxu0 0.0
    %2931 = vmatpush.msra.mxu0 0.0
    %2932 = vmatpush.msra.mxu0 0.0
    %2933 = vmatpush.msra.mxu0 0.0
    %2934 = vmatpush.msra.mxu0 %v2918
    %2935 = vmatpush.msra.mxu0 %v2917
    %2936 = vmatpush.msra.mxu0 %v2916
    %2937 = vmatpush.msra.mxu0 %v2915
    %2938 = vmatmul.f32.gmra.mxu0 %v2920
    %v2939 = vpop.f32.mrf.mxu0
    %v2940 = vadd.f32 %v166, %v2939
    %2941 = vdwg.mxu0
    %v2942 = vld [vmem:[%s16] sm:$0xff]
    %v2943 = vld [vmem:[%s16 + $0x8] sm:$0xff]
    %v2944 = vld [vmem:[%s16 + $0x10] sm:$0xff]
    %v2945 = vld [vmem:[%s16 + $0x18] sm:$0xff]
    %v2947 = vsel %vm100, %v2914, 0
    %2949 = vmatpush.msra.mxu0 0.0
    %2950 = vmatpush.msra.mxu0 0.0
    %2951 = vmatpush.msra.mxu0 0.0
    %2952 = vmatpush.msra.mxu0 0.0
    %2953 = vmatpush.msra.mxu0 0.0
    %2954 = vmatpush.msra.mxu0 0.0
    %2955 = vmatpush.msra.mxu0 0.0
    %2956 = vmatpush.msra.mxu0 0.0
    %2957 = vmatpush.msra.mxu0 0.0
    %2958 = vmatpush.msra.mxu0 0.0
    %2959 = vmatpush.msra.mxu0 0.0
    %2960 = vmatpush.msra.mxu0 0.0
    %2961 = vmatpush.msra.mxu0 %v2945
    %2962 = vmatpush.msra.mxu0 %v2944
    %2963 = vmatpush.msra.mxu0 %v2943
    %2964 = vmatpush.msra.mxu0 %v2942
    %2965 = vmatmul.f32.gmra.mxu0 %v2947
    %v2966 = vpop.f32.mrf.mxu0
    %v2967 = vadd.f32 %v170, %v2966
    %2968 = vdwg.mxu0
    %v2969 = vld [vmem:[%s20] sm:$0xff]
    %v2970 = vld [vmem:[%s20 + $0x8] sm:$0xff]
    %v2971 = vld [vmem:[%s20 + $0x10] sm:$0xff]
    %v2972 = vld [vmem:[%s20 + $0x18] sm:$0xff]
    %v2973 = vld [vmem:[%s20 + $0x20] sm:$0xff]
    %v2974 = vld [vmem:[%s20 + $0x28] sm:$0xff]
    %v2975 = vld [vmem:[%s20 + $0x30] sm:$0xff]
    %v2976 = vld [vmem:[%s20 + $0x38] sm:$0xff]
    %v2977 = vld [vmem:[%s20 + $0x40] sm:$0xff]
    %v2978 = vld [vmem:[%s20 + $0x48] sm:$0xff]
    %v2979 = vld [vmem:[%s20 + $0x50] sm:$0xff]
    %v2980 = vld [vmem:[%s20 + $0x58] sm:$0xff]
    %v2981 = vld [vmem:[%s20 + $0x60] sm:$0xff]
    %v2982 = vld [vmem:[%s20 + $0x68] sm:$0xff]
    %v2983 = vld [vmem:[%s20 + $0x70] sm:$0xff]
    %v2984 = vld [vmem:[%s20 + $0x78] sm:$0xff]
    %v2986 = vsel %vm100, %v2967, 0
    %2988 = vmatpush.msra.mxu0 0.0
    %2989 = vmatpush.msra.mxu0 0.0
    %2990 = vmatpush.msra.mxu0 0.0
    %2991 = vmatpush.msra.mxu0 0.0
    %2992 = vmatpush.msra.mxu0 0.0
    %2993 = vmatpush.msra.mxu0 0.0
    %2994 = vmatpush.msra.mxu0 0.0
    %2995 = vmatpush.msra.mxu0 0.0
    %2996 = vmatpush.msra.mxu0 0.0
    %2997 = vmatpush.msra.mxu0 0.0
    %2998 = vmatpush.msra.mxu0 0.0
    %2999 = vmatpush.msra.mxu0 0.0
    %3000 = vmatpush.msra.mxu0 %v2981
    %3001 = vmatpush.msra.mxu0 %v2977
    %3002 = vmatpush.msra.mxu0 %v2973
    %3003 = vmatpush.msra.mxu0 %v2969
    %3004 = vmatmul.f32.gmra.mxu0 %v2986
    %v3005 = vpop.f32.mrf.mxu0
    %v3006 = vadd.f32 0.0, %v3005
    %3007 = vdwg.mxu0
    %3008 = vmatpush.msra.mxu0 0.0
    %3009 = vmatpush.msra.mxu0 0.0
    %3010 = vmatpush.msra.mxu0 0.0
    %3011 = vmatpush.msra.mxu0 0.0
    %3012 = vmatpush.msra.mxu0 0.0
    %3013 = vmatpush.msra.mxu0 0.0
    %3014 = vmatpush.msra.mxu0 0.0
    %3015 = vmatpush.msra.mxu0 0.0
    %3016 = vmatpush.msra.mxu0 0.0
    %3017 = vmatpush.msra.mxu0 0.0
    %3018 = vmatpush.msra.mxu0 0.0
    %3019 = vmatpush.msra.mxu0 0.0
    %3020 = vmatpush.msra.mxu0 %v2982
    %3021 = vmatpush.msra.mxu0 %v2978
    %3022 = vmatpush.msra.mxu0 %v2974
    %3023 = vmatpush.msra.mxu0 %v2970
    %3024 = vmatmul.f32.gmra.mxu0 %v2986
    %v3025 = vpop.f32.mrf.mxu0
    %v3026 = vadd.f32 0.0, %v3025
    %3027 = vdwg.mxu0
    %3028 = vmatpush.msra.mxu0 0.0
    %3029 = vmatpush.msra.mxu0 0.0
    %3030 = vmatpush.msra.mxu0 0.0
    %3031 = vmatpush.msra.mxu0 0.0
    %3032 = vmatpush.msra.mxu0 0.0
    %3033 = vmatpush.msra.mxu0 0.0
    %3034 = vmatpush.msra.mxu0 0.0
    %3035 = vmatpush.msra.mxu0 0.0
    %3036 = vmatpush.msra.mxu0 0.0
    %3037 = vmatpush.msra.mxu0 0.0
    %3038 = vmatpush.msra.mxu0 0.0
    %3039 = vmatpush.msra.mxu0 0.0
    %3040 = vmatpush.msra.mxu0 %v2983
    %3041 = vmatpush.msra.mxu0 %v2979
    %3042 = vmatpush.msra.mxu0 %v2975
    %3043 = vmatpush.msra.mxu0 %v2971
    %3044 = vmatmul.f32.gmra.mxu0 %v2986
    %v3045 = vpop.f32.mrf.mxu0
    %v3046 = vadd.f32 0.0, %v3045
    %3047 = vdwg.mxu0
    %3048 = vmatpush.msra.mxu0 0.0
    %3049 = vmatpush.msra.mxu0 0.0
    %3050 = vmatpush.msra.mxu0 0.0
    %3051 = vmatpush.msra.mxu0 0.0
    %3052 = vmatpush.msra.mxu0 0.0
    %3053 = vmatpush.msra.mxu0 0.0
    %3054 = vmatpush.msra.mxu0 0.0
    %3055 = vmatpush.msra.mxu0 0.0
    %3056 = vmatpush.msra.mxu0 0.0
    %3057 = vmatpush.msra.mxu0 0.0
    %3058 = vmatpush.msra.mxu0 0.0
    %3059 = vmatpush.msra.mxu0 0.0
    %3060 = vmatpush.msra.mxu0 %v2984
    %3061 = vmatpush.msra.mxu0 %v2980
    %3062 = vmatpush.msra.mxu0 %v2976
    %3063 = vmatpush.msra.mxu0 %v2972
    %3064 = vmatmul.f32.gmra.mxu0 %v2986
    %v3065 = vpop.f32.mrf.mxu0
    %v3066 = vadd.f32 0.0, %v3065
    %3067 = vdwg.mxu0
    %v3068 = vadd.f32 %v148, %v3006
    %v3069 = vadd.f32 %v149, %v3026
    %v3070 = vadd.f32 %v150, %v3046
    %v3071 = vadd.f32 %v151, %v3066
    %v3072 = vtanh.pop %v3068
    %v3073 = vtanh.pop %v3069
    %v3074 = vtanh.pop %v3070
    %v3075 = vtanh.pop %v3071
    %v3076 = vld [vmem:[%s19] sm:$0xff]
    %v3077 = vld [vmem:[%s19 + $0x8] sm:$0xff]
    %v3078 = vld [vmem:[%s19 + $0x10] sm:$0xff]
    %v3079 = vld [vmem:[%s19 + $0x18] sm:$0xff]
    %v3080 = vld [vmem:[%s19 + $0x20] sm:$0xff]
    %v3081 = vld [vmem:[%s19 + $0x28] sm:$0xff]
    %v3082 = vld [vmem:[%s19 + $0x30] sm:$0xff]
    %v3083 = vld [vmem:[%s19 + $0x38] sm:$0xff]
    %v3084 = vld [vmem:[%s19 + $0x40] sm:$0xff]
    %v3085 = vld [vmem:[%s19 + $0x48] sm:$0xff]
    %v3086 = vld [vmem:[%s19 + $0x50] sm:$0xff]
    %v3087 = vld [vmem:[%s19 + $0x58] sm:$0xff]
    %v3088 = vld [vmem:[%s19 + $0x60] sm:$0xff]
    %v3089 = vld [vmem:[%s19 + $0x68] sm:$0xff]
    %v3090 = vld [vmem:[%s19 + $0x70] sm:$0xff]
    %v3091 = vld [vmem:[%s19 + $0x78] sm:$0xff]
    %v3092 = vld [vmem:[%s19 + $0x80] sm:$0xff]
    %v3093 = vld [vmem:[%s19 + $0x88] sm:$0xff]
    %v3094 = vld [vmem:[%s19 + $0x90] sm:$0xff]
    %v3095 = vld [vmem:[%s19 + $0x98] sm:$0xff]
    %v3096 = vld [vmem:[%s19 + $0xa0] sm:$0xff]
    %v3097 = vld [vmem:[%s19 + $0xa8] sm:$0xff]
    %v3098 = vld [vmem:[%s19 + $0xb0] sm:$0xff]
    %v3099 = vld [vmem:[%s19 + $0xb8] sm:$0xff]
    %v3100 = vld [vmem:[%s19 + $0xc0] sm:$0xff]
    %v3101 = vld [vmem:[%s19 + $0xc8] sm:$0xff]
    %v3102 = vld [vmem:[%s19 + $0xd0] sm:$0xff]
    %v3103 = vld [vmem:[%s19 + $0xd8] sm:$0xff]
    %v3104 = vld [vmem:[%s19 + $0xe0] sm:$0xff]
    %v3105 = vld [vmem:[%s19 + $0xe8] sm:$0xff]
    %v3106 = vld [vmem:[%s19 + $0xf0] sm:$0xff]
    %v3107 = vld [vmem:[%s19 + $0xf8] sm:$0xff]
    %v3108 = vld [vmem:[%s19 + $0x100] sm:$0xff]
    %v3109 = vld [vmem:[%s19 + $0x108] sm:$0xff]
    %v3110 = vld [vmem:[%s19 + $0x110] sm:$0xff]
    %v3111 = vld [vmem:[%s19 + $0x118] sm:$0xff]
    %v3112 = vld [vmem:[%s19 + $0x120] sm:$0xff]
    %v3113 = vld [vmem:[%s19 + $0x128] sm:$0xff]
    %v3114 = vld [vmem:[%s19 + $0x130] sm:$0xff]
    %v3115 = vld [vmem:[%s19 + $0x138] sm:$0xff]
    %v3116 = vld [vmem:[%s19 + $0x140] sm:$0xff]
    %v3117 = vld [vmem:[%s19 + $0x148] sm:$0xff]
    %v3118 = vld [vmem:[%s19 + $0x150] sm:$0xff]
    %v3119 = vld [vmem:[%s19 + $0x158] sm:$0xff]
    %v3120 = vld [vmem:[%s19 + $0x160] sm:$0xff]
    %v3121 = vld [vmem:[%s19 + $0x168] sm:$0xff]
    %v3122 = vld [vmem:[%s19 + $0x170] sm:$0xff]
    %v3123 = vld [vmem:[%s19 + $0x178] sm:$0xff]
    %v3124 = vld [vmem:[%s19 + $0x180] sm:$0xff]
    %v3125 = vld [vmem:[%s19 + $0x188] sm:$0xff]
    %v3126 = vld [vmem:[%s19 + $0x190] sm:$0xff]
    %v3127 = vld [vmem:[%s19 + $0x198] sm:$0xff]
    %v3128 = vld [vmem:[%s19 + $0x1a0] sm:$0xff]
    %v3129 = vld [vmem:[%s19 + $0x1a8] sm:$0xff]
    %v3130 = vld [vmem:[%s19 + $0x1b0] sm:$0xff]
    %v3131 = vld [vmem:[%s19 + $0x1b8] sm:$0xff]
    %v3132 = vld [vmem:[%s19 + $0x1c0] sm:$0xff]
    %v3133 = vld [vmem:[%s19 + $0x1c8] sm:$0xff]
    %v3134 = vld [vmem:[%s19 + $0x1d0] sm:$0xff]
    %v3135 = vld [vmem:[%s19 + $0x1d8] sm:$0xff]
    %v3136 = vld [vmem:[%s19 + $0x1e0] sm:$0xff]
    %v3137 = vld [vmem:[%s19 + $0x1e8] sm:$0xff]
    %v3138 = vld [vmem:[%s19 + $0x1f0] sm:$0xff]
    %v3139 = vld [vmem:[%s19 + $0x1f8] sm:$0xff]
    %3140 = vmatpush.msra.mxu0 %v3091
    %3141 = vmatpush.msra.mxu0 %v3090
    %3142 = vmatpush.msra.mxu0 %v3089
    %3143 = vmatpush.msra.mxu0 %v3088
    %3144 = vmatpush.msra.mxu0 %v3087
    %3145 = vmatpush.msra.mxu0 %v3086
    %3146 = vmatpush.msra.mxu0 %v3085
    %3147 = vmatpush.msra.mxu0 %v3084
    %3148 = vmatpush.msra.mxu0 %v3083
    %3149 = vmatpush.msra.mxu0 %v3082
    %3150 = vmatpush.msra.mxu0 %v3081
    %3151 = vmatpush.msra.mxu0 %v3080
    %3152 = vmatpush.msra.mxu0 %v3079
    %3153 = vmatpush.msra.mxu0 %v3078
    %3154 = vmatpush.msra.mxu0 %v3077
    %3155 = vmatpush.msra.mxu0 %v3076
    %3156 = vmatmul.f32.gmra.mxu0 %v3072
    %v3157 = vpop.f32.mrf.mxu0
    %v3158 = vadd.f32 0.0, %v3157
    %3159 = vdwg.mxu0
    %3160 = vmatpush.msra.mxu0 %v3107
    %3161 = vmatpush.msra.mxu0 %v3106
    %3162 = vmatpush.msra.mxu0 %v3105
    %3163 = vmatpush.msra.mxu0 %v3104
    %3164 = vmatpush.msra.mxu0 %v3103
    %3165 = vmatpush.msra.mxu0 %v3102
    %3166 = vmatpush.msra.mxu0 %v3101
    %3167 = vmatpush.msra.mxu0 %v3100
    %3168 = vmatpush.msra.mxu0 %v3099
    %3169 = vmatpush.msra.mxu0 %v3098
    %3170 = vmatpush.msra.mxu0 %v3097
    %3171 = vmatpush.msra.mxu0 %v3096
    %3172 = vmatpush.msra.mxu0 %v3095
    %3173 = vmatpush.msra.mxu0 %v3094
    %3174 = vmatpush.msra.mxu0 %v3093
    %3175 = vmatpush.msra.mxu0 %v3092
    %3176 = vmatmul.f32.gmra.mxu0 %v3073
    %v3177 = vpop.f32.mrf.mxu0
    %v3178 = vadd.f32 %v3158, %v3177
    %3179 = vdwg.mxu0
    %3180 = vmatpush.msra.mxu0 %v3123
    %3181 = vmatpush.msra.mxu0 %v3122
    %3182 = vmatpush.msra.mxu0 %v3121
    %3183 = vmatpush.msra.mxu0 %v3120
    %3184 = vmatpush.msra.mxu0 %v3119
    %3185 = vmatpush.msra.mxu0 %v3118
    %3186 = vmatpush.msra.mxu0 %v3117
    %3187 = vmatpush.msra.mxu0 %v3116
    %3188 = vmatpush.msra.mxu0 %v3115
    %3189 = vmatpush.msra.mxu0 %v3114
    %3190 = vmatpush.msra.mxu0 %v3113
    %3191 = vmatpush.msra.mxu0 %v3112
    %3192 = vmatpush.msra.mxu0 %v3111
    %3193 = vmatpush.msra.mxu0 %v3110
    %3194 = vmatpush.msra.mxu0 %v3109
    %3195 = vmatpush.msra.mxu0 %v3108
    %3196 = vmatmul.f32.gmra.mxu0 %v3074
    %v3197 = vpop.f32.mrf.mxu0
    %v3198 = vadd.f32 %v3178, %v3197
    %3199 = vdwg.mxu0
    %3200 = vmatpush.msra.mxu0 %v3139
    %3201 = vmatpush.msra.mxu0 %v3138
    %3202 = vmatpush.msra.mxu0 %v3137
    %3203 = vmatpush.msra.mxu0 %v3136
    %3204 = vmatpush.msra.mxu0 %v3135
    %3205 = vmatpush.msra.mxu0 %v3134
    %3206 = vmatpush.msra.mxu0 %v3133
    %3207 = vmatpush.msra.mxu0 %v3132
    %3208 = vmatpush.msra.mxu0 %v3131
    %3209 = vmatpush.msra.mxu0 %v3130
    %3210 = vmatpush.msra.mxu0 %v3129
    %3211 = vmatpush.msra.mxu0 %v3128
    %3212 = vmatpush.msra.mxu0 %v3127
    %3213 = vmatpush.msra.mxu0 %v3126
    %3214 = vmatpush.msra.mxu0 %v3125
    %3215 = vmatpush.msra.mxu0 %v3124
    %3216 = vmatmul.f32.gmra.mxu0 %v3075
    %v3217 = vpop.f32.mrf.mxu0
    %v3218 = vadd.f32 %v3198, %v3217
    %3219 = vdwg.mxu0
    %v3220 = vadd.f32 %v2940, %v2967
    %v3221 = vtanh.pop %v3220
    %v3222 = vmul.f32 %v3221, %v154
    %v3223 = vsel %vm100, %v3222, 0.0
    %3224 = vadd.xlane.f32.xlu0 %v3223
    %v3225 = vpop.xlane.xlu0 %3224
    %v3226 = vsel %vm718, %v3218, -inf
    %3227 = vmax.xlane.f32.xlu0 %v3226
    %v3228 = vpop.xlane.xlu0 %3227
    %v3229 = vmax.f32 %v3228, %v3225
    %v3230 = vsub.f32 %v3225, %v3229
    %v3231 = vmul.f32 %v3230, 1.442695
    %v3232 = vpow.pop %v3231
    %v3233 = vsub.f32 %v3218, %v3229
    %v3234 = vmul.f32 %v3233, 1.442695
    %v3235 = vpow.pop %v3234
    %v3236 = vsel %vm718, %v3235, 0.0
    %3237 = vadd.xlane.f32.xlu0 %v3236
    %v3238 = vpop.xlane.xlu0 %3237
    %v3239 = vadd.f32 %v3232, %v3238
    %v3240 = vrcp.pop %v3239
    %v3241 = vmul.f32 %v3239, %v3240
    %v3242 = vsub.f32 1.0, %v3241
    %v3243 = vmul.f32 %v3240, %v3242
    %v3244 = vadd.f32 %v3240, %v3243
    %vm3245 = vweird.f32 %v3239
    %vm3246 = vweird.f32 %v3240
    %vm3247 = vmor %vm3245, %vm3246
    %v3248 = vsel %vm3247, %v3240, %v3244
    %v3249 = vand.u32 2147483647, %v3239
    %vm3250 = vcmp.eq.f32.partialorder %v3249, 8.507059e+37
    %v3251 = vand.u32 %v3239, 2147483648
    %v3252 = vor.u32 1.1754944e-38, %v3251
    %v3253 = vsel %vm3250, %v3252, %v3248
    %v3254 = vmul.f32 1.0, %v3253
    %v3255 = vld [vmem:[%s21] sm:$0xff]
    %v3256 = vld [vmem:[%s21 + $0x8] sm:$0xff]
    %v3257 = vld [vmem:[%s21 + $0x10] sm:$0xff]
    %v3258 = vld [vmem:[%s21 + $0x18] sm:$0xff]
    %v3259 = vld [vmem:[%s21 + $0x20] sm:$0xff]
    %v3260 = vld [vmem:[%s21 + $0x28] sm:$0xff]
    %v3261 = vld [vmem:[%s21 + $0x30] sm:$0xff]
    %v3262 = vld [vmem:[%s21 + $0x38] sm:$0xff]
    %v3264 = vsel %vm718, %v3235, 0
    %3266 = vmatpush.msra.mxu0 0.0
    %3267 = vmatpush.msra.mxu0 0.0
    %3268 = vmatpush.msra.mxu0 0.0
    %3269 = vmatpush.msra.mxu0 0.0
    %3270 = vmatpush.msra.mxu0 0.0
    %3271 = vmatpush.msra.mxu0 0.0
    %3272 = vmatpush.msra.mxu0 0.0
    %3273 = vmatpush.msra.mxu0 0.0
    %3274 = vmatpush.msra.mxu0 0.0
    %3275 = vmatpush.msra.mxu0 0.0
    %3276 = vmatpush.msra.mxu0 0.0
    %3277 = vmatpush.msra.mxu0 0.0
    %3278 = vmatpush.msra.mxu0 0.0
    %3279 = vmatpush.msra.mxu0 0.0
    %3280 = vmatpush.msra.mxu0 %v3259
    %3281 = vmatpush.msra.mxu0 %v3255
    %3282 = vmatmul.f32.gmra.mxu0 %v3264
    %v3283 = vpop.f32.mrf.mxu0
    %v3284 = vadd.f32 0.0, %v3283
    %3285 = vdwg.mxu0
    %3286 = vmatpush.msra.mxu0 0.0
    %3287 = vmatpush.msra.mxu0 0.0
    %3288 = vmatpush.msra.mxu0 0.0
    %3289 = vmatpush.msra.mxu0 0.0
    %3290 = vmatpush.msra.mxu0 0.0
    %3291 = vmatpush.msra.mxu0 0.0
    %3292 = vmatpush.msra.mxu0 0.0
    %3293 = vmatpush.msra.mxu0 0.0
    %3294 = vmatpush.msra.mxu0 0.0
    %3295 = vmatpush.msra.mxu0 0.0
    %3296 = vmatpush.msra.mxu0 0.0
    %3297 = vmatpush.msra.mxu0 0.0
    %3298 = vmatpush.msra.mxu0 0.0
    %3299 = vmatpush.msra.mxu0 0.0
    %3300 = vmatpush.msra.mxu0 %v3260
    %3301 = vmatpush.msra.mxu0 %v3256
    %3302 = vmatmul.f32.gmra.mxu0 %v3264
    %v3303 = vpop.f32.mrf.mxu0
    %v3304 = vadd.f32 0.0, %v3303
    %3305 = vdwg.mxu0
    %3306 = vmatpush.msra.mxu0 0.0
    %3307 = vmatpush.msra.mxu0 0.0
    %3308 = vmatpush.msra.mxu0 0.0
    %3309 = vmatpush.msra.mxu0 0.0
    %3310 = vmatpush.msra.mxu0 0.0
    %3311 = vmatpush.msra.mxu0 0.0
    %3312 = vmatpush.msra.mxu0 0.0
    %3313 = vmatpush.msra.mxu0 0.0
    %3314 = vmatpush.msra.mxu0 0.0
    %3315 = vmatpush.msra.mxu0 0.0
    %3316 = vmatpush.msra.mxu0 0.0
    %3317 = vmatpush.msra.mxu0 0.0
    %3318 = vmatpush.msra.mxu0 0.0
    %3319 = vmatpush.msra.mxu0 0.0
    %3320 = vmatpush.msra.mxu0 %v3261
    %3321 = vmatpush.msra.mxu0 %v3257
    %3322 = vmatmul.f32.gmra.mxu0 %v3264
    %v3323 = vpop.f32.mrf.mxu0
    %v3324 = vadd.f32 0.0, %v3323
    %3325 = vdwg.mxu0
    %3326 = vmatpush.msra.mxu0 0.0
    %3327 = vmatpush.msra.mxu0 0.0
    %3328 = vmatpush.msra.mxu0 0.0
    %3329 = vmatpush.msra.mxu0 0.0
    %3330 = vmatpush.msra.mxu0 0.0
    %3331 = vmatpush.msra.mxu0 0.0
    %3332 = vmatpush.msra.mxu0 0.0
    %3333 = vmatpush.msra.mxu0 0.0
    %3334 = vmatpush.msra.mxu0 0.0
    %3335 = vmatpush.msra.mxu0 0.0
    %3336 = vmatpush.msra.mxu0 0.0
    %3337 = vmatpush.msra.mxu0 0.0
    %3338 = vmatpush.msra.mxu0 0.0
    %3339 = vmatpush.msra.mxu0 0.0
    %3340 = vmatpush.msra.mxu0 %v3262
    %3341 = vmatpush.msra.mxu0 %v3258
    %3342 = vmatmul.f32.gmra.mxu0 %v3264
    %v3343 = vpop.f32.mrf.mxu0
    %v3344 = vadd.f32 0.0, %v3343
    %3345 = vdwg.mxu0
    %v3346 = vmul.f32 %v3284, %v144
    %v3347 = vmul.f32 %v3304, %v145
    %v3348 = vmul.f32 %v3324, %v146
    %v3349 = vmul.f32 %v3344, %v147
    %v3350 = vld [vmem:[%s22] sm:$0xff]
    %v3351 = vld [vmem:[%s22 + $0x8] sm:$0xff]
    %v3352 = vld [vmem:[%s22 + $0x10] sm:$0xff]
    %v3353 = vld [vmem:[%s22 + $0x18] sm:$0xff]
    %v3354 = vld [vmem:[%s22 + $0x20] sm:$0xff]
    %v3355 = vld [vmem:[%s22 + $0x28] sm:$0xff]
    %v3356 = vld [vmem:[%s22 + $0x30] sm:$0xff]
    %v3357 = vld [vmem:[%s22 + $0x38] sm:$0xff]
    %v3358 = vld [vmem:[%s22 + $0x40] sm:$0xff]
    %v3359 = vld [vmem:[%s22 + $0x48] sm:$0xff]
    %v3360 = vld [vmem:[%s22 + $0x50] sm:$0xff]
    %v3361 = vld [vmem:[%s22 + $0x58] sm:$0xff]
    %v3362 = vld [vmem:[%s22 + $0x60] sm:$0xff]
    %v3363 = vld [vmem:[%s22 + $0x68] sm:$0xff]
    %v3364 = vld [vmem:[%s22 + $0x70] sm:$0xff]
    %v3365 = vld [vmem:[%s22 + $0x78] sm:$0xff]
    %v3366 = vld [vmem:[%s22 + $0x80] sm:$0xff]
    %v3367 = vld [vmem:[%s22 + $0x88] sm:$0xff]
    %v3368 = vld [vmem:[%s22 + $0x90] sm:$0xff]
    %v3369 = vld [vmem:[%s22 + $0x98] sm:$0xff]
    %v3370 = vld [vmem:[%s22 + $0xa0] sm:$0xff]
    %v3371 = vld [vmem:[%s22 + $0xa8] sm:$0xff]
    %v3372 = vld [vmem:[%s22 + $0xb0] sm:$0xff]
    %v3373 = vld [vmem:[%s22 + $0xb8] sm:$0xff]
    %v3374 = vld [vmem:[%s22 + $0xc0] sm:$0xff]
    %v3375 = vld [vmem:[%s22 + $0xc8] sm:$0xff]
    %v3376 = vld [vmem:[%s22 + $0xd0] sm:$0xff]
    %v3377 = vld [vmem:[%s22 + $0xd8] sm:$0xff]
    %v3378 = vld [vmem:[%s22 + $0xe0] sm:$0xff]
    %v3379 = vld [vmem:[%s22 + $0xe8] sm:$0xff]
    %v3380 = vld [vmem:[%s22 + $0xf0] sm:$0xff]
    %v3381 = vld [vmem:[%s22 + $0xf8] sm:$0xff]
    %v3382 = vld [vmem:[%s22 + $0x100] sm:$0xff]
    %v3383 = vld [vmem:[%s22 + $0x108] sm:$0xff]
    %v3384 = vld [vmem:[%s22 + $0x110] sm:$0xff]
    %v3385 = vld [vmem:[%s22 + $0x118] sm:$0xff]
    %v3386 = vld [vmem:[%s22 + $0x120] sm:$0xff]
    %v3387 = vld [vmem:[%s22 + $0x128] sm:$0xff]
    %v3388 = vld [vmem:[%s22 + $0x130] sm:$0xff]
    %v3389 = vld [vmem:[%s22 + $0x138] sm:$0xff]
    %v3390 = vld [vmem:[%s22 + $0x140] sm:$0xff]
    %v3391 = vld [vmem:[%s22 + $0x148] sm:$0xff]
    %v3392 = vld [vmem:[%s22 + $0x150] sm:$0xff]
    %v3393 = vld [vmem:[%s22 + $0x158] sm:$0xff]
    %v3394 = vld [vmem:[%s22 + $0x160] sm:$0xff]
    %v3395 = vld [vmem:[%s22 + $0x168] sm:$0xff]
    %v3396 = vld [vmem:[%s22 + $0x170] sm:$0xff]
    %v3397 = vld [vmem:[%s22 + $0x178] sm:$0xff]
    %v3398 = vld [vmem:[%s22 + $0x180] sm:$0xff]
    %v3399 = vld [vmem:[%s22 + $0x188] sm:$0xff]
    %v3400 = vld [vmem:[%s22 + $0x190] sm:$0xff]
    %v3401 = vld [vmem:[%s22 + $0x198] sm:$0xff]
    %v3402 = vld [vmem:[%s22 + $0x1a0] sm:$0xff]
    %v3403 = vld [vmem:[%s22 + $0x1a8] sm:$0xff]
    %v3404 = vld [vmem:[%s22 + $0x1b0] sm:$0xff]
    %v3405 = vld [vmem:[%s22 + $0x1b8] sm:$0xff]
    %v3406 = vld [vmem:[%s22 + $0x1c0] sm:$0xff]
    %v3407 = vld [vmem:[%s22 + $0x1c8] sm:$0xff]
    %v3408 = vld [vmem:[%s22 + $0x1d0] sm:$0xff]
    %v3409 = vld [vmem:[%s22 + $0x1d8] sm:$0xff]
    %v3410 = vld [vmem:[%s22 + $0x1e0] sm:$0xff]
    %v3411 = vld [vmem:[%s22 + $0x1e8] sm:$0xff]
    %v3412 = vld [vmem:[%s22 + $0x1f0] sm:$0xff]
    %v3413 = vld [vmem:[%s22 + $0x1f8] sm:$0xff]
    %3414 = vmatpush.msra.mxu0 %v3365
    %3415 = vmatpush.msra.mxu0 %v3364
    %3416 = vmatpush.msra.mxu0 %v3363
    %3417 = vmatpush.msra.mxu0 %v3362
    %3418 = vmatpush.msra.mxu0 %v3361
    %3419 = vmatpush.msra.mxu0 %v3360
    %3420 = vmatpush.msra.mxu0 %v3359
    %3421 = vmatpush.msra.mxu0 %v3358
    %3422 = vmatpush.msra.mxu0 %v3357
    %3423 = vmatpush.msra.mxu0 %v3356
    %3424 = vmatpush.msra.mxu0 %v3355
    %3425 = vmatpush.msra.mxu0 %v3354
    %3426 = vmatpush.msra.mxu0 %v3353
    %3427 = vmatpush.msra.mxu0 %v3352
    %3428 = vmatpush.msra.mxu0 %v3351
    %3429 = vmatpush.msra.mxu0 %v3350
    %3430 = vmatmul.f32.gmra.mxu0 %v3346
    %v3431 = vpop.f32.mrf.mxu0
    %v3432 = vadd.f32 0.0, %v3431
    %3433 = vdwg.mxu0
    %3434 = vmatpush.msra.mxu0 %v3381
    %3435 = vmatpush.msra.mxu0 %v3380
    %3436 = vmatpush.msra.mxu0 %v3379
    %3437 = vmatpush.msra.mxu0 %v3378
    %3438 = vmatpush.msra.mxu0 %v3377
    %3439 = vmatpush.msra.mxu0 %v3376
    %3440 = vmatpush.msra.mxu0 %v3375
    %3441 = vmatpush.msra.mxu0 %v3374
    %3442 = vmatpush.msra.mxu0 %v3373
    %3443 = vmatpush.msra.mxu0 %v3372
    %3444 = vmatpush.msra.mxu0 %v3371
    %3445 = vmatpush.msra.mxu0 %v3370
    %3446 = vmatpush.msra.mxu0 %v3369
    %3447 = vmatpush.msra.mxu0 %v3368
    %3448 = vmatpush.msra.mxu0 %v3367
    %3449 = vmatpush.msra.mxu0 %v3366
    %3450 = vmatmul.f32.gmra.mxu0 %v3347
    %v3451 = vpop.f32.mrf.mxu0
    %v3452 = vadd.f32 %v3432, %v3451
    %3453 = vdwg.mxu0
    %3454 = vmatpush.msra.mxu0 %v3397
    %3455 = vmatpush.msra.mxu0 %v3396
    %3456 = vmatpush.msra.mxu0 %v3395
    %3457 = vmatpush.msra.mxu0 %v3394
    %3458 = vmatpush.msra.mxu0 %v3393
    %3459 = vmatpush.msra.mxu0 %v3392
    %3460 = vmatpush.msra.mxu0 %v3391
    %3461 = vmatpush.msra.mxu0 %v3390
    %3462 = vmatpush.msra.mxu0 %v3389
    %3463 = vmatpush.msra.mxu0 %v3388
    %3464 = vmatpush.msra.mxu0 %v3387
    %3465 = vmatpush.msra.mxu0 %v3386
    %3466 = vmatpush.msra.mxu0 %v3385
    %3467 = vmatpush.msra.mxu0 %v3384
    %3468 = vmatpush.msra.mxu0 %v3383
    %3469 = vmatpush.msra.mxu0 %v3382
    %3470 = vmatmul.f32.gmra.mxu0 %v3348
    %v3471 = vpop.f32.mrf.mxu0
    %v3472 = vadd.f32 %v3452, %v3471
    %3473 = vdwg.mxu0
    %3474 = vmatpush.msra.mxu0 %v3413
    %3475 = vmatpush.msra.mxu0 %v3412
    %3476 = vmatpush.msra.mxu0 %v3411
    %3477 = vmatpush.msra.mxu0 %v3410
    %3478 = vmatpush.msra.mxu0 %v3409
    %3479 = vmatpush.msra.mxu0 %v3408
    %3480 = vmatpush.msra.mxu0 %v3407
    %3481 = vmatpush.msra.mxu0 %v3406
    %3482 = vmatpush.msra.mxu0 %v3405
    %3483 = vmatpush.msra.mxu0 %v3404
    %3484 = vmatpush.msra.mxu0 %v3403
    %3485 = vmatpush.msra.mxu0 %v3402
    %3486 = vmatpush.msra.mxu0 %v3401
    %3487 = vmatpush.msra.mxu0 %v3400
    %3488 = vmatpush.msra.mxu0 %v3399
    %3489 = vmatpush.msra.mxu0 %v3398
    %3490 = vmatmul.f32.gmra.mxu0 %v3349
    %v3491 = vpop.f32.mrf.mxu0
    %v3492 = vadd.f32 %v3472, %v3491
    %3493 = vdwg.mxu0
    %v3494 = vmul.f32 %v3232, %v2884
    %v3495 = vadd.f32 %v3494, %v3492
    %v3496 = vmul.f32 %v3254, %v3495
    %v3497 = vadd.f32 %v3496, %v2914
    %v3498 = vld [vmem:[%s23] sm:$0xff]
    %v3499 = vld [vmem:[%s23 + $0x8] sm:$0xff]
    %v3500 = vld [vmem:[%s23 + $0x10] sm:$0xff]
    %v3501 = vld [vmem:[%s23 + $0x18] sm:$0xff]
    %v3503 = vsel %vm100, %v3497, 0
    %3505 = vmatpush.msra.mxu0 0.0
    %3506 = vmatpush.msra.mxu0 0.0
    %3507 = vmatpush.msra.mxu0 0.0
    %3508 = vmatpush.msra.mxu0 0.0
    %3509 = vmatpush.msra.mxu0 0.0
    %3510 = vmatpush.msra.mxu0 0.0
    %3511 = vmatpush.msra.mxu0 0.0
    %3512 = vmatpush.msra.mxu0 0.0
    %3513 = vmatpush.msra.mxu0 0.0
    %3514 = vmatpush.msra.mxu0 0.0
    %3515 = vmatpush.msra.mxu0 0.0
    %3516 = vmatpush.msra.mxu0 0.0
    %3517 = vmatpush.msra.mxu0 %v3501
    %3518 = vmatpush.msra.mxu0 %v3500
    %3519 = vmatpush.msra.mxu0 %v3499
    %3520 = vmatpush.msra.mxu0 %v3498
    %3521 = vmatmul.f32.gmra.mxu0 %v3503
    %v3522 = vpop.f32.mrf.mxu0
    %v3523 = vadd.f32 %v174, %v3522
    %3524 = vdwg.mxu0
    %v3525 = vtanh.pop %v3523
    %s3526 = scalar_lea.vmem [#allocation2], 24
    %3527 = vst.msk [vmem:[%s3526] sm:$0xff] %vm100, %v3525
    %3529 = vst.msk [vmem:[#allocation4] sm:$0xff] %vm100, %v2891
    %3531 = vrot.lane.b32.xlu0 %v2827, 96
    %v3532 = vpop.permute.xlu0 %3531
    %3534 = vst.msk [vmem:[#allocation6] sm:$0xff] %vm100, %v3532
    // Predicated region
    $region102: #{adaatt_core_seq.1} parent=1 // pred_check
      _
    $region103: #{adaatt_core_seq.1} parent=1 // pred_check_branch
      %3536 = sbr.rel (0) target = $region105
    $region104: #{adaatt_core_seq.1} parent=1 // pred_region
      %3538 = vsyncadd [#allocation3], 0
      %s3539 = sshll.u32 [#allocation2], 4
      %s3540 = int_to_ptr.vmem [resolvable:$true] %s3539
      %s3541 = sshll.u32 %s25, 4
      %s3542 = int_to_ptr.hbm [resolvable:$true] %s3541
      %3547 = dma.vmem_to_hbm [thread:$0]  %s3540, 512, %s3542, [#allocation3], 128, 128, 8
    $region105: #{adaatt_core_seq.1} parent=1 // pred_fallthru
      _
    // Predicated region
    $region106: #{adaatt_core_seq.1} parent=1 // pred_check
      _
    $region107: #{adaatt_core_seq.1} parent=1 // pred_check_branch
      %3549 = sbr.rel (0) target = $region109
    $region108: #{adaatt_core_seq.1} parent=1 // pred_region
      %3551 = vsyncadd [#allocation5], 0
      %s3553 = sshll.u32 [#allocation4], 4
      %s3554 = int_to_ptr.vmem [resolvable:$true] %s3553
      %s3555 = sshll.u32 %s26, 4
      %s3556 = int_to_ptr.hbm [resolvable:$true] %s3555
      %3558 = dma.vmem_to_hbm [thread:$0]  %s3554, 128, %s3556, [#allocation5]
    $region109: #{adaatt_core_seq.1} parent=1 // pred_fallthru
      _
    // Predicated region
    $region110: #{adaatt_core_seq.1} parent=1 // pred_check
      _
    $region111: #{adaatt_core_seq.1} parent=1 // pred_check_branch
      %3560 = sbr.rel (0) target = $region113
    $region112: #{adaatt_core_seq.1} parent=1 // pred_region
      %3562 = vsyncadd [#allocation5], 0
      %s3564 = sshll.u32 [#allocation6], 4
      %s3565 = int_to_ptr.vmem [resolvable:$true] %s3564
      %s3566 = sshll.u32 %s27, 4
      %s3567 = int_to_ptr.hbm [resolvable:$true] %s3566
      %3569 = dma.vmem_to_hbm [thread:$0]  %s3565, 128, %s3567, [#allocation5]
    $region113: #{adaatt_core_seq.1} parent=1 // pred_fallthru
      _
    // Predicated region
    $region114: #{adaatt_core_seq.1} parent=1 // pred_check
      _
    $region115: #{adaatt_core_seq.1} parent=1 // pred_check_branch
      %3571 = sbr.rel (0) target = $region117
    $region116: #{adaatt_core_seq.1} parent=1 // pred_region
      %3573 = dma.done [#allocation3], 512
    $region117: #{adaatt_core_seq.1} parent=1 // pred_fallthru
      _
    // Predicated region
    $region118: #{adaatt_core_seq.1} parent=1 // pred_check
      _
    $region119: #{adaatt_core_seq.1} parent=1 // pred_check_branch
      %3575 = sbr.rel (0) target = $region121
    $region120: #{adaatt_core_seq.1} parent=1 // pred_region
      %3577 = dma.done [#allocation5], 128
    $region121: #{adaatt_core_seq.1} parent=1 // pred_fallthru
      _
    // Predicated region
    $region122: #{adaatt_core_seq.1} parent=1 // pred_check
      _
    $region123: #{adaatt_core_seq.1} parent=1 // pred_check_branch
      %3579 = sbr.rel (0) target = $region125
    $region124: #{adaatt_core_seq.1} parent=1 // pred_region
      %3581 = dma.done [#allocation5], 128
    $region125: #{adaatt_core_seq.1} parent=1 // pred_fallthru
      _
    %3582 = vsyncpa [#allocation3], 1
    %3583 = vsyncpa [#allocation5], 1

</llo_original>
